<compile_context>
chip_gen: v7x
topology: tpu7x:2x2x1
jax: 0.10.0
libtpu: 0.0.40
codegen_flags: <defaults>
</compile_context>

<pallas_src>
import functools

import jax
import jax.numpy as jnp
from jax import lax
from jax.experimental import pallas as pl
from jax.experimental.pallas import tpu as pltpu

LRELU_SLOPE = 0.01  # torch.nn.LeakyReLU() default negative_slope (spec uses default)


def _round_up(x, m):
    return ((x + m - 1) // m) * m


def _resident_spec(shape):
    """Whole-array block, constant index map (fetched once, stays resident).

    Single-buffered when this JAX supports per-BlockSpec pipeline_mode: weights
    never change across grid steps, so double-buffering them only wastes VMEM
    (matters for the C=512 / K=11 HiFi-GAN blocks on v7x's 64 MiB VMEM).
    """
    ndim = len(shape)
    index_map = lambda n, t: (0,) * ndim
    buffered = getattr(pl, "Buffered", None)
    if buffered is not None:
        try:
            return pl.BlockSpec(shape, index_map, pipeline_mode=buffered(1))
        except TypeError:
            pass
    return pl.BlockSpec(shape, index_map)


# ---------------------------------------------------------------------------
# Fused kernel: one grid step = one (batch, time-tile); static in-kernel loop
# over every res-unit (LeakyReLU is shared; MRF sum stays on-chip).
# ---------------------------------------------------------------------------
def _mrf_fused_kernel(*refs, units, T, Tt, Hmax, compute_dtype):
    x_ref, halo_ref = refs[0], refs[1]
    o_ref = refs[-1]
    wrefs = refs[2:-1]                     # (w1, b1, w2, b2) per unit
    t = pl.program_id(1)

    # Tile + right halo cover padded rows [t*Tt, t*Tt + Tt + 2*Hmax) i.e.
    # original times [t*Tt - Hmax, t*Tt + Tt + Hmax).  Loaded once per tile;
    # the first LeakyReLU is identical for every unit so it is applied once.
    x = jnp.concatenate([x_ref[0], halo_ref[0]], axis=0).astype(jnp.float32)
    x = jnp.where(x >= 0, x, LRELU_SLOPE * x)          # VPU math in f32 (v5e-safe)
    xc = x.astype(compute_dtype)                       # MXU operand dtype

    acc = None
    for idx, (K, d) in enumerate(units):               # static unroll
        w1, b1, w2, b2 = wrefs[4 * idx:4 * idx + 4]
        P1 = d * (K - 1) // 2                          # 'same' halo of conv1
        P2 = (K - 1) // 2                              # 'same' halo of conv2
        off = Hmax - P1 - P2                           # slack of shared max halo
        Te = Tt + 2 * P2                               # conv1 rows needed here

        # Conv1 (dilation d): per-tap MXU accumulation, f32 accumulate.
        h = jnp.dot(xc[off:off + Te, :], w1[0],
                    preferred_element_type=jnp.float32)
        for j in range(1, K):
            s = off + j * d
            h = h + jnp.dot(xc[s:s + Te, :], w1[j],
                            preferred_element_type=jnp.float32)
        h = h + b1[...]
        h = jnp.where(h >= 0, h, LRELU_SLOPE * h)      # second LeakyReLU (f32)

        # Conv2 zero-pads its input outside the valid sequence [0, T); zero the
        # extended rows so the fused result matches the unfused reference.
        g = t * Tt + lax.broadcasted_iota(jnp.int32, (Te, 1), 0) - P2
        h = jnp.where((g >= 0) & (g < T), h, 0.0)
        hc = h.astype(compute_dtype)

        # Conv2 (dilation 1) over the Tt output rows of this tile.
        y = jnp.dot(hc[0:Tt, :], w2[0], preferred_element_type=jnp.float32)
        for j in range(1, K):
            y = y + jnp.dot(hc[j:j + Tt, :], w2[j],
                            preferred_element_type=jnp.float32)
        y = y + b2[...]

        acc = y if acc is None else acc + y            # MRF sum stays on-chip

    o_ref[0] = acc.astype(o_ref.dtype)                 # single HBM write per tile


# ---------------------------------------------------------------------------
# Wrappers
# ---------------------------------------------------------------------------
def mrf_forward_ntc(x_ntc, prepped, *, time_tile=1024, storage_dtype=None,
                    vmem_limit_bytes=48 * 1024 * 1024):
    """Channels-last MRF forward: x_ntc (N, T, C) -> (N, T, C). No transposes."""
    N, T, C = x_ntc.shape
    assert C == prepped["C"]
    units = prepped["units"]
    cdt = prepped["compute_dtype"]
    odt = x_ntc.dtype
    sdt = storage_dtype if storage_dtype is not None else x_ntc.dtype

    meta = tuple((u["K"], u["d"]) for u in units)
    Hmax = max(d * (K - 1) // 2 + (K - 1) // 2 for K, d in meta)
    halo = max(8, _round_up(2 * Hmax, 8))              # right-halo rows (8-aligned)

    # Time tile: multiple of `halo` (so the halo BlockSpec indexes cleanly),
    # at least `halo`, at most covering T.  Default 1024 amortizes per-step
    # overhead on v5e/v6e while staying inside v7x's 64 MiB VMEM.
    Tt = max(halo, min(_round_up(time_tile, halo), _round_up(T, halo)))
    nT = -(-T // Tt)
    # v7x has 2 TensorCores sharding the "parallel" grid axes; with N == 1 make
    # sure there are >= 2 time tiles so one core is not idle.
    if N == 1 and nT < 2 and Tt > halo:
        tt_half = max(halo, _round_up(-(-T // 2), halo))
        if tt_half < Tt:
            Tt = tt_half
            nT = -(-T // Tt)

    # Single zero-pad for the whole MRF (max halo left, tile tail + halo right).
    Lpad = nT * Tt + halo
    xpad = jnp.pad(x_ntc, ((0, 0), (Hmax, Lpad - Hmax - T), (0, 0))).astype(sdt)

    ratio = Tt // halo
    in_specs = [
        pl.BlockSpec((1, Tt, C), lambda n, t: (n, t, 0)),                  # tile
        pl.BlockSpec((1, halo, C), lambda n, t: (n, (t + 1) * ratio, 0)),  # halo
    ]
    operands = [xpad, xpad]                 # halo read straight from xpad
    for u in units:
        for name in ("w1", "b1", "w2", "b2"):
            arr = u[name]
            in_specs.append(_resident_spec(arr.shape))
            operands.append(arr)

    kernel = functools.partial(_mrf_fused_kernel, units=meta, T=T, Tt=Tt,
                               Hmax=Hmax, compute_dtype=cdt)
    out = pl.pallas_call(
        kernel,
        out_shape=jax.ShapeDtypeStruct((N, nT * Tt, C), odt),
        grid=(N, nT),
        in_specs=in_specs,
        out_specs=pl.BlockSpec((1, Tt, C), lambda n, t: (n, t, 0)),
        compiler_params=pltpu.CompilerParams(
            dimension_semantics=("parallel", "parallel"),
            vmem_limit_bytes=int(vmem_limit_bytes)),
    )(*operands)
    return out[:, :T, :]


def mrf_forward(x_nct, prepped, **kwargs):
    """PyTorch-layout wrapper: (N, C, T) -> (N, C, T).

    If the surrounding model is channels-last, call mrf_forward_ntc directly
    and skip both full-array transposes (perf feedback)."""
    x_ntc = jnp.transpose(x_nct, (0, 2, 1))
    out = mrf_forward_ntc(x_ntc, prepped, **kwargs)
    return jnp.transpose(out, (0, 2, 1))


# ---------------------------------------------------------------------------
# Parameters (mirrors weight_norm(Conv1d)) + one-time prep
# ---------------------------------------------------------------------------
def init_weight_norm_conv(key, channels, ksize):
    kv, kg, kb = jax.random.split(key, 3)
    v = jax.random.normal(kv, (channels, channels, ksize), jnp.float32) * 0.1
    g = jax.random.uniform(kg, (channels,), jnp.float32, 0.5, 1.5)
    norm = jnp.sqrt(jnp.sum(v * v, axis=(1, 2), keepdims=True))
    w = g[:, None, None] * v / norm          # weight-norm reparameterization
    b = jax.random.uniform(kb, (channels,), jnp.float32, -0.1, 0.1)
    return w, b


def init_mrf_params(key, channels, resblock_size, resblock_dilations):
    params = []
    for i, ksize in enumerate(resblock_size):
        block_params = []
        for d in resblock_dilations[i]:
            key, k1, k2 = jax.random.split(key, 3)
            w1, b1 = init_weight_norm_conv(k1, channels, ksize)  # dilation=d
            w2, b2 = init_weight_norm_conv(k2, channels, ksize)  # dilation=1
            block_params.append((w1, b1, w2, b2))
        params.append((ksize, tuple(resblock_dilations[i]), block_params))
    return params


def prepare_mrf_params(params, channels, compute_dtype=jnp.float32):
    """One-time prep: (Cout,Cin,K) -> (K,Cin,Cout), cast to compute dtype.

    No channel padding (perf feedback): lanes/contraction stay at the true C.
    Use compute_dtype=jnp.bfloat16 to halve weight/activation HBM bytes; the
    kernel keeps accumulation and all VPU math in f32."""
    units = []
    for ksize, dils, block_params in params:
        for d, (w1, b1, w2, b2) in zip(dils, block_params):
            units.append(dict(
                K=int(ksize), d=int(d),
                w1=jnp.transpose(w1, (2, 1, 0)).astype(compute_dtype),
                b1=b1.reshape(1, -1).astype(jnp.float32),
                w2=jnp.transpose(w2, (2, 1, 0)).astype(compute_dtype),
                b2=b2.reshape(1, -1).astype(jnp.float32)))
    return dict(units=units, C=int(channels), compute_dtype=compute_dtype)


# ---------------------------------------------------------------------------
# Pure-JAX reference (independent: lax.conv_general_dilated)
# ---------------------------------------------------------------------------
def _conv1d_same_ref(x_nct, w_oik, b, dilation):
    K = w_oik.shape[-1]
    P = dilation * (K - 1) // 2
    y = lax.conv_general_dilated(
        x_nct, w_oik, window_strides=(1,), padding=[(P, P)],
        rhs_dilation=(dilation,), dimension_numbers=("NCH", "OIH", "NCH"))
    return y + b[None, :, None]


def mrf_ref(x_nct, params):
    # Matches the given PyTorch MRF/ResBlock exactly: every inner unit sees the
    # ORIGINAL x (no chained residual) and all unit outputs are summed.
    lrelu = lambda t: jnp.where(t >= 0, t, LRELU_SLOPE * t)
    out = jnp.zeros_like(x_nct)
    for _ksize, dils, block_params in params:
        for d, (w1, b1, w2, b2) in zip(dils, block_params):
            y = _conv1d_same_ref(lrelu(x_nct), w1, b1, d)
            y = _conv1d_same_ref(lrelu(y), w2, b2, 1)
            out = out + y
    return out


if __name__ == "__main__":
    # Small config consistent with MRF(channels, resblock_size, resblock_dilations)
    N, C, T = 2, 8, 16
    resblock_size = [3, 5]
    resblock_dilations = [[1, 2], [1, 3]]

    key = jax.random.PRNGKey(0)
    kx, kp = jax.random.split(key)
    x_nct = jax.random.normal(kx, (N, C, T), jnp.float32)   # PyTorch NCT layout
    params = init_mrf_params(kp, C, resblock_size, resblock_dilations)

    # f32 path (tight correctness check).
    prepped = prepare_mrf_params(params, C, compute_dtype=jnp.float32)
    fwd = jax.jit(lambda xx: mrf_forward(xx, prepped))
    out_nct = jax.block_until_ready(fwd(x_nct))

    ref = jax.block_until_ready(mrf_ref(x_nct, params))
    assert out_nct.shape == (N, C, T)
    max_err = float(jnp.max(jnp.abs(out_nct - ref)))
    assert jnp.allclose(out_nct, ref, rtol=1e-3, atol=1e-3), max_err

    # bf16 HBM/MXU path (perf feedback): f32 accumulation, loose tolerance.
    prepped_bf16 = prepare_mrf_params(params, C, compute_dtype=jnp.bfloat16)
    fwd_bf16 = jax.jit(
        lambda xx: mrf_forward(xx, prepped_bf16, storage_dtype=jnp.bfloat16))
    out_bf16 = jax.block_until_ready(fwd_bf16(x_nct)).astype(jnp.float32)
    assert out_bf16.shape == (N, C, T)
    assert jnp.allclose(out_bf16, ref, rtol=1e-1, atol=1e-1), \
        float(jnp.max(jnp.abs(out_bf16 - ref)))

    print("KERNEL_OK")
</pallas_src>

<mosaic_0001>
module attributes {stable_mosaic.version = 11 : i64} {
  func.func @_mrf_fused_kernel(%arg0: i32, %arg1: i32, %arg2: memref<1x16x8xf32, #tpu.memory_space<vmem>>, %arg3: memref<1x16x8xf32, #tpu.memory_space<vmem>>, %arg4: memref<3x8x8xf32, #tpu.memory_space<vmem>>, %arg5: memref<1x8xf32, #tpu.memory_space<vmem>>, %arg6: memref<3x8x8xf32, #tpu.memory_space<vmem>>, %arg7: memref<1x8xf32, #tpu.memory_space<vmem>>, %arg8: memref<3x8x8xf32, #tpu.memory_space<vmem>>, %arg9: memref<1x8xf32, #tpu.memory_space<vmem>>, %arg10: memref<3x8x8xf32, #tpu.memory_space<vmem>>, %arg11: memref<1x8xf32, #tpu.memory_space<vmem>>, %arg12: memref<5x8x8xf32, #tpu.memory_space<vmem>>, %arg13: memref<1x8xf32, #tpu.memory_space<vmem>>, %arg14: memref<5x8x8xf32, #tpu.memory_space<vmem>>, %arg15: memref<1x8xf32, #tpu.memory_space<vmem>>, %arg16: memref<5x8x8xf32, #tpu.memory_space<vmem>>, %arg17: memref<1x8xf32, #tpu.memory_space<vmem>>, %arg18: memref<5x8x8xf32, #tpu.memory_space<vmem>>, %arg19: memref<1x8xf32, #tpu.memory_space<vmem>>, %arg20: memref<1x16x8xf32, #tpu.memory_space<vmem>>) attributes {dimension_semantics = [#tpu.dimension_semantics<parallel>, #tpu.dimension_semantics<parallel>], iteration_bounds = array<i64: 2, 1>, scalar_prefetch = 0 : i64, scratch_operands = 0 : i64, tpu.core_type = #tpu.core_type<tc>, window_params = [{transform_indices = @transform_0, window_bounds = array<i64: 1, 16, 8>}, {transform_indices = @transform_1, window_bounds = array<i64: 1, 16, 8>}, {pipeline_mode = #tpu.pipeline_mode<synchronous>, transform_indices = @transform_2, window_bounds = array<i64: 3, 8, 8>}, {pipeline_mode = #tpu.pipeline_mode<synchronous>, transform_indices = @transform_3, window_bounds = array<i64: 1, 8>}, {pipeline_mode = #tpu.pipeline_mode<synchronous>, transform_indices = @transform_4, window_bounds = array<i64: 3, 8, 8>}, {pipeline_mode = #tpu.pipeline_mode<synchronous>, transform_indices = @transform_5, window_bounds = array<i64: 1, 8>}, {pipeline_mode = #tpu.pipeline_mode<synchronous>, transform_indices = @transform_6, window_bounds = array<i64: 3, 8, 8>}, {pipeline_mode = #tpu.pipeline_mode<synchronous>, transform_indices = @transform_7, window_bounds = array<i64: 1, 8>}, {pipeline_mode = #tpu.pipeline_mode<synchronous>, transform_indices = @transform_8, window_bounds = array<i64: 3, 8, 8>}, {pipeline_mode = #tpu.pipeline_mode<synchronous>, transform_indices = @transform_9, window_bounds = array<i64: 1, 8>}, {pipeline_mode = #tpu.pipeline_mode<synchronous>, transform_indices = @transform_10, window_bounds = array<i64: 5, 8, 8>}, {pipeline_mode = #tpu.pipeline_mode<synchronous>, transform_indices = @transform_11, window_bounds = array<i64: 1, 8>}, {pipeline_mode = #tpu.pipeline_mode<synchronous>, transform_indices = @transform_12, window_bounds = array<i64: 5, 8, 8>}, {pipeline_mode = #tpu.pipeline_mode<synchronous>, transform_indices = @transform_13, window_bounds = array<i64: 1, 8>}, {pipeline_mode = #tpu.pipeline_mode<synchronous>, transform_indices = @transform_14, window_bounds = array<i64: 5, 8, 8>}, {pipeline_mode = #tpu.pipeline_mode<synchronous>, transform_indices = @transform_15, window_bounds = array<i64: 1, 8>}, {pipeline_mode = #tpu.pipeline_mode<synchronous>, transform_indices = @transform_16, window_bounds = array<i64: 5, 8, 8>}, {pipeline_mode = #tpu.pipeline_mode<synchronous>, transform_indices = @transform_17, window_bounds = array<i64: 1, 8>}, {transform_indices = @transform_18, window_bounds = array<i64: 1, 16, 8>}]} {
    %c0 = arith.constant 0 : index
    %c0_0 = arith.constant 0 : index
    %c0_1 = arith.constant 0 : index
    %0 = vector.load %arg2[%c0, %c0_0, %c0_1] : memref<1x16x8xf32, #tpu.memory_space<vmem>>, vector<1x16x8xf32>
    %1 = vector.shape_cast %0 : vector<1x16x8xf32> to vector<16x8xf32>
    %c0_2 = arith.constant 0 : index
    %c0_3 = arith.constant 0 : index
    %c0_4 = arith.constant 0 : index
    %2 = vector.load %arg3[%c0_2, %c0_3, %c0_4] : memref<1x16x8xf32, #tpu.memory_space<vmem>>, vector<1x16x8xf32>
    %3 = vector.shape_cast %2 : vector<1x16x8xf32> to vector<16x8xf32>
    %4 = tpu.concatenate %1, %3 in 0 : vector<16x8xf32>, vector<16x8xf32> -> vector<32x8xf32>
    %cst = arith.constant 0.000000e+00 : f32
    %5 = vector.broadcast %cst : f32 to vector<32x8xf32>
    %6 = arith.cmpf oge, %4, %5 : vector<32x8xf32>
    %cst_5 = arith.constant 0.00999999977 : f32
    %7 = vector.broadcast %cst_5 : f32 to vector<32x8xf32>
    %8 = arith.mulf %7, %4 : vector<32x8xf32>
    %9 = arith.select %6, %4, %8 : vector<32x8xi1>, vector<32x8xf32>
    %10 = vector.extract_strided_slice %9 {offsets = [6, 0], sizes = [18, 8], strides = [1, 1]} : vector<32x8xf32> to vector<18x8xf32>
    %c0_6 = arith.constant 0 : index
    %c0_7 = arith.constant 0 : index
    %c0_8 = arith.constant 0 : index
    %11 = vector.load %arg4[%c0_6, %c0_7, %c0_8] : memref<3x8x8xf32, #tpu.memory_space<vmem>>, vector<1x8x8xf32>
    %12 = vector.shape_cast %11 : vector<1x8x8xf32> to vector<8x8xf32>
    %cst_9 = arith.constant dense<0.000000e+00> : vector<18x8xf32>
    %13 = tpu.matmul %10, %12, %cst_9 {dimension_numbers = #tpu.dot_dimension_numbers<[1], [0], [0], [1], [0, 0, 1, 1], [], []>} : vector<18x8xf32>, vector<8x8xf32>, vector<18x8xf32> -> vector<18x8xf32>
    %14 = vector.extract_strided_slice %9 {offsets = [7, 0], sizes = [18, 8], strides = [1, 1]} : vector<32x8xf32> to vector<18x8xf32>
    %c1 = arith.constant 1 : index
    %c0_10 = arith.constant 0 : index
    %c0_11 = arith.constant 0 : index
    %15 = vector.load %arg4[%c1, %c0_10, %c0_11] : memref<3x8x8xf32, #tpu.memory_space<vmem>>, vector<1x8x8xf32>
    %16 = vector.shape_cast %15 : vector<1x8x8xf32> to vector<8x8xf32>
    %cst_12 = arith.constant dense<0.000000e+00> : vector<18x8xf32>
    %17 = tpu.matmul %14, %16, %cst_12 {dimension_numbers = #tpu.dot_dimension_numbers<[1], [0], [0], [1], [0, 0, 1, 1], [], []>} : vector<18x8xf32>, vector<8x8xf32>, vector<18x8xf32> -> vector<18x8xf32>
    %18 = arith.addf %13, %17 : vector<18x8xf32>
    %19 = vector.extract_strided_slice %9 {offsets = [8, 0], sizes = [18, 8], strides = [1, 1]} : vector<32x8xf32> to vector<18x8xf32>
    %c2 = arith.constant 2 : index
    %c0_13 = arith.constant 0 : index
    %c0_14 = arith.constant 0 : index
    %20 = vector.load %arg4[%c2, %c0_13, %c0_14] : memref<3x8x8xf32, #tpu.memory_space<vmem>>, vector<1x8x8xf32>
    %21 = vector.shape_cast %20 : vector<1x8x8xf32> to vector<8x8xf32>
    %cst_15 = arith.constant dense<0.000000e+00> : vector<18x8xf32>
    %22 = tpu.matmul %19, %21, %cst_15 {dimension_numbers = #tpu.dot_dimension_numbers<[1], [0], [0], [1], [0, 0, 1, 1], [], []>} : vector<18x8xf32>, vector<8x8xf32>, vector<18x8xf32> -> vector<18x8xf32>
    %23 = arith.addf %18, %22 : vector<18x8xf32>
    %c0_16 = arith.constant 0 : index
    %c0_17 = arith.constant 0 : index
    %24 = vector.load %arg5[%c0_16, %c0_17] : memref<1x8xf32, #tpu.memory_space<vmem>>, vector<1x8xf32>
    %25 = vector.broadcast %24 : vector<1x8xf32> to vector<18x8xf32>
    %26 = arith.addf %23, %25 : vector<18x8xf32>
    %cst_18 = arith.constant 0.000000e+00 : f32
    %27 = vector.broadcast %cst_18 : f32 to vector<18x8xf32>
    %28 = arith.cmpf oge, %26, %27 : vector<18x8xf32>
    %cst_19 = arith.constant 0.00999999977 : f32
    %29 = vector.broadcast %cst_19 : f32 to vector<18x8xf32>
    %30 = arith.mulf %29, %26 : vector<18x8xf32>
    %31 = arith.select %28, %26, %30 : vector<18x8xi1>, vector<18x8xf32>
    %c16_i32 = arith.constant 16 : i32
    %32 = arith.muli %arg1, %c16_i32 : i32
    %33 = tpu.iota {dimensions = array<i32: 0>} : vector<18x1xi32>
    %34 = vector.broadcast %32 : i32 to vector<18x1xi32>
    %35 = arith.addi %34, %33 : vector<18x1xi32>
    %c1_i32 = arith.constant 1 : i32
    %36 = vector.broadcast %c1_i32 : i32 to vector<18x1xi32>
    %37 = arith.subi %35, %36 : vector<18x1xi32>
    %c0_i32 = arith.constant 0 : i32
    %38 = vector.broadcast %c0_i32 : i32 to vector<18x1xi32>
    %39 = arith.cmpi sge, %37, %38 : vector<18x1xi32>
    %c16_i32_20 = arith.constant 16 : i32
    %40 = vector.broadcast %c16_i32_20 : i32 to vector<18x1xi32>
    %41 = arith.cmpi slt, %37, %40 : vector<18x1xi32>
    %42 = arith.andi %39, %41 : vector<18x1xi1>
    %cst_21 = arith.constant 0.000000e+00 : f32
    %43 = vector.shape_cast %42 : vector<18x1xi1> to vector<18x1xi1>
    %44 = vector.broadcast %43 : vector<18x1xi1> to vector<18x8xi1>
    %45 = vector.broadcast %cst_21 : f32 to vector<18x8xf32>
    %46 = arith.select %44, %31, %45 : vector<18x8xi1>, vector<18x8xf32>
    %47 = vector.extract_strided_slice %46 {offsets = [0, 0], sizes = [16, 8], strides = [1, 1]} : vector<18x8xf32> to vector<16x8xf32>
    %c0_22 = arith.constant 0 : index
    %c0_23 = arith.constant 0 : index
    %c0_24 = arith.constant 0 : index
    %48 = vector.load %arg6[%c0_22, %c0_23, %c0_24] : memref<3x8x8xf32, #tpu.memory_space<vmem>>, vector<1x8x8xf32>
    %49 = vector.shape_cast %48 : vector<1x8x8xf32> to vector<8x8xf32>
    %cst_25 = arith.constant dense<0.000000e+00> : vector<16x8xf32>
    %50 = tpu.matmul %47, %49, %cst_25 {dimension_numbers = #tpu.dot_dimension_numbers<[1], [0], [0], [1], [0, 0, 1, 1], [], []>} : vector<16x8xf32>, vector<8x8xf32>, vector<16x8xf32> -> vector<16x8xf32>
    %51 = vector.extract_strided_slice %46 {offsets = [1, 0], sizes = [16, 8], strides = [1, 1]} : vector<18x8xf32> to vector<16x8xf32>
    %c1_26 = arith.constant 1 : index
    %c0_27 = arith.constant 0 : index
    %c0_28 = arith.constant 0 : index
    %52 = vector.load %arg6[%c1_26, %c0_27, %c0_28] : memref<3x8x8xf32, #tpu.memory_space<vmem>>, vector<1x8x8xf32>
    %53 = vector.shape_cast %52 : vector<1x8x8xf32> to vector<8x8xf32>
    %cst_29 = arith.constant dense<0.000000e+00> : vector<16x8xf32>
    %54 = tpu.matmul %51, %53, %cst_29 {dimension_numbers = #tpu.dot_dimension_numbers<[1], [0], [0], [1], [0, 0, 1, 1], [], []>} : vector<16x8xf32>, vector<8x8xf32>, vector<16x8xf32> -> vector<16x8xf32>
    %55 = arith.addf %50, %54 : vector<16x8xf32>
    %56 = vector.extract_strided_slice %46 {offsets = [2, 0], sizes = [16, 8], strides = [1, 1]} : vector<18x8xf32> to vector<16x8xf32>
    %c2_30 = arith.constant 2 : index
    %c0_31 = arith.constant 0 : index
    %c0_32 = arith.constant 0 : index
    %57 = vector.load %arg6[%c2_30, %c0_31, %c0_32] : memref<3x8x8xf32, #tpu.memory_space<vmem>>, vector<1x8x8xf32>
    %58 = vector.shape_cast %57 : vector<1x8x8xf32> to vector<8x8xf32>
    %cst_33 = arith.constant dense<0.000000e+00> : vector<16x8xf32>
    %59 = tpu.matmul %56, %58, %cst_33 {dimension_numbers = #tpu.dot_dimension_numbers<[1], [0], [0], [1], [0, 0, 1, 1], [], []>} : vector<16x8xf32>, vector<8x8xf32>, vector<16x8xf32> -> vector<16x8xf32>
    %60 = arith.addf %55, %59 : vector<16x8xf32>
    %c0_34 = arith.constant 0 : index
    %c0_35 = arith.constant 0 : index
    %61 = vector.load %arg7[%c0_34, %c0_35] : memref<1x8xf32, #tpu.memory_space<vmem>>, vector<1x8xf32>
    %62 = vector.broadcast %61 : vector<1x8xf32> to vector<16x8xf32>
    %63 = arith.addf %60, %62 : vector<16x8xf32>
    %64 = vector.extract_strided_slice %9 {offsets = [5, 0], sizes = [18, 8], strides = [1, 1]} : vector<32x8xf32> to vector<18x8xf32>
    %c0_36 = arith.constant 0 : index
    %c0_37 = arith.constant 0 : index
    %c0_38 = arith.constant 0 : index
    %65 = vector.load %arg8[%c0_36, %c0_37, %c0_38] : memref<3x8x8xf32, #tpu.memory_space<vmem>>, vector<1x8x8xf32>
    %66 = vector.shape_cast %65 : vector<1x8x8xf32> to vector<8x8xf32>
    %cst_39 = arith.constant dense<0.000000e+00> : vector<18x8xf32>
    %67 = tpu.matmul %64, %66, %cst_39 {dimension_numbers = #tpu.dot_dimension_numbers<[1], [0], [0], [1], [0, 0, 1, 1], [], []>} : vector<18x8xf32>, vector<8x8xf32>, vector<18x8xf32> -> vector<18x8xf32>
    %68 = vector.extract_strided_slice %9 {offsets = [7, 0], sizes = [18, 8], strides = [1, 1]} : vector<32x8xf32> to vector<18x8xf32>
    %c1_40 = arith.constant 1 : index
    %c0_41 = arith.constant 0 : index
    %c0_42 = arith.constant 0 : index
    %69 = vector.load %arg8[%c1_40, %c0_41, %c0_42] : memref<3x8x8xf32, #tpu.memory_space<vmem>>, vector<1x8x8xf32>
    %70 = vector.shape_cast %69 : vector<1x8x8xf32> to vector<8x8xf32>
    %cst_43 = arith.constant dense<0.000000e+00> : vector<18x8xf32>
    %71 = tpu.matmul %68, %70, %cst_43 {dimension_numbers = #tpu.dot_dimension_numbers<[1], [0], [0], [1], [0, 0, 1, 1], [], []>} : vector<18x8xf32>, vector<8x8xf32>, vector<18x8xf32> -> vector<18x8xf32>
    %72 = arith.addf %67, %71 : vector<18x8xf32>
    %73 = vector.extract_strided_slice %9 {offsets = [9, 0], sizes = [18, 8], strides = [1, 1]} : vector<32x8xf32> to vector<18x8xf32>
    %c2_44 = arith.constant 2 : index
    %c0_45 = arith.constant 0 : index
    %c0_46 = arith.constant 0 : index
    %74 = vector.load %arg8[%c2_44, %c0_45, %c0_46] : memref<3x8x8xf32, #tpu.memory_space<vmem>>, vector<1x8x8xf32>
    %75 = vector.shape_cast %74 : vector<1x8x8xf32> to vector<8x8xf32>
    %cst_47 = arith.constant dense<0.000000e+00> : vector<18x8xf32>
    %76 = tpu.matmul %73, %75, %cst_47 {dimension_numbers = #tpu.dot_dimension_numbers<[1], [0], [0], [1], [0, 0, 1, 1], [], []>} : vector<18x8xf32>, vector<8x8xf32>, vector<18x8xf32> -> vector<18x8xf32>
    %77 = arith.addf %72, %76 : vector<18x8xf32>
    %c0_48 = arith.constant 0 : index
    %c0_49 = arith.constant 0 : index
    %78 = vector.load %arg9[%c0_48, %c0_49] : memref<1x8xf32, #tpu.memory_space<vmem>>, vector<1x8xf32>
    %79 = vector.broadcast %78 : vector<1x8xf32> to vector<18x8xf32>
    %80 = arith.addf %77, %79 : vector<18x8xf32>
    %cst_50 = arith.constant 0.000000e+00 : f32
    %81 = vector.broadcast %cst_50 : f32 to vector<18x8xf32>
    %82 = arith.cmpf oge, %80, %81 : vector<18x8xf32>
    %cst_51 = arith.constant 0.00999999977 : f32
    %83 = vector.broadcast %cst_51 : f32 to vector<18x8xf32>
    %84 = arith.mulf %83, %80 : vector<18x8xf32>
    %85 = arith.select %82, %80, %84 : vector<18x8xi1>, vector<18x8xf32>
    %c16_i32_52 = arith.constant 16 : i32
    %86 = arith.muli %arg1, %c16_i32_52 : i32
    %87 = tpu.iota {dimensions = array<i32: 0>} : vector<18x1xi32>
    %88 = vector.broadcast %86 : i32 to vector<18x1xi32>
    %89 = arith.addi %88, %87 : vector<18x1xi32>
    %c1_i32_53 = arith.constant 1 : i32
    %90 = vector.broadcast %c1_i32_53 : i32 to vector<18x1xi32>
    %91 = arith.subi %89, %90 : vector<18x1xi32>
    %c0_i32_54 = arith.constant 0 : i32
    %92 = vector.broadcast %c0_i32_54 : i32 to vector<18x1xi32>
    %93 = arith.cmpi sge, %91, %92 : vector<18x1xi32>
    %c16_i32_55 = arith.constant 16 : i32
    %94 = vector.broadcast %c16_i32_55 : i32 to vector<18x1xi32>
    %95 = arith.cmpi slt, %91, %94 : vector<18x1xi32>
    %96 = arith.andi %93, %95 : vector<18x1xi1>
    %cst_56 = arith.constant 0.000000e+00 : f32
    %97 = vector.shape_cast %96 : vector<18x1xi1> to vector<18x1xi1>
    %98 = vector.broadcast %97 : vector<18x1xi1> to vector<18x8xi1>
    %99 = vector.broadcast %cst_56 : f32 to vector<18x8xf32>
    %100 = arith.select %98, %85, %99 : vector<18x8xi1>, vector<18x8xf32>
    %101 = vector.extract_strided_slice %100 {offsets = [0, 0], sizes = [16, 8], strides = [1, 1]} : vector<18x8xf32> to vector<16x8xf32>
    %c0_57 = arith.constant 0 : index
    %c0_58 = arith.constant 0 : index
    %c0_59 = arith.constant 0 : index
    %102 = vector.load %arg10[%c0_57, %c0_58, %c0_59] : memref<3x8x8xf32, #tpu.memory_space<vmem>>, vector<1x8x8xf32>
    %103 = vector.shape_cast %102 : vector<1x8x8xf32> to vector<8x8xf32>
    %cst_60 = arith.constant dense<0.000000e+00> : vector<16x8xf32>
    %104 = tpu.matmul %101, %103, %cst_60 {dimension_numbers = #tpu.dot_dimension_numbers<[1], [0], [0], [1], [0, 0, 1, 1], [], []>} : vector<16x8xf32>, vector<8x8xf32>, vector<16x8xf32> -> vector<16x8xf32>
    %105 = vector.extract_strided_slice %100 {offsets = [1, 0], sizes = [16, 8], strides = [1, 1]} : vector<18x8xf32> to vector<16x8xf32>
    %c1_61 = arith.constant 1 : index
    %c0_62 = arith.constant 0 : index
    %c0_63 = arith.constant 0 : index
    %106 = vector.load %arg10[%c1_61, %c0_62, %c0_63] : memref<3x8x8xf32, #tpu.memory_space<vmem>>, vector<1x8x8xf32>
    %107 = vector.shape_cast %106 : vector<1x8x8xf32> to vector<8x8xf32>
    %cst_64 = arith.constant dense<0.000000e+00> : vector<16x8xf32>
    %108 = tpu.matmul %105, %107, %cst_64 {dimension_numbers = #tpu.dot_dimension_numbers<[1], [0], [0], [1], [0, 0, 1, 1], [], []>} : vector<16x8xf32>, vector<8x8xf32>, vector<16x8xf32> -> vector<16x8xf32>
    %109 = arith.addf %104, %108 : vector<16x8xf32>
    %110 = vector.extract_strided_slice %100 {offsets = [2, 0], sizes = [16, 8], strides = [1, 1]} : vector<18x8xf32> to vector<16x8xf32>
    %c2_65 = arith.constant 2 : index
    %c0_66 = arith.constant 0 : index
    %c0_67 = arith.constant 0 : index
    %111 = vector.load %arg10[%c2_65, %c0_66, %c0_67] : memref<3x8x8xf32, #tpu.memory_space<vmem>>, vector<1x8x8xf32>
    %112 = vector.shape_cast %111 : vector<1x8x8xf32> to vector<8x8xf32>
    %cst_68 = arith.constant dense<0.000000e+00> : vector<16x8xf32>
    %113 = tpu.matmul %110, %112, %cst_68 {dimension_numbers = #tpu.dot_dimension_numbers<[1], [0], [0], [1], [0, 0, 1, 1], [], []>} : vector<16x8xf32>, vector<8x8xf32>, vector<16x8xf32> -> vector<16x8xf32>
    %114 = arith.addf %109, %113 : vector<16x8xf32>
    %c0_69 = arith.constant 0 : index
    %c0_70 = arith.constant 0 : index
    %115 = vector.load %arg11[%c0_69, %c0_70] : memref<1x8xf32, #tpu.memory_space<vmem>>, vector<1x8xf32>
    %116 = vector.broadcast %115 : vector<1x8xf32> to vector<16x8xf32>
    %117 = arith.addf %114, %116 : vector<16x8xf32>
    %118 = arith.addf %63, %117 : vector<16x8xf32>
    %119 = vector.extract_strided_slice %9 {offsets = [4, 0], sizes = [20, 8], strides = [1, 1]} : vector<32x8xf32> to vector<20x8xf32>
    %c0_71 = arith.constant 0 : index
    %c0_72 = arith.constant 0 : index
    %c0_73 = arith.constant 0 : index
    %120 = vector.load %arg12[%c0_71, %c0_72, %c0_73] : memref<5x8x8xf32, #tpu.memory_space<vmem>>, vector<1x8x8xf32>
    %121 = vector.shape_cast %120 : vector<1x8x8xf32> to vector<8x8xf32>
    %cst_74 = arith.constant dense<0.000000e+00> : vector<20x8xf32>
    %122 = tpu.matmul %119, %121, %cst_74 {dimension_numbers = #tpu.dot_dimension_numbers<[1], [0], [0], [1], [0, 0, 1, 1], [], []>} : vector<20x8xf32>, vector<8x8xf32>, vector<20x8xf32> -> vector<20x8xf32>
    %123 = vector.extract_strided_slice %9 {offsets = [5, 0], sizes = [20, 8], strides = [1, 1]} : vector<32x8xf32> to vector<20x8xf32>
    %c1_75 = arith.constant 1 : index
    %c0_76 = arith.constant 0 : index
    %c0_77 = arith.constant 0 : index
    %124 = vector.load %arg12[%c1_75, %c0_76, %c0_77] : memref<5x8x8xf32, #tpu.memory_space<vmem>>, vector<1x8x8xf32>
    %125 = vector.shape_cast %124 : vector<1x8x8xf32> to vector<8x8xf32>
    %cst_78 = arith.constant dense<0.000000e+00> : vector<20x8xf32>
    %126 = tpu.matmul %123, %125, %cst_78 {dimension_numbers = #tpu.dot_dimension_numbers<[1], [0], [0], [1], [0, 0, 1, 1], [], []>} : vector<20x8xf32>, vector<8x8xf32>, vector<20x8xf32> -> vector<20x8xf32>
    %127 = arith.addf %122, %126 : vector<20x8xf32>
    %128 = vector.extract_strided_slice %9 {offsets = [6, 0], sizes = [20, 8], strides = [1, 1]} : vector<32x8xf32> to vector<20x8xf32>
    %c2_79 = arith.constant 2 : index
    %c0_80 = arith.constant 0 : index
    %c0_81 = arith.constant 0 : index
    %129 = vector.load %arg12[%c2_79, %c0_80, %c0_81] : memref<5x8x8xf32, #tpu.memory_space<vmem>>, vector<1x8x8xf32>
    %130 = vector.shape_cast %129 : vector<1x8x8xf32> to vector<8x8xf32>
    %cst_82 = arith.constant dense<0.000000e+00> : vector<20x8xf32>
    %131 = tpu.matmul %128, %130, %cst_82 {dimension_numbers = #tpu.dot_dimension_numbers<[1], [0], [0], [1], [0, 0, 1, 1], [], []>} : vector<20x8xf32>, vector<8x8xf32>, vector<20x8xf32> -> vector<20x8xf32>
    %132 = arith.addf %127, %131 : vector<20x8xf32>
    %133 = vector.extract_strided_slice %9 {offsets = [7, 0], sizes = [20, 8], strides = [1, 1]} : vector<32x8xf32> to vector<20x8xf32>
    %c3 = arith.constant 3 : index
    %c0_83 = arith.constant 0 : index
    %c0_84 = arith.constant 0 : index
    %134 = vector.load %arg12[%c3, %c0_83, %c0_84] : memref<5x8x8xf32, #tpu.memory_space<vmem>>, vector<1x8x8xf32>
    %135 = vector.shape_cast %134 : vector<1x8x8xf32> to vector<8x8xf32>
    %cst_85 = arith.constant dense<0.000000e+00> : vector<20x8xf32>
    %136 = tpu.matmul %133, %135, %cst_85 {dimension_numbers = #tpu.dot_dimension_numbers<[1], [0], [0], [1], [0, 0, 1, 1], [], []>} : vector<20x8xf32>, vector<8x8xf32>, vector<20x8xf32> -> vector<20x8xf32>
    %137 = arith.addf %132, %136 : vector<20x8xf32>
    %138 = vector.extract_strided_slice %9 {offsets = [8, 0], sizes = [20, 8], strides = [1, 1]} : vector<32x8xf32> to vector<20x8xf32>
    %c4 = arith.constant 4 : index
    %c0_86 = arith.constant 0 : index
    %c0_87 = arith.constant 0 : index
    %139 = vector.load %arg12[%c4, %c0_86, %c0_87] : memref<5x8x8xf32, #tpu.memory_space<vmem>>, vector<1x8x8xf32>
    %140 = vector.shape_cast %139 : vector<1x8x8xf32> to vector<8x8xf32>
    %cst_88 = arith.constant dense<0.000000e+00> : vector<20x8xf32>
    %141 = tpu.matmul %138, %140, %cst_88 {dimension_numbers = #tpu.dot_dimension_numbers<[1], [0], [0], [1], [0, 0, 1, 1], [], []>} : vector<20x8xf32>, vector<8x8xf32>, vector<20x8xf32> -> vector<20x8xf32>
    %142 = arith.addf %137, %141 : vector<20x8xf32>
    %c0_89 = arith.constant 0 : index
    %c0_90 = arith.constant 0 : index
    %143 = vector.load %arg13[%c0_89, %c0_90] : memref<1x8xf32, #tpu.memory_space<vmem>>, vector<1x8xf32>
    %144 = vector.broadcast %143 : vector<1x8xf32> to vector<20x8xf32>
    %145 = arith.addf %142, %144 : vector<20x8xf32>
    %cst_91 = arith.constant 0.000000e+00 : f32
    %146 = vector.broadcast %cst_91 : f32 to vector<20x8xf32>
    %147 = arith.cmpf oge, %145, %146 : vector<20x8xf32>
    %cst_92 = arith.constant 0.00999999977 : f32
    %148 = vector.broadcast %cst_92 : f32 to vector<20x8xf32>
    %149 = arith.mulf %148, %145 : vector<20x8xf32>
    %150 = arith.select %147, %145, %149 : vector<20x8xi1>, vector<20x8xf32>
    %c16_i32_93 = arith.constant 16 : i32
    %151 = arith.muli %arg1, %c16_i32_93 : i32
    %152 = tpu.iota {dimensions = array<i32: 0>} : vector<20x1xi32>
    %153 = vector.broadcast %151 : i32 to vector<20x1xi32>
    %154 = arith.addi %153, %152 : vector<20x1xi32>
    %c2_i32 = arith.constant 2 : i32
    %155 = vector.broadcast %c2_i32 : i32 to vector<20x1xi32>
    %156 = arith.subi %154, %155 : vector<20x1xi32>
    %c0_i32_94 = arith.constant 0 : i32
    %157 = vector.broadcast %c0_i32_94 : i32 to vector<20x1xi32>
    %158 = arith.cmpi sge, %156, %157 : vector<20x1xi32>
    %c16_i32_95 = arith.constant 16 : i32
    %159 = vector.broadcast %c16_i32_95 : i32 to vector<20x1xi32>
    %160 = arith.cmpi slt, %156, %159 : vector<20x1xi32>
    %161 = arith.andi %158, %160 : vector<20x1xi1>
    %cst_96 = arith.constant 0.000000e+00 : f32
    %162 = vector.shape_cast %161 : vector<20x1xi1> to vector<20x1xi1>
    %163 = vector.broadcast %162 : vector<20x1xi1> to vector<20x8xi1>
    %164 = vector.broadcast %cst_96 : f32 to vector<20x8xf32>
    %165 = arith.select %163, %150, %164 : vector<20x8xi1>, vector<20x8xf32>
    %166 = vector.extract_strided_slice %165 {offsets = [0, 0], sizes = [16, 8], strides = [1, 1]} : vector<20x8xf32> to vector<16x8xf32>
    %c0_97 = arith.constant 0 : index
    %c0_98 = arith.constant 0 : index
    %c0_99 = arith.constant 0 : index
    %167 = vector.load %arg14[%c0_97, %c0_98, %c0_99] : memref<5x8x8xf32, #tpu.memory_space<vmem>>, vector<1x8x8xf32>
    %168 = vector.shape_cast %167 : vector<1x8x8xf32> to vector<8x8xf32>
    %cst_100 = arith.constant dense<0.000000e+00> : vector<16x8xf32>
    %169 = tpu.matmul %166, %168, %cst_100 {dimension_numbers = #tpu.dot_dimension_numbers<[1], [0], [0], [1], [0, 0, 1, 1], [], []>} : vector<16x8xf32>, vector<8x8xf32>, vector<16x8xf32> -> vector<16x8xf32>
    %170 = vector.extract_strided_slice %165 {offsets = [1, 0], sizes = [16, 8], strides = [1, 1]} : vector<20x8xf32> to vector<16x8xf32>
    %c1_101 = arith.constant 1 : index
    %c0_102 = arith.constant 0 : index
    %c0_103 = arith.constant 0 : index
    %171 = vector.load %arg14[%c1_101, %c0_102, %c0_103] : memref<5x8x8xf32, #tpu.memory_space<vmem>>, vector<1x8x8xf32>
    %172 = vector.shape_cast %171 : vector<1x8x8xf32> to vector<8x8xf32>
    %cst_104 = arith.constant dense<0.000000e+00> : vector<16x8xf32>
    %173 = tpu.matmul %170, %172, %cst_104 {dimension_numbers = #tpu.dot_dimension_numbers<[1], [0], [0], [1], [0, 0, 1, 1], [], []>} : vector<16x8xf32>, vector<8x8xf32>, vector<16x8xf32> -> vector<16x8xf32>
    %174 = arith.addf %169, %173 : vector<16x8xf32>
    %175 = vector.extract_strided_slice %165 {offsets = [2, 0], sizes = [16, 8], strides = [1, 1]} : vector<20x8xf32> to vector<16x8xf32>
    %c2_105 = arith.constant 2 : index
    %c0_106 = arith.constant 0 : index
    %c0_107 = arith.constant 0 : index
    %176 = vector.load %arg14[%c2_105, %c0_106, %c0_107] : memref<5x8x8xf32, #tpu.memory_space<vmem>>, vector<1x8x8xf32>
    %177 = vector.shape_cast %176 : vector<1x8x8xf32> to vector<8x8xf32>
    %cst_108 = arith.constant dense<0.000000e+00> : vector<16x8xf32>
    %178 = tpu.matmul %175, %177, %cst_108 {dimension_numbers = #tpu.dot_dimension_numbers<[1], [0], [0], [1], [0, 0, 1, 1], [], []>} : vector<16x8xf32>, vector<8x8xf32>, vector<16x8xf32> -> vector<16x8xf32>
    %179 = arith.addf %174, %178 : vector<16x8xf32>
    %180 = vector.extract_strided_slice %165 {offsets = [3, 0], sizes = [16, 8], strides = [1, 1]} : vector<20x8xf32> to vector<16x8xf32>
    %c3_109 = arith.constant 3 : index
    %c0_110 = arith.constant 0 : index
    %c0_111 = arith.constant 0 : index
    %181 = vector.load %arg14[%c3_109, %c0_110, %c0_111] : memref<5x8x8xf32, #tpu.memory_space<vmem>>, vector<1x8x8xf32>
    %182 = vector.shape_cast %181 : vector<1x8x8xf32> to vector<8x8xf32>
    %cst_112 = arith.constant dense<0.000000e+00> : vector<16x8xf32>
    %183 = tpu.matmul %180, %182, %cst_112 {dimension_numbers = #tpu.dot_dimension_numbers<[1], [0], [0], [1], [0, 0, 1, 1], [], []>} : vector<16x8xf32>, vector<8x8xf32>, vector<16x8xf32> -> vector<16x8xf32>
    %184 = arith.addf %179, %183 : vector<16x8xf32>
    %185 = vector.extract_strided_slice %165 {offsets = [4, 0], sizes = [16, 8], strides = [1, 1]} : vector<20x8xf32> to vector<16x8xf32>
    %c4_113 = arith.constant 4 : index
    %c0_114 = arith.constant 0 : index
    %c0_115 = arith.constant 0 : index
    %186 = vector.load %arg14[%c4_113, %c0_114, %c0_115] : memref<5x8x8xf32, #tpu.memory_space<vmem>>, vector<1x8x8xf32>
    %187 = vector.shape_cast %186 : vector<1x8x8xf32> to vector<8x8xf32>
    %cst_116 = arith.constant dense<0.000000e+00> : vector<16x8xf32>
    %188 = tpu.matmul %185, %187, %cst_116 {dimension_numbers = #tpu.dot_dimension_numbers<[1], [0], [0], [1], [0, 0, 1, 1], [], []>} : vector<16x8xf32>, vector<8x8xf32>, vector<16x8xf32> -> vector<16x8xf32>
    %189 = arith.addf %184, %188 : vector<16x8xf32>
    %c0_117 = arith.constant 0 : index
    %c0_118 = arith.constant 0 : index
    %190 = vector.load %arg15[%c0_117, %c0_118] : memref<1x8xf32, #tpu.memory_space<vmem>>, vector<1x8xf32>
    %191 = vector.broadcast %190 : vector<1x8xf32> to vector<16x8xf32>
    %192 = arith.addf %189, %191 : vector<16x8xf32>
    %193 = arith.addf %118, %192 : vector<16x8xf32>
    %194 = vector.extract_strided_slice %9 {offsets = [0, 0], sizes = [20, 8], strides = [1, 1]} : vector<32x8xf32> to vector<20x8xf32>
    %c0_119 = arith.constant 0 : index
    %c0_120 = arith.constant 0 : index
    %c0_121 = arith.constant 0 : index
    %195 = vector.load %arg16[%c0_119, %c0_120, %c0_121] : memref<5x8x8xf32, #tpu.memory_space<vmem>>, vector<1x8x8xf32>
    %196 = vector.shape_cast %195 : vector<1x8x8xf32> to vector<8x8xf32>
    %cst_122 = arith.constant dense<0.000000e+00> : vector<20x8xf32>
    %197 = tpu.matmul %194, %196, %cst_122 {dimension_numbers = #tpu.dot_dimension_numbers<[1], [0], [0], [1], [0, 0, 1, 1], [], []>} : vector<20x8xf32>, vector<8x8xf32>, vector<20x8xf32> -> vector<20x8xf32>
    %198 = vector.extract_strided_slice %9 {offsets = [3, 0], sizes = [20, 8], strides = [1, 1]} : vector<32x8xf32> to vector<20x8xf32>
    %c1_123 = arith.constant 1 : index
    %c0_124 = arith.constant 0 : index
    %c0_125 = arith.constant 0 : index
    %199 = vector.load %arg16[%c1_123, %c0_124, %c0_125] : memref<5x8x8xf32, #tpu.memory_space<vmem>>, vector<1x8x8xf32>
    %200 = vector.shape_cast %199 : vector<1x8x8xf32> to vector<8x8xf32>
    %cst_126 = arith.constant dense<0.000000e+00> : vector<20x8xf32>
    %201 = tpu.matmul %198, %200, %cst_126 {dimension_numbers = #tpu.dot_dimension_numbers<[1], [0], [0], [1], [0, 0, 1, 1], [], []>} : vector<20x8xf32>, vector<8x8xf32>, vector<20x8xf32> -> vector<20x8xf32>
    %202 = arith.addf %197, %201 : vector<20x8xf32>
    %203 = vector.extract_strided_slice %9 {offsets = [6, 0], sizes = [20, 8], strides = [1, 1]} : vector<32x8xf32> to vector<20x8xf32>
    %c2_127 = arith.constant 2 : index
    %c0_128 = arith.constant 0 : index
    %c0_129 = arith.constant 0 : index
    %204 = vector.load %arg16[%c2_127, %c0_128, %c0_129] : memref<5x8x8xf32, #tpu.memory_space<vmem>>, vector<1x8x8xf32>
    %205 = vector.shape_cast %204 : vector<1x8x8xf32> to vector<8x8xf32>
    %cst_130 = arith.constant dense<0.000000e+00> : vector<20x8xf32>
    %206 = tpu.matmul %203, %205, %cst_130 {dimension_numbers = #tpu.dot_dimension_numbers<[1], [0], [0], [1], [0, 0, 1, 1], [], []>} : vector<20x8xf32>, vector<8x8xf32>, vector<20x8xf32> -> vector<20x8xf32>
    %207 = arith.addf %202, %206 : vector<20x8xf32>
    %208 = vector.extract_strided_slice %9 {offsets = [9, 0], sizes = [20, 8], strides = [1, 1]} : vector<32x8xf32> to vector<20x8xf32>
    %c3_131 = arith.constant 3 : index
    %c0_132 = arith.constant 0 : index
    %c0_133 = arith.constant 0 : index
    %209 = vector.load %arg16[%c3_131, %c0_132, %c0_133] : memref<5x8x8xf32, #tpu.memory_space<vmem>>, vector<1x8x8xf32>
    %210 = vector.shape_cast %209 : vector<1x8x8xf32> to vector<8x8xf32>
    %cst_134 = arith.constant dense<0.000000e+00> : vector<20x8xf32>
    %211 = tpu.matmul %208, %210, %cst_134 {dimension_numbers = #tpu.dot_dimension_numbers<[1], [0], [0], [1], [0, 0, 1, 1], [], []>} : vector<20x8xf32>, vector<8x8xf32>, vector<20x8xf32> -> vector<20x8xf32>
    %212 = arith.addf %207, %211 : vector<20x8xf32>
    %213 = vector.extract_strided_slice %9 {offsets = [12, 0], sizes = [20, 8], strides = [1, 1]} : vector<32x8xf32> to vector<20x8xf32>
    %c4_135 = arith.constant 4 : index
    %c0_136 = arith.constant 0 : index
    %c0_137 = arith.constant 0 : index
    %214 = vector.load %arg16[%c4_135, %c0_136, %c0_137] : memref<5x8x8xf32, #tpu.memory_space<vmem>>, vector<1x8x8xf32>
    %215 = vector.shape_cast %214 : vector<1x8x8xf32> to vector<8x8xf32>
    %cst_138 = arith.constant dense<0.000000e+00> : vector<20x8xf32>
    %216 = tpu.matmul %213, %215, %cst_138 {dimension_numbers = #tpu.dot_dimension_numbers<[1], [0], [0], [1], [0, 0, 1, 1], [], []>} : vector<20x8xf32>, vector<8x8xf32>, vector<20x8xf32> -> vector<20x8xf32>
    %217 = arith.addf %212, %216 : vector<20x8xf32>
    %c0_139 = arith.constant 0 : index
    %c0_140 = arith.constant 0 : index
    %218 = vector.load %arg17[%c0_139, %c0_140] : memref<1x8xf32, #tpu.memory_space<vmem>>, vector<1x8xf32>
    %219 = vector.broadcast %218 : vector<1x8xf32> to vector<20x8xf32>
    %220 = arith.addf %217, %219 : vector<20x8xf32>
    %cst_141 = arith.constant 0.000000e+00 : f32
    %221 = vector.broadcast %cst_141 : f32 to vector<20x8xf32>
    %222 = arith.cmpf oge, %220, %221 : vector<20x8xf32>
    %cst_142 = arith.constant 0.00999999977 : f32
    %223 = vector.broadcast %cst_142 : f32 to vector<20x8xf32>
    %224 = arith.mulf %223, %220 : vector<20x8xf32>
    %225 = arith.select %222, %220, %224 : vector<20x8xi1>, vector<20x8xf32>
    %c16_i32_143 = arith.constant 16 : i32
    %226 = arith.muli %arg1, %c16_i32_143 : i32
    %227 = tpu.iota {dimensions = array<i32: 0>} : vector<20x1xi32>
    %228 = vector.broadcast %226 : i32 to vector<20x1xi32>
    %229 = arith.addi %228, %227 : vector<20x1xi32>
    %c2_i32_144 = arith.constant 2 : i32
    %230 = vector.broadcast %c2_i32_144 : i32 to vector<20x1xi32>
    %231 = arith.subi %229, %230 : vector<20x1xi32>
    %c0_i32_145 = arith.constant 0 : i32
    %232 = vector.broadcast %c0_i32_145 : i32 to vector<20x1xi32>
    %233 = arith.cmpi sge, %231, %232 : vector<20x1xi32>
    %c16_i32_146 = arith.constant 16 : i32
    %234 = vector.broadcast %c16_i32_146 : i32 to vector<20x1xi32>
    %235 = arith.cmpi slt, %231, %234 : vector<20x1xi32>
    %236 = arith.andi %233, %235 : vector<20x1xi1>
    %cst_147 = arith.constant 0.000000e+00 : f32
    %237 = vector.shape_cast %236 : vector<20x1xi1> to vector<20x1xi1>
    %238 = vector.broadcast %237 : vector<20x1xi1> to vector<20x8xi1>
    %239 = vector.broadcast %cst_147 : f32 to vector<20x8xf32>
    %240 = arith.select %238, %225, %239 : vector<20x8xi1>, vector<20x8xf32>
    %241 = vector.extract_strided_slice %240 {offsets = [0, 0], sizes = [16, 8], strides = [1, 1]} : vector<20x8xf32> to vector<16x8xf32>
    %c0_148 = arith.constant 0 : index
    %c0_149 = arith.constant 0 : index
    %c0_150 = arith.constant 0 : index
    %242 = vector.load %arg18[%c0_148, %c0_149, %c0_150] : memref<5x8x8xf32, #tpu.memory_space<vmem>>, vector<1x8x8xf32>
    %243 = vector.shape_cast %242 : vector<1x8x8xf32> to vector<8x8xf32>
    %cst_151 = arith.constant dense<0.000000e+00> : vector<16x8xf32>
    %244 = tpu.matmul %241, %243, %cst_151 {dimension_numbers = #tpu.dot_dimension_numbers<[1], [0], [0], [1], [0, 0, 1, 1], [], []>} : vector<16x8xf32>, vector<8x8xf32>, vector<16x8xf32> -> vector<16x8xf32>
    %245 = vector.extract_strided_slice %240 {offsets = [1, 0], sizes = [16, 8], strides = [1, 1]} : vector<20x8xf32> to vector<16x8xf32>
    %c1_152 = arith.constant 1 : index
    %c0_153 = arith.constant 0 : index
    %c0_154 = arith.constant 0 : index
    %246 = vector.load %arg18[%c1_152, %c0_153, %c0_154] : memref<5x8x8xf32, #tpu.memory_space<vmem>>, vector<1x8x8xf32>
    %247 = vector.shape_cast %246 : vector<1x8x8xf32> to vector<8x8xf32>
    %cst_155 = arith.constant dense<0.000000e+00> : vector<16x8xf32>
    %248 = tpu.matmul %245, %247, %cst_155 {dimension_numbers = #tpu.dot_dimension_numbers<[1], [0], [0], [1], [0, 0, 1, 1], [], []>} : vector<16x8xf32>, vector<8x8xf32>, vector<16x8xf32> -> vector<16x8xf32>
    %249 = arith.addf %244, %248 : vector<16x8xf32>
    %250 = vector.extract_strided_slice %240 {offsets = [2, 0], sizes = [16, 8], strides = [1, 1]} : vector<20x8xf32> to vector<16x8xf32>
    %c2_156 = arith.constant 2 : index
    %c0_157 = arith.constant 0 : index
    %c0_158 = arith.constant 0 : index
    %251 = vector.load %arg18[%c2_156, %c0_157, %c0_158] : memref<5x8x8xf32, #tpu.memory_space<vmem>>, vector<1x8x8xf32>
    %252 = vector.shape_cast %251 : vector<1x8x8xf32> to vector<8x8xf32>
    %cst_159 = arith.constant dense<0.000000e+00> : vector<16x8xf32>
    %253 = tpu.matmul %250, %252, %cst_159 {dimension_numbers = #tpu.dot_dimension_numbers<[1], [0], [0], [1], [0, 0, 1, 1], [], []>} : vector<16x8xf32>, vector<8x8xf32>, vector<16x8xf32> -> vector<16x8xf32>
    %254 = arith.addf %249, %253 : vector<16x8xf32>
    %255 = vector.extract_strided_slice %240 {offsets = [3, 0], sizes = [16, 8], strides = [1, 1]} : vector<20x8xf32> to vector<16x8xf32>
    %c3_160 = arith.constant 3 : index
    %c0_161 = arith.constant 0 : index
    %c0_162 = arith.constant 0 : index
    %256 = vector.load %arg18[%c3_160, %c0_161, %c0_162] : memref<5x8x8xf32, #tpu.memory_space<vmem>>, vector<1x8x8xf32>
    %257 = vector.shape_cast %256 : vector<1x8x8xf32> to vector<8x8xf32>
    %cst_163 = arith.constant dense<0.000000e+00> : vector<16x8xf32>
    %258 = tpu.matmul %255, %257, %cst_163 {dimension_numbers = #tpu.dot_dimension_numbers<[1], [0], [0], [1], [0, 0, 1, 1], [], []>} : vector<16x8xf32>, vector<8x8xf32>, vector<16x8xf32> -> vector<16x8xf32>
    %259 = arith.addf %254, %258 : vector<16x8xf32>
    %260 = vector.extract_strided_slice %240 {offsets = [4, 0], sizes = [16, 8], strides = [1, 1]} : vector<20x8xf32> to vector<16x8xf32>
    %c4_164 = arith.constant 4 : index
    %c0_165 = arith.constant 0 : index
    %c0_166 = arith.constant 0 : index
    %261 = vector.load %arg18[%c4_164, %c0_165, %c0_166] : memref<5x8x8xf32, #tpu.memory_space<vmem>>, vector<1x8x8xf32>
    %262 = vector.shape_cast %261 : vector<1x8x8xf32> to vector<8x8xf32>
    %cst_167 = arith.constant dense<0.000000e+00> : vector<16x8xf32>
    %263 = tpu.matmul %260, %262, %cst_167 {dimension_numbers = #tpu.dot_dimension_numbers<[1], [0], [0], [1], [0, 0, 1, 1], [], []>} : vector<16x8xf32>, vector<8x8xf32>, vector<16x8xf32> -> vector<16x8xf32>
    %264 = arith.addf %259, %263 : vector<16x8xf32>
    %c0_168 = arith.constant 0 : index
    %c0_169 = arith.constant 0 : index
    %265 = vector.load %arg19[%c0_168, %c0_169] : memref<1x8xf32, #tpu.memory_space<vmem>>, vector<1x8xf32>
    %266 = vector.broadcast %265 : vector<1x8xf32> to vector<16x8xf32>
    %267 = arith.addf %264, %266 : vector<16x8xf32>
    %268 = arith.addf %193, %267 : vector<16x8xf32>
    %c0_170 = arith.constant 0 : index
    %c0_171 = arith.constant 0 : index
    %c0_172 = arith.constant 0 : index
    %269 = vector.load %arg20[%c0_170, %c0_171, %c0_172] : memref<1x16x8xf32, #tpu.memory_space<vmem>>, vector<1x16x8xf32>
    %270 = vector.shape_cast %269 : vector<1x16x8xf32> to vector<16x8xf32>
    %271 = vector.shape_cast %268 : vector<16x8xf32> to vector<1x16x8xf32>
    tpu.vector_store %arg20[%c0_170, %c0_171, %c0_172], %271 {strides = array<i32>} : memref<1x16x8xf32, #tpu.memory_space<vmem>>, vector<1x16x8xf32>,
    return
  }
  func.func @transform_0(%arg0: i32, %arg1: i32) -> (i32, i32, i32) {
    %c0_i32 = arith.constant 0 : i32
    %c0_i32_0 = arith.constant 0 : i32
    return %arg0, %arg1, %c0_i32 : i32, i32, i32
  }
  func.func @transform_1(%arg0: i32, %arg1: i32) -> (i32, i32, i32) {
    %c1_i32 = arith.constant 1 : i32
    %0 = arith.addi %arg1, %c1_i32 : i32
    %c1_i32_0 = arith.constant 1 : i32
    %1 = arith.muli %0, %c1_i32_0 : i32
    %c0_i32 = arith.constant 0 : i32
    %c0_i32_1 = arith.constant 0 : i32
    return %arg0, %1, %c0_i32 : i32, i32, i32
  }
  func.func @transform_2(%arg0: i32, %arg1: i32) -> (i32, i32, i32) {
    %c0_i32 = arith.constant 0 : i32
    %c0_i32_0 = arith.constant 0 : i32
    %c0_i32_1 = arith.constant 0 : i32
    %c0_i32_2 = arith.constant 0 : i32
    return %c0_i32, %c0_i32_0, %c0_i32_1 : i32, i32, i32
  }
  func.func @transform_3(%arg0: i32, %arg1: i32) -> (i32, i32) {
    %c0_i32 = arith.constant 0 : i32
    %c0_i32_0 = arith.constant 0 : i32
    %c0_i32_1 = arith.constant 0 : i32
    return %c0_i32, %c0_i32_0 : i32, i32
  }
  func.func @transform_4(%arg0: i32, %arg1: i32) -> (i32, i32, i32) {
    %c0_i32 = arith.constant 0 : i32
    %c0_i32_0 = arith.constant 0 : i32
    %c0_i32_1 = arith.constant 0 : i32
    %c0_i32_2 = arith.constant 0 : i32
    return %c0_i32, %c0_i32_0, %c0_i32_1 : i32, i32, i32
  }
  func.func @transform_5(%arg0: i32, %arg1: i32) -> (i32, i32) {
    %c0_i32 = arith.constant 0 : i32
    %c0_i32_0 = arith.constant 0 : i32
    %c0_i32_1 = arith.constant 0 : i32
    return %c0_i32, %c0_i32_0 : i32, i32
  }
  func.func @transform_6(%arg0: i32, %arg1: i32) -> (i32, i32, i32) {
    %c0_i32 = arith.constant 0 : i32
    %c0_i32_0 = arith.constant 0 : i32
    %c0_i32_1 = arith.constant 0 : i32
    %c0_i32_2 = arith.constant 0 : i32
    return %c0_i32, %c0_i32_0, %c0_i32_1 : i32, i32, i32
  }
  func.func @transform_7(%arg0: i32, %arg1: i32) -> (i32, i32) {
    %c0_i32 = arith.constant 0 : i32
    %c0_i32_0 = arith.constant 0 : i32
    %c0_i32_1 = arith.constant 0 : i32
    return %c0_i32, %c0_i32_0 : i32, i32
  }
  func.func @transform_8(%arg0: i32, %arg1: i32) -> (i32, i32, i32) {
    %c0_i32 = arith.constant 0 : i32
    %c0_i32_0 = arith.constant 0 : i32
    %c0_i32_1 = arith.constant 0 : i32
    %c0_i32_2 = arith.constant 0 : i32
    return %c0_i32, %c0_i32_0, %c0_i32_1 : i32, i32, i32
  }
  func.func @transform_9(%arg0: i32, %arg1: i32) -> (i32, i32) {
    %c0_i32 = arith.constant 0 : i32
    %c0_i32_0 = arith.constant 0 : i32
    %c0_i32_1 = arith.constant 0 : i32
    return %c0_i32, %c0_i32_0 : i32, i32
  }
  func.func @transform_10(%arg0: i32, %arg1: i32) -> (i32, i32, i32) {
    %c0_i32 = arith.constant 0 : i32
    %c0_i32_0 = arith.constant 0 : i32
    %c0_i32_1 = arith.constant 0 : i32
    %c0_i32_2 = arith.constant 0 : i32
    return %c0_i32, %c0_i32_0, %c0_i32_1 : i32, i32, i32
  }
  func.func @transform_11(%arg0: i32, %arg1: i32) -> (i32, i32) {
    %c0_i32 = arith.constant 0 : i32
    %c0_i32_0 = arith.constant 0 : i32
    %c0_i32_1 = arith.constant 0 : i32
    return %c0_i32, %c0_i32_0 : i32, i32
  }
  func.func @transform_12(%arg0: i32, %arg1: i32) -> (i32, i32, i32) {
    %c0_i32 = arith.constant 0 : i32
    %c0_i32_0 = arith.constant 0 : i32
    %c0_i32_1 = arith.constant 0 : i32
    %c0_i32_2 = arith.constant 0 : i32
    return %c0_i32, %c0_i32_0, %c0_i32_1 : i32, i32, i32
  }
  func.func @transform_13(%arg0: i32, %arg1: i32) -> (i32, i32) {
    %c0_i32 = arith.constant 0 : i32
    %c0_i32_0 = arith.constant 0 : i32
    %c0_i32_1 = arith.constant 0 : i32
    return %c0_i32, %c0_i32_0 : i32, i32
  }
  func.func @transform_14(%arg0: i32, %arg1: i32) -> (i32, i32, i32) {
    %c0_i32 = arith.constant 0 : i32
    %c0_i32_0 = arith.constant 0 : i32
    %c0_i32_1 = arith.constant 0 : i32
    %c0_i32_2 = arith.constant 0 : i32
    return %c0_i32, %c0_i32_0, %c0_i32_1 : i32, i32, i32
  }
  func.func @transform_15(%arg0: i32, %arg1: i32) -> (i32, i32) {
    %c0_i32 = arith.constant 0 : i32
    %c0_i32_0 = arith.constant 0 : i32
    %c0_i32_1 = arith.constant 0 : i32
    return %c0_i32, %c0_i32_0 : i32, i32
  }
  func.func @transform_16(%arg0: i32, %arg1: i32) -> (i32, i32, i32) {
    %c0_i32 = arith.constant 0 : i32
    %c0_i32_0 = arith.constant 0 : i32
    %c0_i32_1 = arith.constant 0 : i32
    %c0_i32_2 = arith.constant 0 : i32
    return %c0_i32, %c0_i32_0, %c0_i32_1 : i32, i32, i32
  }
  func.func @transform_17(%arg0: i32, %arg1: i32) -> (i32, i32) {
    %c0_i32 = arith.constant 0 : i32
    %c0_i32_0 = arith.constant 0 : i32
    %c0_i32_1 = arith.constant 0 : i32
    return %c0_i32, %c0_i32_0 : i32, i32
  }
  func.func @transform_18(%arg0: i32, %arg1: i32) -> (i32, i32, i32) {
    %c0_i32 = arith.constant 0 : i32
    %c0_i32_0 = arith.constant 0 : i32
    return %arg0, %arg1, %c0_i32 : i32, i32, i32
  }
}

</mosaic_0001>

<llo_original>
// kernel: _lambda_.1
$region0: #{_lambda_.1}
  #allocation0 [shape = 'u32[]', space=smem, size = 0x4, offset = 0x4, fixed_abs, tag = 'smem constant byte address 0x4 - core index']
  #allocation1 [shape = 'u32[144,128]{1,0:T(1,128)}', space=vmem, size = 0x12000, scoped, tag = 'internal scratch']
  %s0 = inlined_call_operand.vmem [shape: f32[2,32,8], index: 0, kind: input, shape index: {}, may-alias: {0,1}]
  %s1 = inlined_call_operand.vmem [shape: f32[2,32,8], index: 1, kind: input, shape index: {}, may-alias: {0,1}]
  %s2 = inlined_call_operand.hbm [shape: f32[3,8,8], index: 2, kind: input, shape index: {}]
  %s3 = inlined_call_operand.hbm [shape: f32[1,8], index: 3, kind: input, shape index: {}]
  %s4 = inlined_call_operand.hbm [shape: f32[3,8,8], index: 4, kind: input, shape index: {}]
  %s5 = inlined_call_operand.hbm [shape: f32[1,8], index: 5, kind: input, shape index: {}]
  %s6 = inlined_call_operand.hbm [shape: f32[3,8,8], index: 6, kind: input, shape index: {}]
  %s7 = inlined_call_operand.vmem [shape: f32[1,8], index: 7, kind: input, shape index: {}]
  %s8 = inlined_call_operand.hbm [shape: f32[3,8,8], index: 8, kind: input, shape index: {}]
  %s9 = inlined_call_operand.vmem [shape: f32[1,8], index: 9, kind: input, shape index: {}]
  %s10 = inlined_call_operand.vmem [shape: f32[5,8,8], index: 10, kind: input, shape index: {}]
  %s11 = inlined_call_operand.vmem [shape: f32[1,8], index: 11, kind: input, shape index: {}]
  %s12 = inlined_call_operand.vmem [shape: f32[5,8,8], index: 12, kind: input, shape index: {}]
  %s13 = inlined_call_operand.vmem [shape: f32[1,8], index: 13, kind: input, shape index: {}]
  %s14 = inlined_call_operand.vmem [shape: f32[5,8,8], index: 14, kind: input, shape index: {}]
  %s15 = inlined_call_operand.vmem [shape: f32[1,8], index: 15, kind: input, shape index: {}]
  %s16 = inlined_call_operand.vmem [shape: f32[5,8,8], index: 16, kind: input, shape index: {}]
  %s17 = inlined_call_operand.vmem [shape: f32[1,8], index: 17, kind: input, shape index: {}]
  %s18 = inlined_call_operand.vmem [shape: f32[2,16,8], index: 18, kind: output, shape index: {}]
  %s19 = sld [smem:[#allocation0]]
  $region129: #{_lambda_.1} parent=0
    _
  %s21 = ssub.s32 1, %s19
  %s22 = scalar_select 0, %s21, %s19
  $region1: #{_lambda_.1} parent=0
    #allocation2 [shape = 'u8[12288]{0}', space=vmem, size = 0x3000, scoped, tag = 'input window, operand 2, single buffered']
    #allocation3 [shape = 's32[2]{0}', space=sflag, size = 0x8, scoped, tag = 'scoped memory for _lambda_.1']
    #allocation4 [shape = 'u8[512]{0}', space=vmem, size = 0x400, scoped, tag = 'input window, operand 3, single buffered']
    #allocation5 [shape = 's32[1]{0}', space=sflag, size = 0x4, scoped, tag = 'scoped memory for _lambda_.1']
    #allocation6 [shape = 'u8[12288]{0}', space=vmem, size = 0x3000, scoped, tag = 'input window, operand 4, single buffered']
    #allocation7 [shape = 'u8[512]{0}', space=vmem, size = 0x400, scoped, tag = 'input window, operand 5, single buffered']
    #allocation8 [shape = 's32[1]{0}', space=sflag, size = 0x4, scoped, tag = 'scoped memory for _lambda_.1']
    #allocation9 [shape = 'u8[12288]{0}', space=vmem, size = 0x3000, scoped, tag = 'input window, operand 6, single buffered']
    #allocation10 [shape = 'u8[12288]{0}', space=vmem, size = 0x3000, scoped, tag = 'input window, operand 8, single buffered']
    #allocation11 [shape = 's32[1]{0}', space=sflag, size = 0x4, scoped, tag = 'scoped memory for _lambda_.1']
    %23 = vsyncpa [#allocation3], 0
    %24 = vsyncpa [#allocation5], 0
    %25 = vsyncpa [#allocation8], 0
    %26 = vsyncpa [#allocation11], 0
    loop: start=0, step=1, limit=4
    $region2: #{_lambda_.1} parent=1 // loop_pre_header
      _
    $region3: #{_lambda_.1} parent=1 // loop_header
      %s28 = sphi 0, %s32
      %p29 = scmp.ge.s32.totalorder %s28, 4
      %s35 = sphi 0, %s47
      %s36 = sphi 0, %s43
      %s37 = sphi 0, %s35
      %s38 = sphi 0, %s36
      %s39 = sphi 0, %s37
      %s40 = sphi 0, %s38
      %s52 = sphi 0, %s54
      %s55 = sphi 0, %s52
      %s56 = sphi 0, %s55
      %s72 = sphi 0, %s56
      %s82 = sphi 0, %s84
      %s85 = sphi 0, %s82
      %s86 = sphi 0, %s85
      %s102 = sphi 0, %s86
      %s106 = sphi 0, %s106
      %s108 = sphi 0, %s106
      %s109 = sphi 0, %s108
      %s123 = sphi 0, %s109
      %s127 = sphi 0, %s127
      %s129 = sphi 0, %s127
      %s130 = sphi 0, %s129
      %s144 = sphi 0, %s130
      %s148 = sphi 0, %s148
      %s150 = sphi 0, %s148
      %s151 = sphi 0, %s150
      %s165 = sphi 0, %s151
      %s169 = sphi 0, %s169
      %s171 = sphi 0, %s169
      %s172 = sphi 0, %s171
      %s186 = sphi 0, %s172
      %s190 = sphi 0, %s190
      %s192 = sphi 0, %s190
      %s193 = sphi 0, %s192
      %s207 = sphi 0, %s193
      %s211 = sphi 0, %s211
      %s213 = sphi 0, %s211
      %s214 = sphi 0, %s213
      %s228 = sphi 0, %s214
      %s232 = sphi 0, %s232
      %s234 = sphi 0, %s232
      %s235 = sphi 0, %s234
      %s249 = sphi 0, %s235
      %s253 = sphi 0, %s253
      %s255 = sphi 0, %s253
      %s256 = sphi 0, %s255
      %s270 = sphi 0, %s256
      %s274 = sphi 0, %s274
      %s276 = sphi 0, %s274
      %s277 = sphi 0, %s276
      %s291 = sphi 0, %s277
      %s295 = sphi 0, %s295
      %s297 = sphi 0, %s295
      %s298 = sphi 0, %s297
      %s312 = sphi 0, %s298
      %s316 = sphi 0, %s316
      %s318 = sphi 0, %s316
      %s319 = sphi 0, %s318
      %s333 = sphi 0, %s319
      %s337 = sphi 0, %s337
      %s339 = sphi 0, %s337
      %s340 = sphi 0, %s339
      %s354 = sphi 0, %s340
      %s358 = sphi 0, %s358
      %s360 = sphi 0, %s358
      %s361 = sphi 0, %s360
      %s375 = sphi 0, %s361
      %s379 = sphi 0, %s379
      %s381 = sphi 0, %s379
      %s382 = sphi 0, %s381
      %s396 = sphi 0, %s382
      %s400 = sphi 0, %s400
      %s402 = sphi 0, %s400
      %s403 = sphi 0, %s402
      %s417 = sphi 0, %s403
      %s421 = sphi 0, %s421
      %s423 = sphi 0, %s421
      %s424 = sphi 0, %s423
      %s438 = sphi 0, %s424
      %s446 = sphi 0, %s448
      %s449 = sphi 0, %s446
      %s450 = sphi 0, %s449
      %s466 = sphi 0, %s450
    $region4: #{_lambda_.1} parent=1 // loop_header_branch
      %31 = sbr.rel (%p29) target = $region8
    $region5: #{_lambda_.1} parent=1 // loop_body
      %s33 = ssub.s32 %s28, 1
      %s34 = ssub.s32 %s28, 2
      %s41 = sadd.s32 1, %s36
      %p42 = scmp.ge.s32.totalorder %s41, 1
      %s43 = scalar_select %p42, 0, %s41
      %s44 = sadd.s32 1, %s35
      %s45 = scalar_select %p42, %s44, %s35
      %p46 = scmp.ge.s32.totalorder %s45, 2
      %s47 = scalar_select %p46, 0, %s45
      %s48 = ssub.s32 %s35, %s47
      %s49 = ssub.s32 %s36, %s43
      %s50 = sor.u32 %s48, %s49
      %p51 = scmp.eq.s32.totalorder %s50, 0
      %s53 = sadd.s32 %s52, 1
      %s54 = scalar_select %p51, %s52, %s53
      %p57 = pneg %p51
      %p58 = scmp.eq.s32.totalorder %s28, 1
      %p59 = por %p57, %p58
      %p60 = scmp.ne.s32.totalorder %s52, %s55
      %p61 = scmp.eq.s32.totalorder %s28, 0
      %p62 = por %p60, %p61
      %p63 = scmp.ne.s32.totalorder %s52, %s55
      %p64 = scmp.eq.s32.totalorder %s33, 1
      %p65 = por %p63, %p64
      %p66 = scmp.ne.s32.totalorder %s55, %s56
      %p67 = scmp.eq.s32.totalorder %s33, 0
      %p68 = por %p66, %p67
      %p69 = scmp.ne.s32.totalorder %s55, %s56
      %p70 = scmp.eq.s32.totalorder %s34, 1
      %p71 = por %p69, %p70
      %p73 = scmp.ne.s32.totalorder %s56, %s72
      %p74 = scmp.eq.s32.totalorder %s34, 0
      %p75 = por %p73, %p74
      %s76 = sadd.s32 %s36, 1
      %s77 = sadd.s32 %s43, 1
      %s78 = ssub.s32 %s35, %s47
      %s79 = ssub.s32 %s76, %s77
      %s80 = sor.u32 %s78, %s79
      %p81 = scmp.eq.s32.totalorder %s80, 0
      %s83 = sadd.s32 %s82, 1
      %s84 = scalar_select %p81, %s82, %s83
      %p87 = pneg %p81
      %p88 = scmp.eq.s32.totalorder %s28, 1
      %p89 = por %p87, %p88
      %p90 = scmp.ne.s32.totalorder %s82, %s85
      %p91 = scmp.eq.s32.totalorder %s28, 0
      %p92 = por %p90, %p91
      %p93 = scmp.ne.s32.totalorder %s82, %s85
      %p94 = scmp.eq.s32.totalorder %s33, 1
      %p95 = por %p93, %p94
      %p96 = scmp.ne.s32.totalorder %s85, %s86
      %p97 = scmp.eq.s32.totalorder %s33, 0
      %p98 = por %p96, %p97
      %p99 = scmp.ne.s32.totalorder %s85, %s86
      %p100 = scmp.eq.s32.totalorder %s34, 1
      %p101 = por %p99, %p100
      %p103 = scmp.ne.s32.totalorder %s86, %s102
      %p104 = scmp.eq.s32.totalorder %s34, 0
      %p105 = por %p103, %p104
      %s107 = sadd.s32 %s106, 1
      %p110 = scmp.eq.s32.totalorder %s28, 1
      %p111 = scmp.ne.s32.totalorder %s106, %s108
      %p112 = scmp.eq.s32.totalorder %s28, 0
      %p113 = por %p111, %p112
      %p114 = scmp.ne.s32.totalorder %s106, %s108
      %p115 = scmp.eq.s32.totalorder %s33, 1
      %p116 = por %p114, %p115
      %p117 = scmp.ne.s32.totalorder %s108, %s109
      %p118 = scmp.eq.s32.totalorder %s33, 0
      %p119 = por %p117, %p118
      %p120 = scmp.ne.s32.totalorder %s108, %s109
      %p121 = scmp.eq.s32.totalorder %s34, 1
      %p122 = por %p120, %p121
      %p124 = scmp.ne.s32.totalorder %s109, %s123
      %p125 = scmp.eq.s32.totalorder %s34, 0
      %p126 = por %p124, %p125
      %s128 = sadd.s32 %s127, 1
      %p131 = scmp.eq.s32.totalorder %s28, 1
      %p132 = scmp.ne.s32.totalorder %s127, %s129
      %p133 = scmp.eq.s32.totalorder %s28, 0
      %p134 = por %p132, %p133
      %p135 = scmp.ne.s32.totalorder %s127, %s129
      %p136 = scmp.eq.s32.totalorder %s33, 1
      %p137 = por %p135, %p136
      %p138 = scmp.ne.s32.totalorder %s129, %s130
      %p139 = scmp.eq.s32.totalorder %s33, 0
      %p140 = por %p138, %p139
      %p141 = scmp.ne.s32.totalorder %s129, %s130
      %p142 = scmp.eq.s32.totalorder %s34, 1
      %p143 = por %p141, %p142
      %p145 = scmp.ne.s32.totalorder %s130, %s144
      %p146 = scmp.eq.s32.totalorder %s34, 0
      %p147 = por %p145, %p146
      %s149 = sadd.s32 %s148, 1
      %p152 = scmp.eq.s32.totalorder %s28, 1
      %p153 = scmp.ne.s32.totalorder %s148, %s150
      %p154 = scmp.eq.s32.totalorder %s28, 0
      %p155 = por %p153, %p154
      %p156 = scmp.ne.s32.totalorder %s148, %s150
      %p157 = scmp.eq.s32.totalorder %s33, 1
      %p158 = por %p156, %p157
      %p159 = scmp.ne.s32.totalorder %s150, %s151
      %p160 = scmp.eq.s32.totalorder %s33, 0
      %p161 = por %p159, %p160
      %p162 = scmp.ne.s32.totalorder %s150, %s151
      %p163 = scmp.eq.s32.totalorder %s34, 1
      %p164 = por %p162, %p163
      %p166 = scmp.ne.s32.totalorder %s151, %s165
      %p167 = scmp.eq.s32.totalorder %s34, 0
      %p168 = por %p166, %p167
      %s170 = sadd.s32 %s169, 1
      %p173 = scmp.eq.s32.totalorder %s28, 1
      %p174 = scmp.ne.s32.totalorder %s169, %s171
      %p175 = scmp.eq.s32.totalorder %s28, 0
      %p176 = por %p174, %p175
      %p177 = scmp.ne.s32.totalorder %s169, %s171
      %p178 = scmp.eq.s32.totalorder %s33, 1
      %p179 = por %p177, %p178
      %p180 = scmp.ne.s32.totalorder %s171, %s172
      %p181 = scmp.eq.s32.totalorder %s33, 0
      %p182 = por %p180, %p181
      %p183 = scmp.ne.s32.totalorder %s171, %s172
      %p184 = scmp.eq.s32.totalorder %s34, 1
      %p185 = por %p183, %p184
      %p187 = scmp.ne.s32.totalorder %s172, %s186
      %p188 = scmp.eq.s32.totalorder %s34, 0
      %p189 = por %p187, %p188
      %s191 = sadd.s32 %s190, 1
      %p194 = scmp.eq.s32.totalorder %s28, 1
      %p195 = scmp.ne.s32.totalorder %s190, %s192
      %p196 = scmp.eq.s32.totalorder %s28, 0
      %p197 = por %p195, %p196
      %p198 = scmp.ne.s32.totalorder %s190, %s192
      %p199 = scmp.eq.s32.totalorder %s33, 1
      %p200 = por %p198, %p199
      %p201 = scmp.ne.s32.totalorder %s192, %s193
      %p202 = scmp.eq.s32.totalorder %s33, 0
      %p203 = por %p201, %p202
      %p204 = scmp.ne.s32.totalorder %s192, %s193
      %p205 = scmp.eq.s32.totalorder %s34, 1
      %p206 = por %p204, %p205
      %p208 = scmp.ne.s32.totalorder %s193, %s207
      %p209 = scmp.eq.s32.totalorder %s34, 0
      %p210 = por %p208, %p209
      %s212 = sadd.s32 %s211, 1
      %p215 = scmp.eq.s32.totalorder %s28, 1
      %p216 = scmp.ne.s32.totalorder %s211, %s213
      %p217 = scmp.eq.s32.totalorder %s28, 0
      %p218 = por %p216, %p217
      %p219 = scmp.ne.s32.totalorder %s211, %s213
      %p220 = scmp.eq.s32.totalorder %s33, 1
      %p221 = por %p219, %p220
      %p222 = scmp.ne.s32.totalorder %s213, %s214
      %p223 = scmp.eq.s32.totalorder %s33, 0
      %p224 = por %p222, %p223
      %p225 = scmp.ne.s32.totalorder %s213, %s214
      %p226 = scmp.eq.s32.totalorder %s34, 1
      %p227 = por %p225, %p226
      %p229 = scmp.ne.s32.totalorder %s214, %s228
      %p230 = scmp.eq.s32.totalorder %s34, 0
      %p231 = por %p229, %p230
      %s233 = sadd.s32 %s232, 1
      %p236 = scmp.eq.s32.totalorder %s28, 1
      %p237 = scmp.ne.s32.totalorder %s232, %s234
      %p238 = scmp.eq.s32.totalorder %s28, 0
      %p239 = por %p237, %p238
      %p240 = scmp.ne.s32.totalorder %s232, %s234
      %p241 = scmp.eq.s32.totalorder %s33, 1
      %p242 = por %p240, %p241
      %p243 = scmp.ne.s32.totalorder %s234, %s235
      %p244 = scmp.eq.s32.totalorder %s33, 0
      %p245 = por %p243, %p244
      %p246 = scmp.ne.s32.totalorder %s234, %s235
      %p247 = scmp.eq.s32.totalorder %s34, 1
      %p248 = por %p246, %p247
      %p250 = scmp.ne.s32.totalorder %s235, %s249
      %p251 = scmp.eq.s32.totalorder %s34, 0
      %p252 = por %p250, %p251
      %s254 = sadd.s32 %s253, 1
      %p257 = scmp.eq.s32.totalorder %s28, 1
      %p258 = scmp.ne.s32.totalorder %s253, %s255
      %p259 = scmp.eq.s32.totalorder %s28, 0
      %p260 = por %p258, %p259
      %p261 = scmp.ne.s32.totalorder %s253, %s255
      %p262 = scmp.eq.s32.totalorder %s33, 1
      %p263 = por %p261, %p262
      %p264 = scmp.ne.s32.totalorder %s255, %s256
      %p265 = scmp.eq.s32.totalorder %s33, 0
      %p266 = por %p264, %p265
      %p267 = scmp.ne.s32.totalorder %s255, %s256
      %p268 = scmp.eq.s32.totalorder %s34, 1
      %p269 = por %p267, %p268
      %p271 = scmp.ne.s32.totalorder %s256, %s270
      %p272 = scmp.eq.s32.totalorder %s34, 0
      %p273 = por %p271, %p272
      %s275 = sadd.s32 %s274, 1
      %p278 = scmp.eq.s32.totalorder %s28, 1
      %p279 = scmp.ne.s32.totalorder %s274, %s276
      %p280 = scmp.eq.s32.totalorder %s28, 0
      %p281 = por %p279, %p280
      %p282 = scmp.ne.s32.totalorder %s274, %s276
      %p283 = scmp.eq.s32.totalorder %s33, 1
      %p284 = por %p282, %p283
      %p285 = scmp.ne.s32.totalorder %s276, %s277
      %p286 = scmp.eq.s32.totalorder %s33, 0
      %p287 = por %p285, %p286
      %p288 = scmp.ne.s32.totalorder %s276, %s277
      %p289 = scmp.eq.s32.totalorder %s34, 1
      %p290 = por %p288, %p289
      %p292 = scmp.ne.s32.totalorder %s277, %s291
      %p293 = scmp.eq.s32.totalorder %s34, 0
      %p294 = por %p292, %p293
      %s296 = sadd.s32 %s295, 1
      %p299 = scmp.eq.s32.totalorder %s28, 1
      %p300 = scmp.ne.s32.totalorder %s295, %s297
      %p301 = scmp.eq.s32.totalorder %s28, 0
      %p302 = por %p300, %p301
      %p303 = scmp.ne.s32.totalorder %s295, %s297
      %p304 = scmp.eq.s32.totalorder %s33, 1
      %p305 = por %p303, %p304
      %p306 = scmp.ne.s32.totalorder %s297, %s298
      %p307 = scmp.eq.s32.totalorder %s33, 0
      %p308 = por %p306, %p307
      %p309 = scmp.ne.s32.totalorder %s297, %s298
      %p310 = scmp.eq.s32.totalorder %s34, 1
      %p311 = por %p309, %p310
      %p313 = scmp.ne.s32.totalorder %s298, %s312
      %p314 = scmp.eq.s32.totalorder %s34, 0
      %p315 = por %p313, %p314
      %s317 = sadd.s32 %s316, 1
      %p320 = scmp.eq.s32.totalorder %s28, 1
      %p321 = scmp.ne.s32.totalorder %s316, %s318
      %p322 = scmp.eq.s32.totalorder %s28, 0
      %p323 = por %p321, %p322
      %p324 = scmp.ne.s32.totalorder %s316, %s318
      %p325 = scmp.eq.s32.totalorder %s33, 1
      %p326 = por %p324, %p325
      %p327 = scmp.ne.s32.totalorder %s318, %s319
      %p328 = scmp.eq.s32.totalorder %s33, 0
      %p329 = por %p327, %p328
      %p330 = scmp.ne.s32.totalorder %s318, %s319
      %p331 = scmp.eq.s32.totalorder %s34, 1
      %p332 = por %p330, %p331
      %p334 = scmp.ne.s32.totalorder %s319, %s333
      %p335 = scmp.eq.s32.totalorder %s34, 0
      %p336 = por %p334, %p335
      %s338 = sadd.s32 %s337, 1
      %p341 = scmp.eq.s32.totalorder %s28, 1
      %p342 = scmp.ne.s32.totalorder %s337, %s339
      %p343 = scmp.eq.s32.totalorder %s28, 0
      %p344 = por %p342, %p343
      %p345 = scmp.ne.s32.totalorder %s337, %s339
      %p346 = scmp.eq.s32.totalorder %s33, 1
      %p347 = por %p345, %p346
      %p348 = scmp.ne.s32.totalorder %s339, %s340
      %p349 = scmp.eq.s32.totalorder %s33, 0
      %p350 = por %p348, %p349
      %p351 = scmp.ne.s32.totalorder %s339, %s340
      %p352 = scmp.eq.s32.totalorder %s34, 1
      %p353 = por %p351, %p352
      %p355 = scmp.ne.s32.totalorder %s340, %s354
      %p356 = scmp.eq.s32.totalorder %s34, 0
      %p357 = por %p355, %p356
      %s359 = sadd.s32 %s358, 1
      %p362 = scmp.eq.s32.totalorder %s28, 1
      %p363 = scmp.ne.s32.totalorder %s358, %s360
      %p364 = scmp.eq.s32.totalorder %s28, 0
      %p365 = por %p363, %p364
      %p366 = scmp.ne.s32.totalorder %s358, %s360
      %p367 = scmp.eq.s32.totalorder %s33, 1
      %p368 = por %p366, %p367
      %p369 = scmp.ne.s32.totalorder %s360, %s361
      %p370 = scmp.eq.s32.totalorder %s33, 0
      %p371 = por %p369, %p370
      %p372 = scmp.ne.s32.totalorder %s360, %s361
      %p373 = scmp.eq.s32.totalorder %s34, 1
      %p374 = por %p372, %p373
      %p376 = scmp.ne.s32.totalorder %s361, %s375
      %p377 = scmp.eq.s32.totalorder %s34, 0
      %p378 = por %p376, %p377
      %s380 = sadd.s32 %s379, 1
      %p383 = scmp.eq.s32.totalorder %s28, 1
      %p384 = scmp.ne.s32.totalorder %s379, %s381
      %p385 = scmp.eq.s32.totalorder %s28, 0
      %p386 = por %p384, %p385
      %p387 = scmp.ne.s32.totalorder %s379, %s381
      %p388 = scmp.eq.s32.totalorder %s33, 1
      %p389 = por %p387, %p388
      %p390 = scmp.ne.s32.totalorder %s381, %s382
      %p391 = scmp.eq.s32.totalorder %s33, 0
      %p392 = por %p390, %p391
      %p393 = scmp.ne.s32.totalorder %s381, %s382
      %p394 = scmp.eq.s32.totalorder %s34, 1
      %p395 = por %p393, %p394
      %p397 = scmp.ne.s32.totalorder %s382, %s396
      %p398 = scmp.eq.s32.totalorder %s34, 0
      %p399 = por %p397, %p398
      %s401 = sadd.s32 %s400, 1
      %p404 = scmp.eq.s32.totalorder %s28, 1
      %p405 = scmp.ne.s32.totalorder %s400, %s402
      %p406 = scmp.eq.s32.totalorder %s28, 0
      %p407 = por %p405, %p406
      %p408 = scmp.ne.s32.totalorder %s400, %s402
      %p409 = scmp.eq.s32.totalorder %s33, 1
      %p410 = por %p408, %p409
      %p411 = scmp.ne.s32.totalorder %s402, %s403
      %p412 = scmp.eq.s32.totalorder %s33, 0
      %p413 = por %p411, %p412
      %p414 = scmp.ne.s32.totalorder %s402, %s403
      %p415 = scmp.eq.s32.totalorder %s34, 1
      %p416 = por %p414, %p415
      %p418 = scmp.ne.s32.totalorder %s403, %s417
      %p419 = scmp.eq.s32.totalorder %s34, 0
      %p420 = por %p418, %p419
      %s422 = sadd.s32 %s421, 1
      %p425 = scmp.eq.s32.totalorder %s28, 1
      %p426 = scmp.ne.s32.totalorder %s421, %s423
      %p427 = scmp.eq.s32.totalorder %s28, 0
      %p428 = por %p426, %p427
      %p429 = scmp.ne.s32.totalorder %s421, %s423
      %p430 = scmp.eq.s32.totalorder %s33, 1
      %p431 = por %p429, %p430
      %p432 = scmp.ne.s32.totalorder %s423, %s424
      %p433 = scmp.eq.s32.totalorder %s33, 0
      %p434 = por %p432, %p433
      %p435 = scmp.ne.s32.totalorder %s423, %s424
      %p436 = scmp.eq.s32.totalorder %s34, 1
      %p437 = por %p435, %p436
      %p439 = scmp.ne.s32.totalorder %s424, %s438
      %p440 = scmp.eq.s32.totalorder %s34, 0
      %p441 = por %p439, %p440
      %s442 = ssub.s32 %s35, %s47
      %s443 = ssub.s32 %s36, %s43
      %s444 = sor.u32 %s442, %s443
      %p445 = scmp.eq.s32.totalorder %s444, 0
      %s447 = sadd.s32 %s446, 1
      %s448 = scalar_select %p445, %s446, %s447
      %p451 = pneg %p445
      %p452 = scmp.eq.s32.totalorder %s28, 1
      %p453 = por %p451, %p452
      %p454 = scmp.ne.s32.totalorder %s446, %s449
      %p455 = scmp.eq.s32.totalorder %s28, 0
      %p456 = por %p454, %p455
      %p457 = scmp.ne.s32.totalorder %s446, %s449
      %p458 = scmp.eq.s32.totalorder %s33, 1
      %p459 = por %p457, %p458
      %p460 = scmp.ne.s32.totalorder %s449, %s450
      %p461 = scmp.eq.s32.totalorder %s33, 0
      %p462 = por %p460, %p461
      %p463 = scmp.ne.s32.totalorder %s449, %s450
      %p464 = scmp.eq.s32.totalorder %s34, 1
      %p465 = por %p463, %p464
      %p467 = scmp.ne.s32.totalorder %s450, %s466
      %p468 = scmp.eq.s32.totalorder %s34, 0
      %p469 = por %p467, %p468
      %p470 = scmp.le.s32.totalorder 1, %s28
      %p471 = scmp.lt.s32.totalorder %s28, 3
      %p472 = pnand %p470, %p471
      %p473 = pneg %p472
      // Predicated region
      $region9: #{_lambda_.1} parent=5 // pred_check
        _
      $region10: #{_lambda_.1} parent=5 // pred_check_branch
        %475 = sbr.rel (%p472) target = $region12
      $region11: #{_lambda_.1} parent=5 // pred_region
        %s476 = ssub.s32 %s28, 1
        // Predicated region
        $region13: #{_lambda_.1} parent=11 // pred_check
          %p477 = pneg %p119
        $region14: #{_lambda_.1} parent=11 // pred_check_branch
          %479 = sbr.rel (%p477) target = $region16
        $region15: #{_lambda_.1} parent=11 // pred_region
          %s481 = ssub.s32 384, 384
          %482 = vsyncadd [#allocation3], %s481
          %s483 = sshll.u32 [#allocation2], 4
          %s484 = int_to_ptr.vmem [resolvable:$true] %s483
          %489 = dma.hbm_to_vmem [thread:$0]  %s2, 384, %s484, [#allocation3], 128, 128, 8
        $region16: #{_lambda_.1} parent=11 // pred_fallthru
          _
        // Predicated region
        $region17: #{_lambda_.1} parent=11 // pred_check
          %p490 = pneg %p140
        $region18: #{_lambda_.1} parent=11 // pred_check_branch
          %492 = sbr.rel (%p490) target = $region20
        $region19: #{_lambda_.1} parent=11 // pred_region
          %s494 = ssub.s32 16, 16
          %495 = vsyncadd [#allocation5], %s494
          %s497 = sshll.u32 [#allocation4], 4
          %s498 = int_to_ptr.vmem [resolvable:$true] %s497
          %500 = dma.hbm_to_vmem [thread:$0]  %s3, 16, %s498, [#allocation5]
        $region20: #{_lambda_.1} parent=11 // pred_fallthru
          _
        // Predicated region
        $region21: #{_lambda_.1} parent=11 // pred_check
          %p501 = pneg %p161
        $region22: #{_lambda_.1} parent=11 // pred_check_branch
          %503 = sbr.rel (%p501) target = $region24
        $region23: #{_lambda_.1} parent=11 // pred_region
          %s505 = ssub.s32 384, 384
          %506 = vsyncadd [#allocation5], %s505
          %s507 = sshll.u32 [#allocation6], 4
          %s508 = int_to_ptr.vmem [resolvable:$true] %s507
          %513 = dma.hbm_to_vmem [thread:$0]  %s4, 384, %s508, [#allocation5], 128, 128, 8
        $region24: #{_lambda_.1} parent=11 // pred_fallthru
          _
        // Predicated region
        $region25: #{_lambda_.1} parent=11 // pred_check
          %p514 = pneg %p182
        $region26: #{_lambda_.1} parent=11 // pred_check_branch
          %516 = sbr.rel (%p514) target = $region28
        $region27: #{_lambda_.1} parent=11 // pred_region
          %s518 = ssub.s32 16, 16
          %519 = vsyncadd [#allocation8], %s518
          %s521 = sshll.u32 [#allocation7], 4
          %s522 = int_to_ptr.vmem [resolvable:$true] %s521
          %524 = dma.hbm_to_vmem [thread:$0]  %s5, 16, %s522, [#allocation8]
        $region28: #{_lambda_.1} parent=11 // pred_fallthru
          _
        // Predicated region
        $region29: #{_lambda_.1} parent=11 // pred_check
          %p525 = pneg %p203
        $region30: #{_lambda_.1} parent=11 // pred_check_branch
          %527 = sbr.rel (%p525) target = $region32
        $region31: #{_lambda_.1} parent=11 // pred_region
          %s529 = ssub.s32 384, 384
          %530 = vsyncadd [#allocation8], %s529
          %s531 = sshll.u32 [#allocation9], 4
          %s532 = int_to_ptr.vmem [resolvable:$true] %s531
          %537 = dma.hbm_to_vmem [thread:$0]  %s6, 384, %s532, [#allocation8], 128, 128, 8
        $region32: #{_lambda_.1} parent=11 // pred_fallthru
          _
        // Predicated region
        $region33: #{_lambda_.1} parent=11 // pred_check
          %p538 = pneg %p224
        $region34: #{_lambda_.1} parent=11 // pred_check_branch
          %540 = sbr.rel (%p538) target = $region36
        $region35: #{_lambda_.1} parent=11 // pred_region
          _
        $region36: #{_lambda_.1} parent=11 // pred_fallthru
          _
        // Predicated region
        $region37: #{_lambda_.1} parent=11 // pred_check
          %p541 = pneg %p245
        $region38: #{_lambda_.1} parent=11 // pred_check_branch
          %543 = sbr.rel (%p541) target = $region40
        $region39: #{_lambda_.1} parent=11 // pred_region
          %s545 = ssub.s32 384, 384
          %546 = vsyncadd [#allocation11], %s545
          %s547 = sshll.u32 [#allocation10], 4
          %s548 = int_to_ptr.vmem [resolvable:$true] %s547
          %553 = dma.hbm_to_vmem [thread:$0]  %s8, 384, %s548, [#allocation11], 128, 128, 8
        $region40: #{_lambda_.1} parent=11 // pred_fallthru
          _
        // Predicated region
        $region41: #{_lambda_.1} parent=11 // pred_check
          %p554 = pneg %p266
        $region42: #{_lambda_.1} parent=11 // pred_check_branch
          %556 = sbr.rel (%p554) target = $region44
        $region43: #{_lambda_.1} parent=11 // pred_region
          _
        $region44: #{_lambda_.1} parent=11 // pred_fallthru
          _
        // Predicated region
        $region45: #{_lambda_.1} parent=11 // pred_check
          %p557 = pneg %p287
        $region46: #{_lambda_.1} parent=11 // pred_check_branch
          %559 = sbr.rel (%p557) target = $region48
        $region47: #{_lambda_.1} parent=11 // pred_region
          _
        $region48: #{_lambda_.1} parent=11 // pred_fallthru
          _
        // Predicated region
        $region49: #{_lambda_.1} parent=11 // pred_check
          %p560 = pneg %p308
        $region50: #{_lambda_.1} parent=11 // pred_check_branch
          %562 = sbr.rel (%p560) target = $region52
        $region51: #{_lambda_.1} parent=11 // pred_region
          _
        $region52: #{_lambda_.1} parent=11 // pred_fallthru
          _
        // Predicated region
        $region53: #{_lambda_.1} parent=11 // pred_check
          %p563 = pneg %p329
        $region54: #{_lambda_.1} parent=11 // pred_check_branch
          %565 = sbr.rel (%p563) target = $region56
        $region55: #{_lambda_.1} parent=11 // pred_region
          _
        $region56: #{_lambda_.1} parent=11 // pred_fallthru
          _
        // Predicated region
        $region57: #{_lambda_.1} parent=11 // pred_check
          %p566 = pneg %p350
        $region58: #{_lambda_.1} parent=11 // pred_check_branch
          %568 = sbr.rel (%p566) target = $region60
        $region59: #{_lambda_.1} parent=11 // pred_region
          _
        $region60: #{_lambda_.1} parent=11 // pred_fallthru
          _
        // Predicated region
        $region61: #{_lambda_.1} parent=11 // pred_check
          %p569 = pneg %p371
        $region62: #{_lambda_.1} parent=11 // pred_check_branch
          %571 = sbr.rel (%p569) target = $region64
        $region63: #{_lambda_.1} parent=11 // pred_region
          _
        $region64: #{_lambda_.1} parent=11 // pred_fallthru
          _
        // Predicated region
        $region65: #{_lambda_.1} parent=11 // pred_check
          %p572 = pneg %p392
        $region66: #{_lambda_.1} parent=11 // pred_check_branch
          %574 = sbr.rel (%p572) target = $region68
        $region67: #{_lambda_.1} parent=11 // pred_region
          _
        $region68: #{_lambda_.1} parent=11 // pred_fallthru
          _
        // Predicated region
        $region69: #{_lambda_.1} parent=11 // pred_check
          %p575 = pneg %p413
        $region70: #{_lambda_.1} parent=11 // pred_check_branch
          %577 = sbr.rel (%p575) target = $region72
        $region71: #{_lambda_.1} parent=11 // pred_region
          _
        $region72: #{_lambda_.1} parent=11 // pred_fallthru
          _
        // Predicated region
        $region73: #{_lambda_.1} parent=11 // pred_check
          %p578 = pneg %p434
        $region74: #{_lambda_.1} parent=11 // pred_check_branch
          %580 = sbr.rel (%p578) target = $region76
        $region75: #{_lambda_.1} parent=11 // pred_region
          _
        $region76: #{_lambda_.1} parent=11 // pred_fallthru
          _
      $region12: #{_lambda_.1} parent=5 // pred_fallthru
        _
      %p581 = scmp.lt.s32.totalorder %s28, 2
      // Predicated region
      $region77: #{_lambda_.1} parent=5 // pred_check
        %p582 = pneg %p581
      $region78: #{_lambda_.1} parent=5 // pred_check_branch
        %584 = sbr.rel (%p582) target = $region80
      $region79: #{_lambda_.1} parent=5 // pred_region
        // Predicated region
        $region81: #{_lambda_.1} parent=79 // pred_check
          %p585 = pneg %p62
        $region82: #{_lambda_.1} parent=79 // pred_check_branch
          %587 = sbr.rel (%p585) target = $region84
        $region83: #{_lambda_.1} parent=79 // pred_region
          %s588 = smul.u32 2, %s36
          %p589 = scmp.lt.s32.totalorder %s35, 1
          %s590 = scalar_select %p589, %s35, 1
          %p591 = scmp.lt.s32.totalorder %s588, 3
          %s592 = scalar_select %p591, %s588, 3
          %s593 = smul.addr %s590, 4
          %s594 = sadd.s32 %s592, %s593
          %s595 = smul.addr %s594, 8
          %s596 = scalar_lea.vmem %s0, %s595
          %s597 = smul.u32 2, %s36
        $region84: #{_lambda_.1} parent=79 // pred_fallthru
          _
        // Predicated region
        $region85: #{_lambda_.1} parent=79 // pred_check
          %p598 = pneg %p92
        $region86: #{_lambda_.1} parent=79 // pred_check_branch
          %600 = sbr.rel (%p598) target = $region88
        $region87: #{_lambda_.1} parent=79 // pred_region
          %s601 = sadd.s32 %s36, 1
          %s602 = smul.u32 2, %s601
          %p603 = scmp.lt.s32.totalorder %s35, 1
          %s604 = scalar_select %p603, %s35, 1
          %p605 = scmp.lt.s32.totalorder %s602, 3
          %s606 = scalar_select %p605, %s602, 3
          %s607 = smul.addr %s604, 4
          %s608 = sadd.s32 %s606, %s607
          %s609 = smul.addr %s608, 8
          %s610 = scalar_lea.vmem %s1, %s609
          %s611 = sadd.s32 %s36, 1
          %s612 = smul.u32 2, %s611
        $region88: #{_lambda_.1} parent=79 // pred_fallthru
          _
      $region80: #{_lambda_.1} parent=5 // pred_fallthru
        _
      %p613 = scmp.le.s32.totalorder 1, %s28
      %p614 = scmp.lt.s32.totalorder %s28, 3
      %p615 = pnand %p613, %p614
      %p616 = pneg %p615
      // Predicated region
      $region89: #{_lambda_.1} parent=5 // pred_check
        _
      $region90: #{_lambda_.1} parent=5 // pred_check_branch
        %618 = sbr.rel (%p615) target = $region92
      $region91: #{_lambda_.1} parent=5 // pred_region
        %s619 = ssub.s32 %s28, 1
        // Predicated region
        $region93: #{_lambda_.1} parent=91 // pred_check
          %p620 = pneg %p119
        $region94: #{_lambda_.1} parent=91 // pred_check_branch
          %622 = sbr.rel (%p620) target = $region96
        $region95: #{_lambda_.1} parent=91 // pred_region
          %623 = dma.done [#allocation3], 384
        $region96: #{_lambda_.1} parent=91 // pred_fallthru
          _
        // Predicated region
        $region97: #{_lambda_.1} parent=91 // pred_check
          %p624 = pneg %p140
        $region98: #{_lambda_.1} parent=91 // pred_check_branch
          %626 = sbr.rel (%p624) target = $region100
        $region99: #{_lambda_.1} parent=91 // pred_region
          %627 = dma.done [#allocation5], 16
        $region100: #{_lambda_.1} parent=91 // pred_fallthru
          _
        // Predicated region
        $region101: #{_lambda_.1} parent=91 // pred_check
          %p628 = pneg %p161
        $region102: #{_lambda_.1} parent=91 // pred_check_branch
          %630 = sbr.rel (%p628) target = $region104
        $region103: #{_lambda_.1} parent=91 // pred_region
          %631 = dma.done [#allocation5], 384
        $region104: #{_lambda_.1} parent=91 // pred_fallthru
          _
        // Predicated region
        $region105: #{_lambda_.1} parent=91 // pred_check
          %p632 = pneg %p182
        $region106: #{_lambda_.1} parent=91 // pred_check_branch
          %634 = sbr.rel (%p632) target = $region108
        $region107: #{_lambda_.1} parent=91 // pred_region
          %635 = dma.done [#allocation8], 16
        $region108: #{_lambda_.1} parent=91 // pred_fallthru
          _
        // Predicated region
        $region109: #{_lambda_.1} parent=91 // pred_check
          %p636 = pneg %p203
        $region110: #{_lambda_.1} parent=91 // pred_check_branch
          %638 = sbr.rel (%p636) target = $region112
        $region111: #{_lambda_.1} parent=91 // pred_region
          %639 = dma.done [#allocation8], 384
        $region112: #{_lambda_.1} parent=91 // pred_fallthru
          _
        // Predicated region
        $region113: #{_lambda_.1} parent=91 // pred_check
          %p640 = pneg %p245
        $region114: #{_lambda_.1} parent=91 // pred_check_branch
          %642 = sbr.rel (%p640) target = $region116
        $region115: #{_lambda_.1} parent=91 // pred_region
          %643 = dma.done [#allocation11], 384
        $region116: #{_lambda_.1} parent=91 // pred_fallthru
          _
        %s644 = smul.u32 2, %s38
        %p645 = scmp.lt.s32.totalorder %s37, 1
        %s646 = scalar_select %p645, %s37, 1
        %p647 = scmp.lt.s32.totalorder %s644, 3
        %s648 = scalar_select %p647, %s644, 3
        %s649 = smul.addr %s646, 4
        %s650 = sadd.s32 %s648, %s649
        %s651 = smul.addr %s650, 8
        %s652 = scalar_lea.vmem %s0, %s651
        %p653 = pneg %p68
        %p654 = pneg %p65
        %s655 = sadd.s32 %s38, 1
        %s656 = smul.u32 2, %s655
        %p657 = scmp.lt.s32.totalorder %s37, 1
        %s658 = scalar_select %p657, %s37, 1
        %p659 = scmp.lt.s32.totalorder %s656, 3
        %s660 = scalar_select %p659, %s656, 3
        %s661 = smul.addr %s658, 4
        %s662 = sadd.s32 %s660, %s661
        %s663 = smul.addr %s662, 8
        %s664 = scalar_lea.vmem %s1, %s663
        %p665 = pneg %p98
        %p666 = pneg %p95
        %p667 = pneg %p119
        %p668 = pneg %p116
        %p669 = pneg %p140
        %p670 = pneg %p137
        %p671 = pneg %p161
        %p672 = pneg %p158
        %p673 = pneg %p182
        %p674 = pneg %p179
        %p675 = pneg %p203
        %p676 = pneg %p200
        %p677 = pneg %p224
        %p678 = pneg %p221
        %p679 = pneg %p245
        %p680 = pneg %p242
        %p681 = pneg %p266
        %p682 = pneg %p263
        %p683 = pneg %p287
        %p684 = pneg %p284
        %p685 = pneg %p308
        %p686 = pneg %p305
        %p687 = pneg %p329
        %p688 = pneg %p326
        %p689 = pneg %p350
        %p690 = pneg %p347
        %p691 = pneg %p371
        %p692 = pneg %p368
        %p693 = pneg %p392
        %p694 = pneg %p389
        %p695 = pneg %p413
        %p696 = pneg %p410
        %p697 = pneg %p434
        %p698 = pneg %p431
        %p699 = pneg %p462
        %p700 = pneg %p459
        %s701 = smul.u32 2, %s38
        %p702 = scmp.lt.s32.totalorder %s37, 1
        %s703 = scalar_select %p702, %s37, 1
        %p704 = scmp.lt.s32.totalorder %s701, 1
        %s705 = scalar_select %p704, %s701, 1
        %s706 = smul.addr %s703, 2
        %s707 = sadd.s32 %s705, %s706
        %s708 = smul.addr %s707, 8
        %s709 = scalar_lea.vmem %s18, %s708
        %s710 = smul.u32 2, %s38
        %p711 = scmp.lt.s32.totalorder %s37, 1
        %s712 = scalar_select %p711, %s37, 1
        %p713 = scmp.lt.s32.totalorder %s710, 3
        %s714 = scalar_select %p713, %s710, 3
        %s715 = smul.addr %s712, 4
        %s716 = sadd.s32 %s714, %s715
        %s717 = smul.addr %s716, 8
        %s718 = scalar_lea.vmem %s0, %s717
        %s719 = smul.u32 2, %s38
        %s720 = sadd.s32 %s38, 1
        %s721 = smul.u32 2, %s720
        %p722 = scmp.lt.s32.totalorder %s37, 1
        %s723 = scalar_select %p722, %s37, 1
        %p724 = scmp.lt.s32.totalorder %s721, 3
        %s725 = scalar_select %p724, %s721, 3
        %s726 = smul.addr %s723, 4
        %s727 = sadd.s32 %s725, %s726
        %s728 = smul.addr %s727, 8
        %s729 = scalar_lea.vmem %s1, %s728
        %s730 = sadd.s32 %s38, 1
        %s731 = smul.u32 2, %s730
        %s732 = smul.u32 2, %s38
        %p733 = scmp.lt.s32.totalorder %s37, 1
        %s734 = scalar_select %p733, %s37, 1
        %p735 = scmp.lt.s32.totalorder %s732, 1
        %s736 = scalar_select %p735, %s732, 1
        %s737 = smul.addr %s734, 2
        %s738 = sadd.s32 %s736, %s737
        %s739 = smul.addr %s738, 8
        %s740 = scalar_lea.vmem %s18, %s739
        %s741 = smul.u32 2, %s38
        %v742 = vld [vmem:[%s718] sm:$0xff]
        %v743 = vld [vmem:[%s718 + $0x8] sm:$0xff]
        %v744 = vld [vmem:[%s729] sm:$0xff]
        %v745 = vld [vmem:[%s729 + $0x8] sm:$0xff]
        %vm746 = vcmp.ge.f32.partialorder %v742, 0.0
        %vm747 = vcmp.ge.f32.partialorder %v743, 0.0
        %vm748 = vcmp.ge.f32.partialorder %v744, 0.0
        %vm749 = vcmp.ge.f32.partialorder %v745, 0.0
        %v750 = vmul.f32 %v742, 0.01
        %v751 = vmul.f32 %v743, 0.01
        %v752 = vmul.f32 %v744, 0.01
        %v753 = vmul.f32 %v745, 0.01
        %v754 = vsel %vm746, %v742, %v750
        %v755 = vsel %vm747, %v743, %v751
        %v756 = vsel %vm748, %v744, %v752
        %v757 = vsel %vm749, %v745, %v753
        %v758 = vld [vmem:[#allocation2] sm:$0xff]
        %s759 = scalar_lea.vmem [#allocation2], 8
        %v760 = vld [vmem:[%s759] sm:$0xff]
        %vm765 = vcmask 1040384
        %v766 = vrot.slane %v754, 7
        %v767 = vrot.slane %v755, 7
        %v768 = vsel %vm765, %v766, %v767
        %v769 = vrot.slane %v756, 7
        %v770 = vsel %vm765, %v767, %v769
        %v771 = vrot.slane %v757, 7
        %v772 = vsel %vm765, %v769, %v771
        %vm773 = vcmask 64512
        %v774 = vsel %vm773, %v768, 0
        %v776 = vsel %vm773, %v770, 0
        %v778 = vsel %vm773, %v772, 0
        %780 = vmatprep.subr.mxu0 0.0
        %781 = vmatpush1.msra.mxu0 %v760
        %782 = vmatprep.subr.mxu0 0.0
        %783 = vmatpush1.msra.mxu0 0.0
        %784 = vmatprep.subr.mxu0 0.0
        %785 = vmatpush1.msra.mxu0 0.0
        %786 = vmatprep.subr.mxu0 0.0
        %787 = vmatpush1.msra.mxu0 0.0
        %788 = vmatprep.subr.mxu0 0.0
        %789 = vmatpush1.msra.mxu0 0.0
        %790 = vmatprep.subr.mxu0 0.0
        %791 = vmatpush1.msra.mxu0 0.0
        %792 = vmatprep.subr.mxu0 0.0
        %793 = vmatpush1.msra.mxu0 0.0
        %794 = vmatprep.subr.mxu0 0.0
        %795 = vmatpush1.msra.mxu0 0.0
        %796 = vmatprep.subr.mxu0 0.0
        %797 = vmatpush1.msra.mxu0 0.0
        %798 = vmatprep.subr.mxu0 0.0
        %799 = vmatpush1.msra.mxu0 0.0
        %800 = vmatprep.subr.mxu0 0.0
        %801 = vmatpush1.msra.mxu0 0.0
        %802 = vmatprep.subr.mxu0 0.0
        %803 = vmatpush1.msra.mxu0 0.0
        %804 = vmatprep.subr.mxu0 0.0
        %805 = vmatpush1.msra.mxu0 0.0
        %806 = vmatprep.subr.mxu0 0.0
        %807 = vmatpush1.msra.mxu0 0.0
        %808 = vmatprep.subr.mxu0 0.0
        %809 = vmatpush1.msra.mxu0 0.0
        %810 = vmatprep.subr.mxu0 0.0
        %811 = vmatpush1.msra.mxu0 0.0
        %812 = vmatprep.subr.mxu0 0.0
        %813 = vmatpush1.msra.mxu0 0.0
        %814 = vmatprep.subr.mxu0 0.0
        %815 = vmatpush1.msra.mxu0 0.0
        %816 = vmatprep.subr.mxu0 0.0
        %817 = vmatpush1.msra.mxu0 0.0
        %818 = vmatprep.subr.mxu0 0.0
        %819 = vmatpush1.msra.mxu0 0.0
        %820 = vmatprep.subr.mxu0 0.0
        %821 = vmatpush1.msra.mxu0 0.0
        %822 = vmatprep.subr.mxu0 0.0
        %823 = vmatpush1.msra.mxu0 0.0
        %824 = vmatprep.subr.mxu0 0.0
        %825 = vmatpush1.msra.mxu0 0.0
        %826 = vmatprep.subr.mxu0 0.0
        %827 = vmatpush1.msra.mxu0 0.0
        %828 = vmatprep.subr.mxu0 0.0
        %829 = vmatpush1.msra.mxu0 0.0
        %830 = vmatprep.subr.mxu0 0.0
        %831 = vmatpush1.msra.mxu0 0.0
        %832 = vmatprep.subr.mxu0 0.0
        %833 = vmatpush1.msra.mxu0 0.0
        %834 = vmatprep.subr.mxu0 0.0
        %835 = vmatpush1.msra.mxu0 0.0
        %836 = vmatprep.subr.mxu0 0.0
        %837 = vmatpush1.msra.mxu0 0.0
        %838 = vmatprep.subr.mxu0 0.0
        %839 = vmatpush1.msra.mxu0 0.0
        %840 = vmatprep.subr.mxu0 0.0
        %841 = vmatpush1.msra.mxu0 0.0
        %842 = vmatprep.subr.mxu0 0.0
        %843 = vmatpush1.msra.mxu0 0.0
        %844 = vmatprep.mubr.f32.mxu0 0.0
        %845 = vmatmul.mubr.f32.gmra.mrb[0].mxu0 %v774
        %v846 = vpop.f32.mrb[0].mxu0
        %v847 = vadd.f32 0.0, %v846
        %v848 = vpop.f32.mrb[0].mxu0
        %849 = vmatprep.mubr.f32.mxu0 0.0
        %850 = vmatmul.mubr.f32.gmra.mrb[0].mxu0 %v776
        %v851 = vpop.f32.mrb[0].mxu0
        %v852 = vadd.f32 0.0, %v851
        %v853 = vpop.f32.mrb[0].mxu0
        %854 = vmatprep.mubr.f32.mxu0 0.0
        %855 = vmatmul.mubr.f32.gmra.mrb[0].mxu0 %v778
        %v856 = vpop.f32.mrb[0].mxu0
        %v857 = vadd.f32 0.0, %v856
        %v858 = vpop.f32.mrb[0].mxu0
        %859 = vdwg.mxu0
        %vm860 = vcmask 1041408
        %v861 = vrot.slane %v754, 6
        %v862 = vrot.slane %v755, 6
        %v863 = vsel %vm860, %v861, %v862
        %v864 = vrot.slane %v756, 6
        %v865 = vsel %vm860, %v862, %v864
        %v866 = vsel %vm773, %v863, 0
        %v868 = vsel %vm773, %v865, 0
        %v870 = vsel %vm773, %v864, 0
        %872 = vmatprep.subr.mxu0 0.0
        %873 = vmatpush1.msra.mxu0 %v758
        %874 = vmatprep.subr.mxu0 0.0
        %875 = vmatpush1.msra.mxu0 0.0
        %876 = vmatprep.subr.mxu0 0.0
        %877 = vmatpush1.msra.mxu0 0.0
        %878 = vmatprep.subr.mxu0 0.0
        %879 = vmatpush1.msra.mxu0 0.0
        %880 = vmatprep.subr.mxu0 0.0
        %881 = vmatpush1.msra.mxu0 0.0
        %882 = vmatprep.subr.mxu0 0.0
        %883 = vmatpush1.msra.mxu0 0.0
        %884 = vmatprep.subr.mxu0 0.0
        %885 = vmatpush1.msra.mxu0 0.0
        %886 = vmatprep.subr.mxu0 0.0
        %887 = vmatpush1.msra.mxu0 0.0
        %888 = vmatprep.subr.mxu0 0.0
        %889 = vmatpush1.msra.mxu0 0.0
        %890 = vmatprep.subr.mxu0 0.0
        %891 = vmatpush1.msra.mxu0 0.0
        %892 = vmatprep.subr.mxu0 0.0
        %893 = vmatpush1.msra.mxu0 0.0
        %894 = vmatprep.subr.mxu0 0.0
        %895 = vmatpush1.msra.mxu0 0.0
        %896 = vmatprep.subr.mxu0 0.0
        %897 = vmatpush1.msra.mxu0 0.0
        %898 = vmatprep.subr.mxu0 0.0
        %899 = vmatpush1.msra.mxu0 0.0
        %900 = vmatprep.subr.mxu0 0.0
        %901 = vmatpush1.msra.mxu0 0.0
        %902 = vmatprep.subr.mxu0 0.0
        %903 = vmatpush1.msra.mxu0 0.0
        %904 = vmatprep.subr.mxu0 0.0
        %905 = vmatpush1.msra.mxu0 0.0
        %906 = vmatprep.subr.mxu0 0.0
        %907 = vmatpush1.msra.mxu0 0.0
        %908 = vmatprep.subr.mxu0 0.0
        %909 = vmatpush1.msra.mxu0 0.0
        %910 = vmatprep.subr.mxu0 0.0
        %911 = vmatpush1.msra.mxu0 0.0
        %912 = vmatprep.subr.mxu0 0.0
        %913 = vmatpush1.msra.mxu0 0.0
        %914 = vmatprep.subr.mxu0 0.0
        %915 = vmatpush1.msra.mxu0 0.0
        %916 = vmatprep.subr.mxu0 0.0
        %917 = vmatpush1.msra.mxu0 0.0
        %918 = vmatprep.subr.mxu0 0.0
        %919 = vmatpush1.msra.mxu0 0.0
        %920 = vmatprep.subr.mxu0 0.0
        %921 = vmatpush1.msra.mxu0 0.0
        %922 = vmatprep.subr.mxu0 0.0
        %923 = vmatpush1.msra.mxu0 0.0
        %924 = vmatprep.subr.mxu0 0.0
        %925 = vmatpush1.msra.mxu0 0.0
        %926 = vmatprep.subr.mxu0 0.0
        %927 = vmatpush1.msra.mxu0 0.0
        %928 = vmatprep.subr.mxu0 0.0
        %929 = vmatpush1.msra.mxu0 0.0
        %930 = vmatprep.subr.mxu0 0.0
        %931 = vmatpush1.msra.mxu0 0.0
        %932 = vmatprep.subr.mxu0 0.0
        %933 = vmatpush1.msra.mxu0 0.0
        %934 = vmatprep.subr.mxu0 0.0
        %935 = vmatpush1.msra.mxu0 0.0
        %936 = vmatprep.mubr.f32.mxu0 0.0
        %937 = vmatmul.mubr.f32.gmra.mrb[0].mxu0 %v866
        %v938 = vpop.f32.mrb[0].mxu0
        %v939 = vadd.f32 %v847, %v938
        %v940 = vpop.f32.mrb[0].mxu0
        %941 = vmatprep.mubr.f32.mxu0 0.0
        %942 = vmatmul.mubr.f32.gmra.mrb[0].mxu0 %v868
        %v943 = vpop.f32.mrb[0].mxu0
        %v944 = vadd.f32 %v852, %v943
        %v945 = vpop.f32.mrb[0].mxu0
        %946 = vmatprep.mubr.f32.mxu0 0.0
        %947 = vmatmul.mubr.f32.gmra.mrb[0].mxu0 %v870
        %v948 = vpop.f32.mrb[0].mxu0
        %v949 = vadd.f32 %v857, %v948
        %v950 = vpop.f32.mrb[0].mxu0
        %951 = vdwg.mxu0
        %s952 = scalar_lea.vmem [#allocation2], 16
        %v953 = vld [vmem:[%s952] sm:$0xff]
        %v954 = vsel %vm773, %v755, 0
        %v956 = vsel %vm773, %v756, 0
        %v958 = vsel %vm773, %v757, 0
        %960 = vmatprep.subr.mxu0 0.0
        %961 = vmatpush1.msra.mxu0 %v953
        %962 = vmatprep.subr.mxu0 0.0
        %963 = vmatpush1.msra.mxu0 0.0
        %964 = vmatprep.subr.mxu0 0.0
        %965 = vmatpush1.msra.mxu0 0.0
        %966 = vmatprep.subr.mxu0 0.0
        %967 = vmatpush1.msra.mxu0 0.0
        %968 = vmatprep.subr.mxu0 0.0
        %969 = vmatpush1.msra.mxu0 0.0
        %970 = vmatprep.subr.mxu0 0.0
        %971 = vmatpush1.msra.mxu0 0.0
        %972 = vmatprep.subr.mxu0 0.0
        %973 = vmatpush1.msra.mxu0 0.0
        %974 = vmatprep.subr.mxu0 0.0
        %975 = vmatpush1.msra.mxu0 0.0
        %976 = vmatprep.subr.mxu0 0.0
        %977 = vmatpush1.msra.mxu0 0.0
        %978 = vmatprep.subr.mxu0 0.0
        %979 = vmatpush1.msra.mxu0 0.0
        %980 = vmatprep.subr.mxu0 0.0
        %981 = vmatpush1.msra.mxu0 0.0
        %982 = vmatprep.subr.mxu0 0.0
        %983 = vmatpush1.msra.mxu0 0.0
        %984 = vmatprep.subr.mxu0 0.0
        %985 = vmatpush1.msra.mxu0 0.0
        %986 = vmatprep.subr.mxu0 0.0
        %987 = vmatpush1.msra.mxu0 0.0
        %988 = vmatprep.subr.mxu0 0.0
        %989 = vmatpush1.msra.mxu0 0.0
        %990 = vmatprep.subr.mxu0 0.0
        %991 = vmatpush1.msra.mxu0 0.0
        %992 = vmatprep.subr.mxu0 0.0
        %993 = vmatpush1.msra.mxu0 0.0
        %994 = vmatprep.subr.mxu0 0.0
        %995 = vmatpush1.msra.mxu0 0.0
        %996 = vmatprep.subr.mxu0 0.0
        %997 = vmatpush1.msra.mxu0 0.0
        %998 = vmatprep.subr.mxu0 0.0
        %999 = vmatpush1.msra.mxu0 0.0
        %1000 = vmatprep.subr.mxu0 0.0
        %1001 = vmatpush1.msra.mxu0 0.0
        %1002 = vmatprep.subr.mxu0 0.0
        %1003 = vmatpush1.msra.mxu0 0.0
        %1004 = vmatprep.subr.mxu0 0.0
        %1005 = vmatpush1.msra.mxu0 0.0
        %1006 = vmatprep.subr.mxu0 0.0
        %1007 = vmatpush1.msra.mxu0 0.0
        %1008 = vmatprep.subr.mxu0 0.0
        %1009 = vmatpush1.msra.mxu0 0.0
        %1010 = vmatprep.subr.mxu0 0.0
        %1011 = vmatpush1.msra.mxu0 0.0
        %1012 = vmatprep.subr.mxu0 0.0
        %1013 = vmatpush1.msra.mxu0 0.0
        %1014 = vmatprep.subr.mxu0 0.0
        %1015 = vmatpush1.msra.mxu0 0.0
        %1016 = vmatprep.subr.mxu0 0.0
        %1017 = vmatpush1.msra.mxu0 0.0
        %1018 = vmatprep.subr.mxu0 0.0
        %1019 = vmatpush1.msra.mxu0 0.0
        %1020 = vmatprep.subr.mxu0 0.0
        %1021 = vmatpush1.msra.mxu0 0.0
        %1022 = vmatprep.subr.mxu0 0.0
        %1023 = vmatpush1.msra.mxu0 0.0
        %1024 = vmatprep.mubr.f32.mxu0 0.0
        %1025 = vmatmul.mubr.f32.gmra.mrb[0].mxu0 %v954
        %v1026 = vpop.f32.mrb[0].mxu0
        %v1027 = vadd.f32 0.0, %v1026
        %v1028 = vpop.f32.mrb[0].mxu0
        %1029 = vmatprep.mubr.f32.mxu0 0.0
        %1030 = vmatmul.mubr.f32.gmra.mrb[0].mxu0 %v956
        %v1031 = vpop.f32.mrb[0].mxu0
        %v1032 = vadd.f32 0.0, %v1031
        %v1033 = vpop.f32.mrb[0].mxu0
        %1034 = vmatprep.mubr.f32.mxu0 0.0
        %1035 = vmatmul.mubr.f32.gmra.mrb[0].mxu0 %v958
        %v1036 = vpop.f32.mrb[0].mxu0
        %v1037 = vadd.f32 0.0, %v1036
        %v1038 = vpop.f32.mrb[0].mxu0
        %1039 = vdwg.mxu0
        %v1040 = vadd.f32 %v939, %v1027
        %v1041 = vadd.f32 %v944, %v1032
        %v1042 = vadd.f32 %v949, %v1037
        %v1043 = vld [vmem:[#allocation4] sm:$0x1]
        %v1045 = vlaneseq
        %v1046 = vshrl.u32 %v1045, 7
        %v1047 = vsub.s32 0, %v1046
        %v1048 = vrot.slane %v1043, %v1047
        %v1050 = vadd.f32 %v1040, %v1048
        %v1051 = vadd.f32 %v1041, %v1048
        %v1052 = vadd.f32 %v1042, %v1048
        %vm1053 = vcmp.ge.f32.partialorder %v1050, 0.0
        %vm1054 = vcmp.ge.f32.partialorder %v1051, 0.0
        %vm1055 = vcmp.ge.f32.partialorder %v1052, 0.0
        %v1056 = vmul.f32 %v1050, 0.01
        %v1057 = vmul.f32 %v1051, 0.01
        %v1058 = vmul.f32 %v1052, 0.01
        %v1059 = vsel %vm1053, %v1050, %v1056
        %v1060 = vsel %vm1054, %v1051, %v1057
        %v1061 = vsel %vm1055, %v1052, %v1058
        %s1062 = smul.u32 %s38, 16
        %v1063 = vlaneseq
        %v1064 = vshrl.u32 %v1063, 7
        %v1065 = vadd.s32 %v1064, 8
        %v1066 = vadd.s32 %v1064, 16
        %v1067 = vstv %s1062
        %v1068 = vadd.s32 %v1067, %v1064
        %v1069 = vadd.s32 %v1067, %v1065
        %v1070 = vadd.s32 %v1067, %v1066
        %v1071 = vsub.s32 %v1068, 1
        %v1072 = vsub.s32 %v1069, 1
        %v1073 = vsub.s32 %v1070, 1
        %vm1074 = vcmp.ge.s32.totalorder %v1071, 0
        %vm1075 = vcmp.ge.s32.totalorder %v1072, 0
        %vm1076 = vcmp.ge.s32.totalorder %v1073, 0
        %vm1077 = vcmp.lt.s32.totalorder %v1071, 16
        %vm1078 = vcmp.lt.s32.totalorder %v1072, 16
        %vm1079 = vcmp.lt.s32.totalorder %v1073, 16
        %vm1080 = vmand %vm1074, %vm1077
        %vm1081 = vmand %vm1075, %vm1078
        %vm1082 = vmand %vm1076, %vm1079
        %v1083 = vsel %vm1080, 1, 0
        %v1084 = vsel %vm1081, 1, 0
        %v1085 = vsel %vm1082, 1, 0
        %vm1086 = vcmp.eq.s32.totalorder %v1083, 1
        %vm1087 = vcmp.eq.s32.totalorder %v1084, 1
        %vm1088 = vcmp.eq.s32.totalorder %v1085, 1
        %v1089 = vsel %vm1086, %v1059, 0.0
        %v1090 = vsel %vm1087, %v1060, 0.0
        %v1091 = vsel %vm1088, %v1061, 0.0
        %v1092 = vld [vmem:[#allocation6] sm:$0xff]
        %s1093 = scalar_lea.vmem [#allocation6], 8
        %v1094 = vld [vmem:[%s1093] sm:$0xff]
        %vm1098 = vcmask 1046528
        %v1099 = vrot.slane %v1089, 1
        %v1100 = vrot.slane %v1090, 1
        %v1101 = vsel %vm1098, %v1099, %v1100
        %v1102 = vrot.slane %v1091, 1
        %v1103 = vsel %vm1098, %v1100, %v1102
        %v1104 = vsel %vm773, %v1101, 0
        %v1106 = vsel %vm773, %v1103, 0
        %1108 = vmatprep.subr.mxu0 0.0
        %1109 = vmatpush1.msra.mxu0 %v1094
        %1110 = vmatprep.subr.mxu0 0.0
        %1111 = vmatpush1.msra.mxu0 0.0
        %1112 = vmatprep.subr.mxu0 0.0
        %1113 = vmatpush1.msra.mxu0 0.0
        %1114 = vmatprep.subr.mxu0 0.0
        %1115 = vmatpush1.msra.mxu0 0.0
        %1116 = vmatprep.subr.mxu0 0.0
        %1117 = vmatpush1.msra.mxu0 0.0
        %1118 = vmatprep.subr.mxu0 0.0
        %1119 = vmatpush1.msra.mxu0 0.0
        %1120 = vmatprep.subr.mxu0 0.0
        %1121 = vmatpush1.msra.mxu0 0.0
        %1122 = vmatprep.subr.mxu0 0.0
        %1123 = vmatpush1.msra.mxu0 0.0
        %1124 = vmatprep.subr.mxu0 0.0
        %1125 = vmatpush1.msra.mxu0 0.0
        %1126 = vmatprep.subr.mxu0 0.0
        %1127 = vmatpush1.msra.mxu0 0.0
        %1128 = vmatprep.subr.mxu0 0.0
        %1129 = vmatpush1.msra.mxu0 0.0
        %1130 = vmatprep.subr.mxu0 0.0
        %1131 = vmatpush1.msra.mxu0 0.0
        %1132 = vmatprep.subr.mxu0 0.0
        %1133 = vmatpush1.msra.mxu0 0.0
        %1134 = vmatprep.subr.mxu0 0.0
        %1135 = vmatpush1.msra.mxu0 0.0
        %1136 = vmatprep.subr.mxu0 0.0
        %1137 = vmatpush1.msra.mxu0 0.0
        %1138 = vmatprep.subr.mxu0 0.0
        %1139 = vmatpush1.msra.mxu0 0.0
        %1140 = vmatprep.subr.mxu0 0.0
        %1141 = vmatpush1.msra.mxu0 0.0
        %1142 = vmatprep.subr.mxu0 0.0
        %1143 = vmatpush1.msra.mxu0 0.0
        %1144 = vmatprep.subr.mxu0 0.0
        %1145 = vmatpush1.msra.mxu0 0.0
        %1146 = vmatprep.subr.mxu0 0.0
        %1147 = vmatpush1.msra.mxu0 0.0
        %1148 = vmatprep.subr.mxu0 0.0
        %1149 = vmatpush1.msra.mxu0 0.0
        %1150 = vmatprep.subr.mxu0 0.0
        %1151 = vmatpush1.msra.mxu0 0.0
        %1152 = vmatprep.subr.mxu0 0.0
        %1153 = vmatpush1.msra.mxu0 0.0
        %1154 = vmatprep.subr.mxu0 0.0
        %1155 = vmatpush1.msra.mxu0 0.0
        %1156 = vmatprep.subr.mxu0 0.0
        %1157 = vmatpush1.msra.mxu0 0.0
        %1158 = vmatprep.subr.mxu0 0.0
        %1159 = vmatpush1.msra.mxu0 0.0
        %1160 = vmatprep.subr.mxu0 0.0
        %1161 = vmatpush1.msra.mxu0 0.0
        %1162 = vmatprep.subr.mxu0 0.0
        %1163 = vmatpush1.msra.mxu0 0.0
        %1164 = vmatprep.subr.mxu0 0.0
        %1165 = vmatpush1.msra.mxu0 0.0
        %1166 = vmatprep.subr.mxu0 0.0
        %1167 = vmatpush1.msra.mxu0 0.0
        %1168 = vmatprep.subr.mxu0 0.0
        %1169 = vmatpush1.msra.mxu0 0.0
        %1170 = vmatprep.subr.mxu0 0.0
        %1171 = vmatpush1.msra.mxu0 0.0
        %1172 = vmatprep.mubr.f32.mxu0 0.0
        %1173 = vmatmul.mubr.f32.gmra.mrb[0].mxu0 %v1104
        %v1174 = vpop.f32.mrb[0].mxu0
        %v1175 = vadd.f32 0.0, %v1174
        %v1176 = vpop.f32.mrb[0].mxu0
        %1177 = vmatprep.mubr.f32.mxu0 0.0
        %1178 = vmatmul.mubr.f32.gmra.mrb[0].mxu0 %v1106
        %v1179 = vpop.f32.mrb[0].mxu0
        %v1180 = vadd.f32 0.0, %v1179
        %v1181 = vpop.f32.mrb[0].mxu0
        %1182 = vdwg.mxu0
        %v1183 = vsel %vm773, %v1089, 0
        %v1185 = vsel %vm773, %v1090, 0
        %1187 = vmatprep.subr.mxu0 0.0
        %1188 = vmatpush1.msra.mxu0 %v1092
        %1189 = vmatprep.subr.mxu0 0.0
        %1190 = vmatpush1.msra.mxu0 0.0
        %1191 = vmatprep.subr.mxu0 0.0
        %1192 = vmatpush1.msra.mxu0 0.0
        %1193 = vmatprep.subr.mxu0 0.0
        %1194 = vmatpush1.msra.mxu0 0.0
        %1195 = vmatprep.subr.mxu0 0.0
        %1196 = vmatpush1.msra.mxu0 0.0
        %1197 = vmatprep.subr.mxu0 0.0
        %1198 = vmatpush1.msra.mxu0 0.0
        %1199 = vmatprep.subr.mxu0 0.0
        %1200 = vmatpush1.msra.mxu0 0.0
        %1201 = vmatprep.subr.mxu0 0.0
        %1202 = vmatpush1.msra.mxu0 0.0
        %1203 = vmatprep.subr.mxu0 0.0
        %1204 = vmatpush1.msra.mxu0 0.0
        %1205 = vmatprep.subr.mxu0 0.0
        %1206 = vmatpush1.msra.mxu0 0.0
        %1207 = vmatprep.subr.mxu0 0.0
        %1208 = vmatpush1.msra.mxu0 0.0
        %1209 = vmatprep.subr.mxu0 0.0
        %1210 = vmatpush1.msra.mxu0 0.0
        %1211 = vmatprep.subr.mxu0 0.0
        %1212 = vmatpush1.msra.mxu0 0.0
        %1213 = vmatprep.subr.mxu0 0.0
        %1214 = vmatpush1.msra.mxu0 0.0
        %1215 = vmatprep.subr.mxu0 0.0
        %1216 = vmatpush1.msra.mxu0 0.0
        %1217 = vmatprep.subr.mxu0 0.0
        %1218 = vmatpush1.msra.mxu0 0.0
        %1219 = vmatprep.subr.mxu0 0.0
        %1220 = vmatpush1.msra.mxu0 0.0
        %1221 = vmatprep.subr.mxu0 0.0
        %1222 = vmatpush1.msra.mxu0 0.0
        %1223 = vmatprep.subr.mxu0 0.0
        %1224 = vmatpush1.msra.mxu0 0.0
        %1225 = vmatprep.subr.mxu0 0.0
        %1226 = vmatpush1.msra.mxu0 0.0
        %1227 = vmatprep.subr.mxu0 0.0
        %1228 = vmatpush1.msra.mxu0 0.0
        %1229 = vmatprep.subr.mxu0 0.0
        %1230 = vmatpush1.msra.mxu0 0.0
        %1231 = vmatprep.subr.mxu0 0.0
        %1232 = vmatpush1.msra.mxu0 0.0
        %1233 = vmatprep.subr.mxu0 0.0
        %1234 = vmatpush1.msra.mxu0 0.0
        %1235 = vmatprep.subr.mxu0 0.0
        %1236 = vmatpush1.msra.mxu0 0.0
        %1237 = vmatprep.subr.mxu0 0.0
        %1238 = vmatpush1.msra.mxu0 0.0
        %1239 = vmatprep.subr.mxu0 0.0
        %1240 = vmatpush1.msra.mxu0 0.0
        %1241 = vmatprep.subr.mxu0 0.0
        %1242 = vmatpush1.msra.mxu0 0.0
        %1243 = vmatprep.subr.mxu0 0.0
        %1244 = vmatpush1.msra.mxu0 0.0
        %1245 = vmatprep.subr.mxu0 0.0
        %1246 = vmatpush1.msra.mxu0 0.0
        %1247 = vmatprep.subr.mxu0 0.0
        %1248 = vmatpush1.msra.mxu0 0.0
        %1249 = vmatprep.subr.mxu0 0.0
        %1250 = vmatpush1.msra.mxu0 0.0
        %1251 = vmatprep.mubr.f32.mxu0 0.0
        %1252 = vmatmul.mubr.f32.gmra.mrb[0].mxu0 %v1183
        %v1253 = vpop.f32.mrb[0].mxu0
        %v1254 = vadd.f32 %v1175, %v1253
        %v1255 = vpop.f32.mrb[0].mxu0
        %1256 = vmatprep.mubr.f32.mxu0 0.0
        %1257 = vmatmul.mubr.f32.gmra.mrb[0].mxu0 %v1185
        %v1258 = vpop.f32.mrb[0].mxu0
        %v1259 = vadd.f32 %v1180, %v1258
        %v1260 = vpop.f32.mrb[0].mxu0
        %1261 = vdwg.mxu0
        %s1262 = scalar_lea.vmem [#allocation6], 16
        %v1263 = vld [vmem:[%s1262] sm:$0xff]
        %vm1264 = vcmask 1045504
        %v1265 = vrot.slane %v1089, 2
        %v1266 = vrot.slane %v1090, 2
        %v1267 = vsel %vm1264, %v1265, %v1266
        %v1268 = vrot.slane %v1091, 2
        %v1269 = vsel %vm1264, %v1266, %v1268
        %v1270 = vsel %vm773, %v1267, 0
        %v1272 = vsel %vm773, %v1269, 0
        %1274 = vmatprep.subr.mxu0 0.0
        %1275 = vmatpush1.msra.mxu0 %v1263
        %1276 = vmatprep.subr.mxu0 0.0
        %1277 = vmatpush1.msra.mxu0 0.0
        %1278 = vmatprep.subr.mxu0 0.0
        %1279 = vmatpush1.msra.mxu0 0.0
        %1280 = vmatprep.subr.mxu0 0.0
        %1281 = vmatpush1.msra.mxu0 0.0
        %1282 = vmatprep.subr.mxu0 0.0
        %1283 = vmatpush1.msra.mxu0 0.0
        %1284 = vmatprep.subr.mxu0 0.0
        %1285 = vmatpush1.msra.mxu0 0.0
        %1286 = vmatprep.subr.mxu0 0.0
        %1287 = vmatpush1.msra.mxu0 0.0
        %1288 = vmatprep.subr.mxu0 0.0
        %1289 = vmatpush1.msra.mxu0 0.0
        %1290 = vmatprep.subr.mxu0 0.0
        %1291 = vmatpush1.msra.mxu0 0.0
        %1292 = vmatprep.subr.mxu0 0.0
        %1293 = vmatpush1.msra.mxu0 0.0
        %1294 = vmatprep.subr.mxu0 0.0
        %1295 = vmatpush1.msra.mxu0 0.0
        %1296 = vmatprep.subr.mxu0 0.0
        %1297 = vmatpush1.msra.mxu0 0.0
        %1298 = vmatprep.subr.mxu0 0.0
        %1299 = vmatpush1.msra.mxu0 0.0
        %1300 = vmatprep.subr.mxu0 0.0
        %1301 = vmatpush1.msra.mxu0 0.0
        %1302 = vmatprep.subr.mxu0 0.0
        %1303 = vmatpush1.msra.mxu0 0.0
        %1304 = vmatprep.subr.mxu0 0.0
        %1305 = vmatpush1.msra.mxu0 0.0
        %1306 = vmatprep.subr.mxu0 0.0
        %1307 = vmatpush1.msra.mxu0 0.0
        %1308 = vmatprep.subr.mxu0 0.0
        %1309 = vmatpush1.msra.mxu0 0.0
        %1310 = vmatprep.subr.mxu0 0.0
        %1311 = vmatpush1.msra.mxu0 0.0
        %1312 = vmatprep.subr.mxu0 0.0
        %1313 = vmatpush1.msra.mxu0 0.0
        %1314 = vmatprep.subr.mxu0 0.0
        %1315 = vmatpush1.msra.mxu0 0.0
        %1316 = vmatprep.subr.mxu0 0.0
        %1317 = vmatpush1.msra.mxu0 0.0
        %1318 = vmatprep.subr.mxu0 0.0
        %1319 = vmatpush1.msra.mxu0 0.0
        %1320 = vmatprep.subr.mxu0 0.0
        %1321 = vmatpush1.msra.mxu0 0.0
        %1322 = vmatprep.subr.mxu0 0.0
        %1323 = vmatpush1.msra.mxu0 0.0
        %1324 = vmatprep.subr.mxu0 0.0
        %1325 = vmatpush1.msra.mxu0 0.0
        %1326 = vmatprep.subr.mxu0 0.0
        %1327 = vmatpush1.msra.mxu0 0.0
        %1328 = vmatprep.subr.mxu0 0.0
        %1329 = vmatpush1.msra.mxu0 0.0
        %1330 = vmatprep.subr.mxu0 0.0
        %1331 = vmatpush1.msra.mxu0 0.0
        %1332 = vmatprep.subr.mxu0 0.0
        %1333 = vmatpush1.msra.mxu0 0.0
        %1334 = vmatprep.subr.mxu0 0.0
        %1335 = vmatpush1.msra.mxu0 0.0
        %1336 = vmatprep.subr.mxu0 0.0
        %1337 = vmatpush1.msra.mxu0 0.0
        %1338 = vmatprep.mubr.f32.mxu0 0.0
        %1339 = vmatmul.mubr.f32.gmra.mrb[0].mxu0 %v1270
        %v1340 = vpop.f32.mrb[0].mxu0
        %v1341 = vadd.f32 0.0, %v1340
        %v1342 = vpop.f32.mrb[0].mxu0
        %1343 = vmatprep.mubr.f32.mxu0 0.0
        %1344 = vmatmul.mubr.f32.gmra.mrb[0].mxu0 %v1272
        %v1345 = vpop.f32.mrb[0].mxu0
        %v1346 = vadd.f32 0.0, %v1345
        %v1347 = vpop.f32.mrb[0].mxu0
        %1348 = vdwg.mxu0
        %v1349 = vadd.f32 %v1254, %v1341
        %v1350 = vadd.f32 %v1259, %v1346
        %v1351 = vld [vmem:[#allocation7] sm:$0x1]
        %v1353 = vlaneseq
        %v1354 = vshrl.u32 %v1353, 7
        %v1355 = vsub.s32 0, %v1354
        %v1356 = vrot.slane %v1351, %v1355
        %v1358 = vadd.f32 %v1349, %v1356
        %v1359 = vadd.f32 %v1350, %v1356
        %v1360 = vld [vmem:[#allocation9] sm:$0xff]
        %s1361 = scalar_lea.vmem [#allocation9], 8
        %v1362 = vld [vmem:[%s1361] sm:$0xff]
        %1363 = vmatprep.subr.mxu0 0.0
        %1364 = vmatpush1.msra.mxu0 %v1362
        %1365 = vmatprep.subr.mxu0 0.0
        %1366 = vmatpush1.msra.mxu0 0.0
        %1367 = vmatprep.subr.mxu0 0.0
        %1368 = vmatpush1.msra.mxu0 0.0
        %1369 = vmatprep.subr.mxu0 0.0
        %1370 = vmatpush1.msra.mxu0 0.0
        %1371 = vmatprep.subr.mxu0 0.0
        %1372 = vmatpush1.msra.mxu0 0.0
        %1373 = vmatprep.subr.mxu0 0.0
        %1374 = vmatpush1.msra.mxu0 0.0
        %1375 = vmatprep.subr.mxu0 0.0
        %1376 = vmatpush1.msra.mxu0 0.0
        %1377 = vmatprep.subr.mxu0 0.0
        %1378 = vmatpush1.msra.mxu0 0.0
        %1379 = vmatprep.subr.mxu0 0.0
        %1380 = vmatpush1.msra.mxu0 0.0
        %1381 = vmatprep.subr.mxu0 0.0
        %1382 = vmatpush1.msra.mxu0 0.0
        %1383 = vmatprep.subr.mxu0 0.0
        %1384 = vmatpush1.msra.mxu0 0.0
        %1385 = vmatprep.subr.mxu0 0.0
        %1386 = vmatpush1.msra.mxu0 0.0
        %1387 = vmatprep.subr.mxu0 0.0
        %1388 = vmatpush1.msra.mxu0 0.0
        %1389 = vmatprep.subr.mxu0 0.0
        %1390 = vmatpush1.msra.mxu0 0.0
        %1391 = vmatprep.subr.mxu0 0.0
        %1392 = vmatpush1.msra.mxu0 0.0
        %1393 = vmatprep.subr.mxu0 0.0
        %1394 = vmatpush1.msra.mxu0 0.0
        %1395 = vmatprep.subr.mxu0 0.0
        %1396 = vmatpush1.msra.mxu0 0.0
        %1397 = vmatprep.subr.mxu0 0.0
        %1398 = vmatpush1.msra.mxu0 0.0
        %1399 = vmatprep.subr.mxu0 0.0
        %1400 = vmatpush1.msra.mxu0 0.0
        %1401 = vmatprep.subr.mxu0 0.0
        %1402 = vmatpush1.msra.mxu0 0.0
        %1403 = vmatprep.subr.mxu0 0.0
        %1404 = vmatpush1.msra.mxu0 0.0
        %1405 = vmatprep.subr.mxu0 0.0
        %1406 = vmatpush1.msra.mxu0 0.0
        %1407 = vmatprep.subr.mxu0 0.0
        %1408 = vmatpush1.msra.mxu0 0.0
        %1409 = vmatprep.subr.mxu0 0.0
        %1410 = vmatpush1.msra.mxu0 0.0
        %1411 = vmatprep.subr.mxu0 0.0
        %1412 = vmatpush1.msra.mxu0 0.0
        %1413 = vmatprep.subr.mxu0 0.0
        %1414 = vmatpush1.msra.mxu0 0.0
        %1415 = vmatprep.subr.mxu0 0.0
        %1416 = vmatpush1.msra.mxu0 0.0
        %1417 = vmatprep.subr.mxu0 0.0
        %1418 = vmatpush1.msra.mxu0 0.0
        %1419 = vmatprep.subr.mxu0 0.0
        %1420 = vmatpush1.msra.mxu0 0.0
        %1421 = vmatprep.subr.mxu0 0.0
        %1422 = vmatpush1.msra.mxu0 0.0
        %1423 = vmatprep.subr.mxu0 0.0
        %1424 = vmatpush1.msra.mxu0 0.0
        %1425 = vmatprep.subr.mxu0 0.0
        %1426 = vmatpush1.msra.mxu0 0.0
        %1427 = vmatprep.mubr.f32.mxu0 0.0
        %1428 = vmatmul.mubr.f32.gmra.mrb[0].mxu0 %v774
        %v1429 = vpop.f32.mrb[0].mxu0
        %v1430 = vadd.f32 0.0, %v1429
        %v1431 = vpop.f32.mrb[0].mxu0
        %1432 = vmatprep.mubr.f32.mxu0 0.0
        %1433 = vmatmul.mubr.f32.gmra.mrb[0].mxu0 %v776
        %v1434 = vpop.f32.mrb[0].mxu0
        %v1435 = vadd.f32 0.0, %v1434
        %v1436 = vpop.f32.mrb[0].mxu0
        %1437 = vmatprep.mubr.f32.mxu0 0.0
        %1438 = vmatmul.mubr.f32.gmra.mrb[0].mxu0 %v778
        %v1439 = vpop.f32.mrb[0].mxu0
        %v1440 = vadd.f32 0.0, %v1439
        %v1441 = vpop.f32.mrb[0].mxu0
        %1442 = vdwg.mxu0
        %vm1443 = vcmask 1042432
        %v1444 = vrot.slane %v754, 5
        %v1445 = vrot.slane %v755, 5
        %v1446 = vsel %vm1443, %v1444, %v1445
        %v1447 = vrot.slane %v756, 5
        %v1448 = vsel %vm1443, %v1445, %v1447
        %v1449 = vsel %vm773, %v1446, 0
        %v1451 = vsel %vm773, %v1448, 0
        %v1453 = vsel %vm773, %v1447, 0
        %1455 = vmatprep.subr.mxu0 0.0
        %1456 = vmatpush1.msra.mxu0 %v1360
        %1457 = vmatprep.subr.mxu0 0.0
        %1458 = vmatpush1.msra.mxu0 0.0
        %1459 = vmatprep.subr.mxu0 0.0
        %1460 = vmatpush1.msra.mxu0 0.0
        %1461 = vmatprep.subr.mxu0 0.0
        %1462 = vmatpush1.msra.mxu0 0.0
        %1463 = vmatprep.subr.mxu0 0.0
        %1464 = vmatpush1.msra.mxu0 0.0
        %1465 = vmatprep.subr.mxu0 0.0
        %1466 = vmatpush1.msra.mxu0 0.0
        %1467 = vmatprep.subr.mxu0 0.0
        %1468 = vmatpush1.msra.mxu0 0.0
        %1469 = vmatprep.subr.mxu0 0.0
        %1470 = vmatpush1.msra.mxu0 0.0
        %1471 = vmatprep.subr.mxu0 0.0
        %1472 = vmatpush1.msra.mxu0 0.0
        %1473 = vmatprep.subr.mxu0 0.0
        %1474 = vmatpush1.msra.mxu0 0.0
        %1475 = vmatprep.subr.mxu0 0.0
        %1476 = vmatpush1.msra.mxu0 0.0
        %1477 = vmatprep.subr.mxu0 0.0
        %1478 = vmatpush1.msra.mxu0 0.0
        %1479 = vmatprep.subr.mxu0 0.0
        %1480 = vmatpush1.msra.mxu0 0.0
        %1481 = vmatprep.subr.mxu0 0.0
        %1482 = vmatpush1.msra.mxu0 0.0
        %1483 = vmatprep.subr.mxu0 0.0
        %1484 = vmatpush1.msra.mxu0 0.0
        %1485 = vmatprep.subr.mxu0 0.0
        %1486 = vmatpush1.msra.mxu0 0.0
        %1487 = vmatprep.subr.mxu0 0.0
        %1488 = vmatpush1.msra.mxu0 0.0
        %1489 = vmatprep.subr.mxu0 0.0
        %1490 = vmatpush1.msra.mxu0 0.0
        %1491 = vmatprep.subr.mxu0 0.0
        %1492 = vmatpush1.msra.mxu0 0.0
        %1493 = vmatprep.subr.mxu0 0.0
        %1494 = vmatpush1.msra.mxu0 0.0
        %1495 = vmatprep.subr.mxu0 0.0
        %1496 = vmatpush1.msra.mxu0 0.0
        %1497 = vmatprep.subr.mxu0 0.0
        %1498 = vmatpush1.msra.mxu0 0.0
        %1499 = vmatprep.subr.mxu0 0.0
        %1500 = vmatpush1.msra.mxu0 0.0
        %1501 = vmatprep.subr.mxu0 0.0
        %1502 = vmatpush1.msra.mxu0 0.0
        %1503 = vmatprep.subr.mxu0 0.0
        %1504 = vmatpush1.msra.mxu0 0.0
        %1505 = vmatprep.subr.mxu0 0.0
        %1506 = vmatpush1.msra.mxu0 0.0
        %1507 = vmatprep.subr.mxu0 0.0
        %1508 = vmatpush1.msra.mxu0 0.0
        %1509 = vmatprep.subr.mxu0 0.0
        %1510 = vmatpush1.msra.mxu0 0.0
        %1511 = vmatprep.subr.mxu0 0.0
        %1512 = vmatpush1.msra.mxu0 0.0
        %1513 = vmatprep.subr.mxu0 0.0
        %1514 = vmatpush1.msra.mxu0 0.0
        %1515 = vmatprep.subr.mxu0 0.0
        %1516 = vmatpush1.msra.mxu0 0.0
        %1517 = vmatprep.subr.mxu0 0.0
        %1518 = vmatpush1.msra.mxu0 0.0
        %1519 = vmatprep.mubr.f32.mxu0 0.0
        %1520 = vmatmul.mubr.f32.gmra.mrb[0].mxu0 %v1449
        %v1521 = vpop.f32.mrb[0].mxu0
        %v1522 = vadd.f32 %v1430, %v1521
        %v1523 = vpop.f32.mrb[0].mxu0
        %1524 = vmatprep.mubr.f32.mxu0 0.0
        %1525 = vmatmul.mubr.f32.gmra.mrb[0].mxu0 %v1451
        %v1526 = vpop.f32.mrb[0].mxu0
        %v1527 = vadd.f32 %v1435, %v1526
        %v1528 = vpop.f32.mrb[0].mxu0
        %1529 = vmatprep.mubr.f32.mxu0 0.0
        %1530 = vmatmul.mubr.f32.gmra.mrb[0].mxu0 %v1453
        %v1531 = vpop.f32.mrb[0].mxu0
        %v1532 = vadd.f32 %v1440, %v1531
        %v1533 = vpop.f32.mrb[0].mxu0
        %1534 = vdwg.mxu0
        %s1535 = scalar_lea.vmem [#allocation9], 16
        %v1536 = vld [vmem:[%s1535] sm:$0xff]
        %v1537 = vrot.slane %v755, 1
        %v1538 = vrot.slane %v756, 1
        %v1539 = vsel %vm1098, %v1537, %v1538
        %v1540 = vrot.slane %v757, 1
        %v1541 = vsel %vm1098, %v1538, %v1540
        %v1542 = vsel %vm773, %v1539, 0
        %v1544 = vsel %vm773, %v1541, 0
        %v1546 = vsel %vm773, %v1540, 0
        %1548 = vmatprep.subr.mxu0 0.0
        %1549 = vmatpush1.msra.mxu0 %v1536
        %1550 = vmatprep.subr.mxu0 0.0
        %1551 = vmatpush1.msra.mxu0 0.0
        %1552 = vmatprep.subr.mxu0 0.0
        %1553 = vmatpush1.msra.mxu0 0.0
        %1554 = vmatprep.subr.mxu0 0.0
        %1555 = vmatpush1.msra.mxu0 0.0
        %1556 = vmatprep.subr.mxu0 0.0
        %1557 = vmatpush1.msra.mxu0 0.0
        %1558 = vmatprep.subr.mxu0 0.0
        %1559 = vmatpush1.msra.mxu0 0.0
        %1560 = vmatprep.subr.mxu0 0.0
        %1561 = vmatpush1.msra.mxu0 0.0
        %1562 = vmatprep.subr.mxu0 0.0
        %1563 = vmatpush1.msra.mxu0 0.0
        %1564 = vmatprep.subr.mxu0 0.0
        %1565 = vmatpush1.msra.mxu0 0.0
        %1566 = vmatprep.subr.mxu0 0.0
        %1567 = vmatpush1.msra.mxu0 0.0
        %1568 = vmatprep.subr.mxu0 0.0
        %1569 = vmatpush1.msra.mxu0 0.0
        %1570 = vmatprep.subr.mxu0 0.0
        %1571 = vmatpush1.msra.mxu0 0.0
        %1572 = vmatprep.subr.mxu0 0.0
        %1573 = vmatpush1.msra.mxu0 0.0
        %1574 = vmatprep.subr.mxu0 0.0
        %1575 = vmatpush1.msra.mxu0 0.0
        %1576 = vmatprep.subr.mxu0 0.0
        %1577 = vmatpush1.msra.mxu0 0.0
        %1578 = vmatprep.subr.mxu0 0.0
        %1579 = vmatpush1.msra.mxu0 0.0
        %1580 = vmatprep.subr.mxu0 0.0
        %1581 = vmatpush1.msra.mxu0 0.0
        %1582 = vmatprep.subr.mxu0 0.0
        %1583 = vmatpush1.msra.mxu0 0.0
        %1584 = vmatprep.subr.mxu0 0.0
        %1585 = vmatpush1.msra.mxu0 0.0
        %1586 = vmatprep.subr.mxu0 0.0
        %1587 = vmatpush1.msra.mxu0 0.0
        %1588 = vmatprep.subr.mxu0 0.0
        %1589 = vmatpush1.msra.mxu0 0.0
        %1590 = vmatprep.subr.mxu0 0.0
        %1591 = vmatpush1.msra.mxu0 0.0
        %1592 = vmatprep.subr.mxu0 0.0
        %1593 = vmatpush1.msra.mxu0 0.0
        %1594 = vmatprep.subr.mxu0 0.0
        %1595 = vmatpush1.msra.mxu0 0.0
        %1596 = vmatprep.subr.mxu0 0.0
        %1597 = vmatpush1.msra.mxu0 0.0
        %1598 = vmatprep.subr.mxu0 0.0
        %1599 = vmatpush1.msra.mxu0 0.0
        %1600 = vmatprep.subr.mxu0 0.0
        %1601 = vmatpush1.msra.mxu0 0.0
        %1602 = vmatprep.subr.mxu0 0.0
        %1603 = vmatpush1.msra.mxu0 0.0
        %1604 = vmatprep.subr.mxu0 0.0
        %1605 = vmatpush1.msra.mxu0 0.0
        %1606 = vmatprep.subr.mxu0 0.0
        %1607 = vmatpush1.msra.mxu0 0.0
        %1608 = vmatprep.subr.mxu0 0.0
        %1609 = vmatpush1.msra.mxu0 0.0
        %1610 = vmatprep.subr.mxu0 0.0
        %1611 = vmatpush1.msra.mxu0 0.0
        %1612 = vmatprep.mubr.f32.mxu0 0.0
        %1613 = vmatmul.mubr.f32.gmra.mrb[0].mxu0 %v1542
        %v1614 = vpop.f32.mrb[0].mxu0
        %v1615 = vadd.f32 0.0, %v1614
        %v1616 = vpop.f32.mrb[0].mxu0
        %1617 = vmatprep.mubr.f32.mxu0 0.0
        %1618 = vmatmul.mubr.f32.gmra.mrb[0].mxu0 %v1544
        %v1619 = vpop.f32.mrb[0].mxu0
        %v1620 = vadd.f32 0.0, %v1619
        %v1621 = vpop.f32.mrb[0].mxu0
        %1622 = vmatprep.mubr.f32.mxu0 0.0
        %1623 = vmatmul.mubr.f32.gmra.mrb[0].mxu0 %v1546
        %v1624 = vpop.f32.mrb[0].mxu0
        %v1625 = vadd.f32 0.0, %v1624
        %v1626 = vpop.f32.mrb[0].mxu0
        %1627 = vdwg.mxu0
        %v1628 = vadd.f32 %v1522, %v1615
        %v1629 = vadd.f32 %v1527, %v1620
        %v1630 = vadd.f32 %v1532, %v1625
        %v1631 = vld [vmem:[%s7] sm:$0x1]
        %v1633 = vlaneseq
        %v1634 = vshrl.u32 %v1633, 7
        %v1635 = vsub.s32 0, %v1634
        %v1636 = vrot.slane %v1631, %v1635
        %v1638 = vadd.f32 %v1628, %v1636
        %v1639 = vadd.f32 %v1629, %v1636
        %v1640 = vadd.f32 %v1630, %v1636
        %vm1641 = vcmp.ge.f32.partialorder %v1638, 0.0
        %vm1642 = vcmp.ge.f32.partialorder %v1639, 0.0
        %vm1643 = vcmp.ge.f32.partialorder %v1640, 0.0
        %v1644 = vmul.f32 %v1638, 0.01
        %v1645 = vmul.f32 %v1639, 0.01
        %v1646 = vmul.f32 %v1640, 0.01
        %v1647 = vsel %vm1641, %v1638, %v1644
        %v1648 = vsel %vm1642, %v1639, %v1645
        %v1649 = vsel %vm1643, %v1640, %v1646
        %v1650 = vsel %vm1086, %v1647, 0.0
        %v1651 = vsel %vm1087, %v1648, 0.0
        %v1652 = vsel %vm1088, %v1649, 0.0
        %v1653 = vld [vmem:[#allocation10] sm:$0xff]
        %s1654 = scalar_lea.vmem [#allocation10], 8
        %v1655 = vld [vmem:[%s1654] sm:$0xff]
        %v1659 = vrot.slane %v1650, 1
        %v1660 = vrot.slane %v1651, 1
        %v1661 = vsel %vm1098, %v1659, %v1660
        %v1662 = vrot.slane %v1652, 1
        %v1663 = vsel %vm1098, %v1660, %v1662
        %v1664 = vsel %vm773, %v1661, 0
        %v1666 = vsel %vm773, %v1663, 0
        %1668 = vmatprep.subr.mxu0 0.0
        %1669 = vmatpush1.msra.mxu0 %v1655
        %1670 = vmatprep.subr.mxu0 0.0
        %1671 = vmatpush1.msra.mxu0 0.0
        %1672 = vmatprep.subr.mxu0 0.0
        %1673 = vmatpush1.msra.mxu0 0.0
        %1674 = vmatprep.subr.mxu0 0.0
        %1675 = vmatpush1.msra.mxu0 0.0
        %1676 = vmatprep.subr.mxu0 0.0
        %1677 = vmatpush1.msra.mxu0 0.0
        %1678 = vmatprep.subr.mxu0 0.0
        %1679 = vmatpush1.msra.mxu0 0.0
        %1680 = vmatprep.subr.mxu0 0.0
        %1681 = vmatpush1.msra.mxu0 0.0
        %1682 = vmatprep.subr.mxu0 0.0
        %1683 = vmatpush1.msra.mxu0 0.0
        %1684 = vmatprep.subr.mxu0 0.0
        %1685 = vmatpush1.msra.mxu0 0.0
        %1686 = vmatprep.subr.mxu0 0.0
        %1687 = vmatpush1.msra.mxu0 0.0
        %1688 = vmatprep.subr.mxu0 0.0
        %1689 = vmatpush1.msra.mxu0 0.0
        %1690 = vmatprep.subr.mxu0 0.0
        %1691 = vmatpush1.msra.mxu0 0.0
        %1692 = vmatprep.subr.mxu0 0.0
        %1693 = vmatpush1.msra.mxu0 0.0
        %1694 = vmatprep.subr.mxu0 0.0
        %1695 = vmatpush1.msra.mxu0 0.0
        %1696 = vmatprep.subr.mxu0 0.0
        %1697 = vmatpush1.msra.mxu0 0.0
        %1698 = vmatprep.subr.mxu0 0.0
        %1699 = vmatpush1.msra.mxu0 0.0
        %1700 = vmatprep.subr.mxu0 0.0
        %1701 = vmatpush1.msra.mxu0 0.0
        %1702 = vmatprep.subr.mxu0 0.0
        %1703 = vmatpush1.msra.mxu0 0.0
        %1704 = vmatprep.subr.mxu0 0.0
        %1705 = vmatpush1.msra.mxu0 0.0
        %1706 = vmatprep.subr.mxu0 0.0
        %1707 = vmatpush1.msra.mxu0 0.0
        %1708 = vmatprep.subr.mxu0 0.0
        %1709 = vmatpush1.msra.mxu0 0.0
        %1710 = vmatprep.subr.mxu0 0.0
        %1711 = vmatpush1.msra.mxu0 0.0
        %1712 = vmatprep.subr.mxu0 0.0
        %1713 = vmatpush1.msra.mxu0 0.0
        %1714 = vmatprep.subr.mxu0 0.0
        %1715 = vmatpush1.msra.mxu0 0.0
        %1716 = vmatprep.subr.mxu0 0.0
        %1717 = vmatpush1.msra.mxu0 0.0
        %1718 = vmatprep.subr.mxu0 0.0
        %1719 = vmatpush1.msra.mxu0 0.0
        %1720 = vmatprep.subr.mxu0 0.0
        %1721 = vmatpush1.msra.mxu0 0.0
        %1722 = vmatprep.subr.mxu0 0.0
        %1723 = vmatpush1.msra.mxu0 0.0
        %1724 = vmatprep.subr.mxu0 0.0
        %1725 = vmatpush1.msra.mxu0 0.0
        %1726 = vmatprep.subr.mxu0 0.0
        %1727 = vmatpush1.msra.mxu0 0.0
        %1728 = vmatprep.subr.mxu0 0.0
        %1729 = vmatpush1.msra.mxu0 0.0
        %1730 = vmatprep.subr.mxu0 0.0
        %1731 = vmatpush1.msra.mxu0 0.0
        %1732 = vmatprep.mubr.f32.mxu0 0.0
        %1733 = vmatmul.mubr.f32.gmra.mrb[0].mxu0 %v1664
        %v1734 = vpop.f32.mrb[0].mxu0
        %v1735 = vadd.f32 0.0, %v1734
        %v1736 = vpop.f32.mrb[0].mxu0
        %1737 = vmatprep.mubr.f32.mxu0 0.0
        %1738 = vmatmul.mubr.f32.gmra.mrb[0].mxu0 %v1666
        %v1739 = vpop.f32.mrb[0].mxu0
        %v1740 = vadd.f32 0.0, %v1739
        %v1741 = vpop.f32.mrb[0].mxu0
        %1742 = vdwg.mxu0
        %v1743 = vsel %vm773, %v1650, 0
        %v1745 = vsel %vm773, %v1651, 0
        %1747 = vmatprep.subr.mxu0 0.0
        %1748 = vmatpush1.msra.mxu0 %v1653
        %1749 = vmatprep.subr.mxu0 0.0
        %1750 = vmatpush1.msra.mxu0 0.0
        %1751 = vmatprep.subr.mxu0 0.0
        %1752 = vmatpush1.msra.mxu0 0.0
        %1753 = vmatprep.subr.mxu0 0.0
        %1754 = vmatpush1.msra.mxu0 0.0
        %1755 = vmatprep.subr.mxu0 0.0
        %1756 = vmatpush1.msra.mxu0 0.0
        %1757 = vmatprep.subr.mxu0 0.0
        %1758 = vmatpush1.msra.mxu0 0.0
        %1759 = vmatprep.subr.mxu0 0.0
        %1760 = vmatpush1.msra.mxu0 0.0
        %1761 = vmatprep.subr.mxu0 0.0
        %1762 = vmatpush1.msra.mxu0 0.0
        %1763 = vmatprep.subr.mxu0 0.0
        %1764 = vmatpush1.msra.mxu0 0.0
        %1765 = vmatprep.subr.mxu0 0.0
        %1766 = vmatpush1.msra.mxu0 0.0
        %1767 = vmatprep.subr.mxu0 0.0
        %1768 = vmatpush1.msra.mxu0 0.0
        %1769 = vmatprep.subr.mxu0 0.0
        %1770 = vmatpush1.msra.mxu0 0.0
        %1771 = vmatprep.subr.mxu0 0.0
        %1772 = vmatpush1.msra.mxu0 0.0
        %1773 = vmatprep.subr.mxu0 0.0
        %1774 = vmatpush1.msra.mxu0 0.0
        %1775 = vmatprep.subr.mxu0 0.0
        %1776 = vmatpush1.msra.mxu0 0.0
        %1777 = vmatprep.subr.mxu0 0.0
        %1778 = vmatpush1.msra.mxu0 0.0
        %1779 = vmatprep.subr.mxu0 0.0
        %1780 = vmatpush1.msra.mxu0 0.0
        %1781 = vmatprep.subr.mxu0 0.0
        %1782 = vmatpush1.msra.mxu0 0.0
        %1783 = vmatprep.subr.mxu0 0.0
        %1784 = vmatpush1.msra.mxu0 0.0
        %1785 = vmatprep.subr.mxu0 0.0
        %1786 = vmatpush1.msra.mxu0 0.0
        %1787 = vmatprep.subr.mxu0 0.0
        %1788 = vmatpush1.msra.mxu0 0.0
        %1789 = vmatprep.subr.mxu0 0.0
        %1790 = vmatpush1.msra.mxu0 0.0
        %1791 = vmatprep.subr.mxu0 0.0
        %1792 = vmatpush1.msra.mxu0 0.0
        %1793 = vmatprep.subr.mxu0 0.0
        %1794 = vmatpush1.msra.mxu0 0.0
        %1795 = vmatprep.subr.mxu0 0.0
        %1796 = vmatpush1.msra.mxu0 0.0
        %1797 = vmatprep.subr.mxu0 0.0
        %1798 = vmatpush1.msra.mxu0 0.0
        %1799 = vmatprep.subr.mxu0 0.0
        %1800 = vmatpush1.msra.mxu0 0.0
        %1801 = vmatprep.subr.mxu0 0.0
        %1802 = vmatpush1.msra.mxu0 0.0
        %1803 = vmatprep.subr.mxu0 0.0
        %1804 = vmatpush1.msra.mxu0 0.0
        %1805 = vmatprep.subr.mxu0 0.0
        %1806 = vmatpush1.msra.mxu0 0.0
        %1807 = vmatprep.subr.mxu0 0.0
        %1808 = vmatpush1.msra.mxu0 0.0
        %1809 = vmatprep.subr.mxu0 0.0
        %1810 = vmatpush1.msra.mxu0 0.0
        %1811 = vmatprep.mubr.f32.mxu0 0.0
        %1812 = vmatmul.mubr.f32.gmra.mrb[0].mxu0 %v1743
        %v1813 = vpop.f32.mrb[0].mxu0
        %v1814 = vadd.f32 %v1735, %v1813
        %v1815 = vpop.f32.mrb[0].mxu0
        %1816 = vmatprep.mubr.f32.mxu0 0.0
        %1817 = vmatmul.mubr.f32.gmra.mrb[0].mxu0 %v1745
        %v1818 = vpop.f32.mrb[0].mxu0
        %v1819 = vadd.f32 %v1740, %v1818
        %v1820 = vpop.f32.mrb[0].mxu0
        %1821 = vdwg.mxu0
        %s1822 = scalar_lea.vmem [#allocation10], 16
        %v1823 = vld [vmem:[%s1822] sm:$0xff]
        %v1824 = vrot.slane %v1650, 2
        %v1825 = vrot.slane %v1651, 2
        %v1826 = vsel %vm1264, %v1824, %v1825
        %v1827 = vrot.slane %v1652, 2
        %v1828 = vsel %vm1264, %v1825, %v1827
        %v1829 = vsel %vm773, %v1826, 0
        %v1831 = vsel %vm773, %v1828, 0
        %1833 = vmatprep.subr.mxu0 0.0
        %1834 = vmatpush1.msra.mxu0 %v1823
        %1835 = vmatprep.subr.mxu0 0.0
        %1836 = vmatpush1.msra.mxu0 0.0
        %1837 = vmatprep.subr.mxu0 0.0
        %1838 = vmatpush1.msra.mxu0 0.0
        %1839 = vmatprep.subr.mxu0 0.0
        %1840 = vmatpush1.msra.mxu0 0.0
        %1841 = vmatprep.subr.mxu0 0.0
        %1842 = vmatpush1.msra.mxu0 0.0
        %1843 = vmatprep.subr.mxu0 0.0
        %1844 = vmatpush1.msra.mxu0 0.0
        %1845 = vmatprep.subr.mxu0 0.0
        %1846 = vmatpush1.msra.mxu0 0.0
        %1847 = vmatprep.subr.mxu0 0.0
        %1848 = vmatpush1.msra.mxu0 0.0
        %1849 = vmatprep.subr.mxu0 0.0
        %1850 = vmatpush1.msra.mxu0 0.0
        %1851 = vmatprep.subr.mxu0 0.0
        %1852 = vmatpush1.msra.mxu0 0.0
        %1853 = vmatprep.subr.mxu0 0.0
        %1854 = vmatpush1.msra.mxu0 0.0
        %1855 = vmatprep.subr.mxu0 0.0
        %1856 = vmatpush1.msra.mxu0 0.0
        %1857 = vmatprep.subr.mxu0 0.0
        %1858 = vmatpush1.msra.mxu0 0.0
        %1859 = vmatprep.subr.mxu0 0.0
        %1860 = vmatpush1.msra.mxu0 0.0
        %1861 = vmatprep.subr.mxu0 0.0
        %1862 = vmatpush1.msra.mxu0 0.0
        %1863 = vmatprep.subr.mxu0 0.0
        %1864 = vmatpush1.msra.mxu0 0.0
        %1865 = vmatprep.subr.mxu0 0.0
        %1866 = vmatpush1.msra.mxu0 0.0
        %1867 = vmatprep.subr.mxu0 0.0
        %1868 = vmatpush1.msra.mxu0 0.0
        %1869 = vmatprep.subr.mxu0 0.0
        %1870 = vmatpush1.msra.mxu0 0.0
        %1871 = vmatprep.subr.mxu0 0.0
        %1872 = vmatpush1.msra.mxu0 0.0
        %1873 = vmatprep.subr.mxu0 0.0
        %1874 = vmatpush1.msra.mxu0 0.0
        %1875 = vmatprep.subr.mxu0 0.0
        %1876 = vmatpush1.msra.mxu0 0.0
        %1877 = vmatprep.subr.mxu0 0.0
        %1878 = vmatpush1.msra.mxu0 0.0
        %1879 = vmatprep.subr.mxu0 0.0
        %1880 = vmatpush1.msra.mxu0 0.0
        %1881 = vmatprep.subr.mxu0 0.0
        %1882 = vmatpush1.msra.mxu0 0.0
        %1883 = vmatprep.subr.mxu0 0.0
        %1884 = vmatpush1.msra.mxu0 0.0
        %1885 = vmatprep.subr.mxu0 0.0
        %1886 = vmatpush1.msra.mxu0 0.0
        %1887 = vmatprep.subr.mxu0 0.0
        %1888 = vmatpush1.msra.mxu0 0.0
        %1889 = vmatprep.subr.mxu0 0.0
        %1890 = vmatpush1.msra.mxu0 0.0
        %1891 = vmatprep.subr.mxu0 0.0
        %1892 = vmatpush1.msra.mxu0 0.0
        %1893 = vmatprep.subr.mxu0 0.0
        %1894 = vmatpush1.msra.mxu0 0.0
        %1895 = vmatprep.subr.mxu0 0.0
        %1896 = vmatpush1.msra.mxu0 0.0
        %1897 = vmatprep.mubr.f32.mxu0 0.0
        %1898 = vmatmul.mubr.f32.gmra.mrb[0].mxu0 %v1829
        %v1899 = vpop.f32.mrb[0].mxu0
        %v1900 = vadd.f32 0.0, %v1899
        %v1901 = vpop.f32.mrb[0].mxu0
        %1902 = vmatprep.mubr.f32.mxu0 0.0
        %1903 = vmatmul.mubr.f32.gmra.mrb[0].mxu0 %v1831
        %v1904 = vpop.f32.mrb[0].mxu0
        %v1905 = vadd.f32 0.0, %v1904
        %v1906 = vpop.f32.mrb[0].mxu0
        %1907 = vdwg.mxu0
        %v1908 = vadd.f32 %v1814, %v1900
        %v1909 = vadd.f32 %v1819, %v1905
        %v1910 = vld [vmem:[%s9] sm:$0x1]
        %v1912 = vlaneseq
        %v1913 = vshrl.u32 %v1912, 7
        %v1914 = vsub.s32 0, %v1913
        %v1915 = vrot.slane %v1910, %v1914
        %v1917 = vadd.f32 %v1908, %v1915
        %v1918 = vadd.f32 %v1909, %v1915
        %v1919 = vadd.f32 %v1358, %v1917
        %v1920 = vadd.f32 %v1359, %v1918
        %v1921 = vld [vmem:[%s10] sm:$0xff]
        %s1922 = scalar_lea.vmem %s10, 8
        %v1923 = vld [vmem:[%s1922] sm:$0xff]
        %v1924 = vrot.slane %v757, 5
        %v1925 = vsel %vm1443, %v1447, %v1924
        %v1926 = vsel %vm773, %v1925, 0
        %1928 = vmatprep.subr.mxu0 0.0
        %1929 = vmatpush1.msra.mxu0 %v1923
        %1930 = vmatprep.subr.mxu0 0.0
        %1931 = vmatpush1.msra.mxu0 0.0
        %1932 = vmatprep.subr.mxu0 0.0
        %1933 = vmatpush1.msra.mxu0 0.0
        %1934 = vmatprep.subr.mxu0 0.0
        %1935 = vmatpush1.msra.mxu0 0.0
        %1936 = vmatprep.subr.mxu0 0.0
        %1937 = vmatpush1.msra.mxu0 0.0
        %1938 = vmatprep.subr.mxu0 0.0
        %1939 = vmatpush1.msra.mxu0 0.0
        %1940 = vmatprep.subr.mxu0 0.0
        %1941 = vmatpush1.msra.mxu0 0.0
        %1942 = vmatprep.subr.mxu0 0.0
        %1943 = vmatpush1.msra.mxu0 0.0
        %1944 = vmatprep.subr.mxu0 0.0
        %1945 = vmatpush1.msra.mxu0 0.0
        %1946 = vmatprep.subr.mxu0 0.0
        %1947 = vmatpush1.msra.mxu0 0.0
        %1948 = vmatprep.subr.mxu0 0.0
        %1949 = vmatpush1.msra.mxu0 0.0
        %1950 = vmatprep.subr.mxu0 0.0
        %1951 = vmatpush1.msra.mxu0 0.0
        %1952 = vmatprep.subr.mxu0 0.0
        %1953 = vmatpush1.msra.mxu0 0.0
        %1954 = vmatprep.subr.mxu0 0.0
        %1955 = vmatpush1.msra.mxu0 0.0
        %1956 = vmatprep.subr.mxu0 0.0
        %1957 = vmatpush1.msra.mxu0 0.0
        %1958 = vmatprep.subr.mxu0 0.0
        %1959 = vmatpush1.msra.mxu0 0.0
        %1960 = vmatprep.subr.mxu0 0.0
        %1961 = vmatpush1.msra.mxu0 0.0
        %1962 = vmatprep.subr.mxu0 0.0
        %1963 = vmatpush1.msra.mxu0 0.0
        %1964 = vmatprep.subr.mxu0 0.0
        %1965 = vmatpush1.msra.mxu0 0.0
        %1966 = vmatprep.subr.mxu0 0.0
        %1967 = vmatpush1.msra.mxu0 0.0
        %1968 = vmatprep.subr.mxu0 0.0
        %1969 = vmatpush1.msra.mxu0 0.0
        %1970 = vmatprep.subr.mxu0 0.0
        %1971 = vmatpush1.msra.mxu0 0.0
        %1972 = vmatprep.subr.mxu0 0.0
        %1973 = vmatpush1.msra.mxu0 0.0
        %1974 = vmatprep.subr.mxu0 0.0
        %1975 = vmatpush1.msra.mxu0 0.0
        %1976 = vmatprep.subr.mxu0 0.0
        %1977 = vmatpush1.msra.mxu0 0.0
        %1978 = vmatprep.subr.mxu0 0.0
        %1979 = vmatpush1.msra.mxu0 0.0
        %1980 = vmatprep.subr.mxu0 0.0
        %1981 = vmatpush1.msra.mxu0 0.0
        %1982 = vmatprep.subr.mxu0 0.0
        %1983 = vmatpush1.msra.mxu0 0.0
        %1984 = vmatprep.subr.mxu0 0.0
        %1985 = vmatpush1.msra.mxu0 0.0
        %1986 = vmatprep.subr.mxu0 0.0
        %1987 = vmatpush1.msra.mxu0 0.0
        %1988 = vmatprep.subr.mxu0 0.0
        %1989 = vmatpush1.msra.mxu0 0.0
        %1990 = vmatprep.subr.mxu0 0.0
        %1991 = vmatpush1.msra.mxu0 0.0
        %1992 = vmatprep.mubr.f32.mxu0 0.0
        %1993 = vmatmul.mubr.f32.gmra.mrb[0].mxu0 %v1449
        %v1994 = vpop.f32.mrb[0].mxu0
        %v1995 = vadd.f32 0.0, %v1994
        %v1996 = vpop.f32.mrb[0].mxu0
        %1997 = vmatprep.mubr.f32.mxu0 0.0
        %1998 = vmatmul.mubr.f32.gmra.mrb[0].mxu0 %v1451
        %v1999 = vpop.f32.mrb[0].mxu0
        %v2000 = vadd.f32 0.0, %v1999
        %v2001 = vpop.f32.mrb[0].mxu0
        %2002 = vmatprep.mubr.f32.mxu0 0.0
        %2003 = vmatmul.mubr.f32.gmra.mrb[0].mxu0 %v1926
        %v2004 = vpop.f32.mrb[0].mxu0
        %v2005 = vadd.f32 0.0, %v2004
        %v2006 = vpop.f32.mrb[0].mxu0
        %2007 = vdwg.mxu0
        %vm2008 = vcmask 1043456
        %v2009 = vrot.slane %v754, 4
        %v2010 = vrot.slane %v755, 4
        %v2011 = vsel %vm2008, %v2009, %v2010
        %v2012 = vrot.slane %v756, 4
        %v2013 = vsel %vm2008, %v2010, %v2012
        %v2014 = vsel %vm773, %v2011, 0
        %v2016 = vsel %vm773, %v2013, 0
        %v2018 = vsel %vm773, %v2012, 0
        %2020 = vmatprep.subr.mxu0 0.0
        %2021 = vmatpush1.msra.mxu0 %v1921
        %2022 = vmatprep.subr.mxu0 0.0
        %2023 = vmatpush1.msra.mxu0 0.0
        %2024 = vmatprep.subr.mxu0 0.0
        %2025 = vmatpush1.msra.mxu0 0.0
        %2026 = vmatprep.subr.mxu0 0.0
        %2027 = vmatpush1.msra.mxu0 0.0
        %2028 = vmatprep.subr.mxu0 0.0
        %2029 = vmatpush1.msra.mxu0 0.0
        %2030 = vmatprep.subr.mxu0 0.0
        %2031 = vmatpush1.msra.mxu0 0.0
        %2032 = vmatprep.subr.mxu0 0.0
        %2033 = vmatpush1.msra.mxu0 0.0
        %2034 = vmatprep.subr.mxu0 0.0
        %2035 = vmatpush1.msra.mxu0 0.0
        %2036 = vmatprep.subr.mxu0 0.0
        %2037 = vmatpush1.msra.mxu0 0.0
        %2038 = vmatprep.subr.mxu0 0.0
        %2039 = vmatpush1.msra.mxu0 0.0
        %2040 = vmatprep.subr.mxu0 0.0
        %2041 = vmatpush1.msra.mxu0 0.0
        %2042 = vmatprep.subr.mxu0 0.0
        %2043 = vmatpush1.msra.mxu0 0.0
        %2044 = vmatprep.subr.mxu0 0.0
        %2045 = vmatpush1.msra.mxu0 0.0
        %2046 = vmatprep.subr.mxu0 0.0
        %2047 = vmatpush1.msra.mxu0 0.0
        %2048 = vmatprep.subr.mxu0 0.0
        %2049 = vmatpush1.msra.mxu0 0.0
        %2050 = vmatprep.subr.mxu0 0.0
        %2051 = vmatpush1.msra.mxu0 0.0
        %2052 = vmatprep.subr.mxu0 0.0
        %2053 = vmatpush1.msra.mxu0 0.0
        %2054 = vmatprep.subr.mxu0 0.0
        %2055 = vmatpush1.msra.mxu0 0.0
        %2056 = vmatprep.subr.mxu0 0.0
        %2057 = vmatpush1.msra.mxu0 0.0
        %2058 = vmatprep.subr.mxu0 0.0
        %2059 = vmatpush1.msra.mxu0 0.0
        %2060 = vmatprep.subr.mxu0 0.0
        %2061 = vmatpush1.msra.mxu0 0.0
        %2062 = vmatprep.subr.mxu0 0.0
        %2063 = vmatpush1.msra.mxu0 0.0
        %2064 = vmatprep.subr.mxu0 0.0
        %2065 = vmatpush1.msra.mxu0 0.0
        %2066 = vmatprep.subr.mxu0 0.0
        %2067 = vmatpush1.msra.mxu0 0.0
        %2068 = vmatprep.subr.mxu0 0.0
        %2069 = vmatpush1.msra.mxu0 0.0
        %2070 = vmatprep.subr.mxu0 0.0
        %2071 = vmatpush1.msra.mxu0 0.0
        %2072 = vmatprep.subr.mxu0 0.0
        %2073 = vmatpush1.msra.mxu0 0.0
        %2074 = vmatprep.subr.mxu0 0.0
        %2075 = vmatpush1.msra.mxu0 0.0
        %2076 = vmatprep.subr.mxu0 0.0
        %2077 = vmatpush1.msra.mxu0 0.0
        %2078 = vmatprep.subr.mxu0 0.0
        %2079 = vmatpush1.msra.mxu0 0.0
        %2080 = vmatprep.subr.mxu0 0.0
        %2081 = vmatpush1.msra.mxu0 0.0
        %2082 = vmatprep.subr.mxu0 0.0
        %2083 = vmatpush1.msra.mxu0 0.0
        %2084 = vmatprep.mubr.f32.mxu0 0.0
        %2085 = vmatmul.mubr.f32.gmra.mrb[0].mxu0 %v2014
        %v2086 = vpop.f32.mrb[0].mxu0
        %v2087 = vadd.f32 %v1995, %v2086
        %v2088 = vpop.f32.mrb[0].mxu0
        %2089 = vmatprep.mubr.f32.mxu0 0.0
        %2090 = vmatmul.mubr.f32.gmra.mrb[0].mxu0 %v2016
        %v2091 = vpop.f32.mrb[0].mxu0
        %v2092 = vadd.f32 %v2000, %v2091
        %v2093 = vpop.f32.mrb[0].mxu0
        %2094 = vmatprep.mubr.f32.mxu0 0.0
        %2095 = vmatmul.mubr.f32.gmra.mrb[0].mxu0 %v2018
        %v2096 = vpop.f32.mrb[0].mxu0
        %v2097 = vadd.f32 %v2005, %v2096
        %v2098 = vpop.f32.mrb[0].mxu0
        %2099 = vdwg.mxu0
        %s2100 = scalar_lea.vmem %s10, 16
        %v2101 = vld [vmem:[%s2100] sm:$0xff]
        %v2102 = vrot.slane %v757, 6
        %v2103 = vsel %vm860, %v864, %v2102
        %v2104 = vsel %vm773, %v2103, 0
        %2106 = vmatprep.subr.mxu0 0.0
        %2107 = vmatpush1.msra.mxu0 %v2101
        %2108 = vmatprep.subr.mxu0 0.0
        %2109 = vmatpush1.msra.mxu0 0.0
        %2110 = vmatprep.subr.mxu0 0.0
        %2111 = vmatpush1.msra.mxu0 0.0
        %2112 = vmatprep.subr.mxu0 0.0
        %2113 = vmatpush1.msra.mxu0 0.0
        %2114 = vmatprep.subr.mxu0 0.0
        %2115 = vmatpush1.msra.mxu0 0.0
        %2116 = vmatprep.subr.mxu0 0.0
        %2117 = vmatpush1.msra.mxu0 0.0
        %2118 = vmatprep.subr.mxu0 0.0
        %2119 = vmatpush1.msra.mxu0 0.0
        %2120 = vmatprep.subr.mxu0 0.0
        %2121 = vmatpush1.msra.mxu0 0.0
        %2122 = vmatprep.subr.mxu0 0.0
        %2123 = vmatpush1.msra.mxu0 0.0
        %2124 = vmatprep.subr.mxu0 0.0
        %2125 = vmatpush1.msra.mxu0 0.0
        %2126 = vmatprep.subr.mxu0 0.0
        %2127 = vmatpush1.msra.mxu0 0.0
        %2128 = vmatprep.subr.mxu0 0.0
        %2129 = vmatpush1.msra.mxu0 0.0
        %2130 = vmatprep.subr.mxu0 0.0
        %2131 = vmatpush1.msra.mxu0 0.0
        %2132 = vmatprep.subr.mxu0 0.0
        %2133 = vmatpush1.msra.mxu0 0.0
        %2134 = vmatprep.subr.mxu0 0.0
        %2135 = vmatpush1.msra.mxu0 0.0
        %2136 = vmatprep.subr.mxu0 0.0
        %2137 = vmatpush1.msra.mxu0 0.0
        %2138 = vmatprep.subr.mxu0 0.0
        %2139 = vmatpush1.msra.mxu0 0.0
        %2140 = vmatprep.subr.mxu0 0.0
        %2141 = vmatpush1.msra.mxu0 0.0
        %2142 = vmatprep.subr.mxu0 0.0
        %2143 = vmatpush1.msra.mxu0 0.0
        %2144 = vmatprep.subr.mxu0 0.0
        %2145 = vmatpush1.msra.mxu0 0.0
        %2146 = vmatprep.subr.mxu0 0.0
        %2147 = vmatpush1.msra.mxu0 0.0
        %2148 = vmatprep.subr.mxu0 0.0
        %2149 = vmatpush1.msra.mxu0 0.0
        %2150 = vmatprep.subr.mxu0 0.0
        %2151 = vmatpush1.msra.mxu0 0.0
        %2152 = vmatprep.subr.mxu0 0.0
        %2153 = vmatpush1.msra.mxu0 0.0
        %2154 = vmatprep.subr.mxu0 0.0
        %2155 = vmatpush1.msra.mxu0 0.0
        %2156 = vmatprep.subr.mxu0 0.0
        %2157 = vmatpush1.msra.mxu0 0.0
        %2158 = vmatprep.subr.mxu0 0.0
        %2159 = vmatpush1.msra.mxu0 0.0
        %2160 = vmatprep.subr.mxu0 0.0
        %2161 = vmatpush1.msra.mxu0 0.0
        %2162 = vmatprep.subr.mxu0 0.0
        %2163 = vmatpush1.msra.mxu0 0.0
        %2164 = vmatprep.subr.mxu0 0.0
        %2165 = vmatpush1.msra.mxu0 0.0
        %2166 = vmatprep.subr.mxu0 0.0
        %2167 = vmatpush1.msra.mxu0 0.0
        %2168 = vmatprep.subr.mxu0 0.0
        %2169 = vmatpush1.msra.mxu0 0.0
        %2170 = vmatprep.mubr.f32.mxu0 0.0
        %2171 = vmatmul.mubr.f32.gmra.mrb[0].mxu0 %v866
        %v2172 = vpop.f32.mrb[0].mxu0
        %v2173 = vadd.f32 0.0, %v2172
        %v2174 = vpop.f32.mrb[0].mxu0
        %2175 = vmatprep.mubr.f32.mxu0 0.0
        %2176 = vmatmul.mubr.f32.gmra.mrb[0].mxu0 %v868
        %v2177 = vpop.f32.mrb[0].mxu0
        %v2178 = vadd.f32 0.0, %v2177
        %v2179 = vpop.f32.mrb[0].mxu0
        %2180 = vmatprep.mubr.f32.mxu0 0.0
        %2181 = vmatmul.mubr.f32.gmra.mrb[0].mxu0 %v2104
        %v2182 = vpop.f32.mrb[0].mxu0
        %v2183 = vadd.f32 0.0, %v2182
        %v2184 = vpop.f32.mrb[0].mxu0
        %2185 = vdwg.mxu0
        %v2186 = vadd.f32 %v2087, %v2173
        %v2187 = vadd.f32 %v2092, %v2178
        %v2188 = vadd.f32 %v2097, %v2183
        %s2189 = scalar_lea.vmem %s10, 24
        %v2190 = vld [vmem:[%s2189] sm:$0xff]
        %2191 = vmatprep.subr.mxu0 0.0
        %2192 = vmatpush1.msra.mxu0 %v2190
        %2193 = vmatprep.subr.mxu0 0.0
        %2194 = vmatpush1.msra.mxu0 0.0
        %2195 = vmatprep.subr.mxu0 0.0
        %2196 = vmatpush1.msra.mxu0 0.0
        %2197 = vmatprep.subr.mxu0 0.0
        %2198 = vmatpush1.msra.mxu0 0.0
        %2199 = vmatprep.subr.mxu0 0.0
        %2200 = vmatpush1.msra.mxu0 0.0
        %2201 = vmatprep.subr.mxu0 0.0
        %2202 = vmatpush1.msra.mxu0 0.0
        %2203 = vmatprep.subr.mxu0 0.0
        %2204 = vmatpush1.msra.mxu0 0.0
        %2205 = vmatprep.subr.mxu0 0.0
        %2206 = vmatpush1.msra.mxu0 0.0
        %2207 = vmatprep.subr.mxu0 0.0
        %2208 = vmatpush1.msra.mxu0 0.0
        %2209 = vmatprep.subr.mxu0 0.0
        %2210 = vmatpush1.msra.mxu0 0.0
        %2211 = vmatprep.subr.mxu0 0.0
        %2212 = vmatpush1.msra.mxu0 0.0
        %2213 = vmatprep.subr.mxu0 0.0
        %2214 = vmatpush1.msra.mxu0 0.0
        %2215 = vmatprep.subr.mxu0 0.0
        %2216 = vmatpush1.msra.mxu0 0.0
        %2217 = vmatprep.subr.mxu0 0.0
        %2218 = vmatpush1.msra.mxu0 0.0
        %2219 = vmatprep.subr.mxu0 0.0
        %2220 = vmatpush1.msra.mxu0 0.0
        %2221 = vmatprep.subr.mxu0 0.0
        %2222 = vmatpush1.msra.mxu0 0.0
        %2223 = vmatprep.subr.mxu0 0.0
        %2224 = vmatpush1.msra.mxu0 0.0
        %2225 = vmatprep.subr.mxu0 0.0
        %2226 = vmatpush1.msra.mxu0 0.0
        %2227 = vmatprep.subr.mxu0 0.0
        %2228 = vmatpush1.msra.mxu0 0.0
        %2229 = vmatprep.subr.mxu0 0.0
        %2230 = vmatpush1.msra.mxu0 0.0
        %2231 = vmatprep.subr.mxu0 0.0
        %2232 = vmatpush1.msra.mxu0 0.0
        %2233 = vmatprep.subr.mxu0 0.0
        %2234 = vmatpush1.msra.mxu0 0.0
        %2235 = vmatprep.subr.mxu0 0.0
        %2236 = vmatpush1.msra.mxu0 0.0
        %2237 = vmatprep.subr.mxu0 0.0
        %2238 = vmatpush1.msra.mxu0 0.0
        %2239 = vmatprep.subr.mxu0 0.0
        %2240 = vmatpush1.msra.mxu0 0.0
        %2241 = vmatprep.subr.mxu0 0.0
        %2242 = vmatpush1.msra.mxu0 0.0
        %2243 = vmatprep.subr.mxu0 0.0
        %2244 = vmatpush1.msra.mxu0 0.0
        %2245 = vmatprep.subr.mxu0 0.0
        %2246 = vmatpush1.msra.mxu0 0.0
        %2247 = vmatprep.subr.mxu0 0.0
        %2248 = vmatpush1.msra.mxu0 0.0
        %2249 = vmatprep.subr.mxu0 0.0
        %2250 = vmatpush1.msra.mxu0 0.0
        %2251 = vmatprep.subr.mxu0 0.0
        %2252 = vmatpush1.msra.mxu0 0.0
        %2253 = vmatprep.subr.mxu0 0.0
        %2254 = vmatpush1.msra.mxu0 0.0
        %2255 = vmatprep.mubr.f32.mxu0 0.0
        %2256 = vmatmul.mubr.f32.gmra.mrb[0].mxu0 %v774
        %v2257 = vpop.f32.mrb[0].mxu0
        %v2258 = vadd.f32 0.0, %v2257
        %v2259 = vpop.f32.mrb[0].mxu0
        %2260 = vmatprep.mubr.f32.mxu0 0.0
        %2261 = vmatmul.mubr.f32.gmra.mrb[0].mxu0 %v776
        %v2262 = vpop.f32.mrb[0].mxu0
        %v2263 = vadd.f32 0.0, %v2262
        %v2264 = vpop.f32.mrb[0].mxu0
        %2265 = vmatprep.mubr.f32.mxu0 0.0
        %2266 = vmatmul.mubr.f32.gmra.mrb[0].mxu0 %v778
        %v2267 = vpop.f32.mrb[0].mxu0
        %v2268 = vadd.f32 0.0, %v2267
        %v2269 = vpop.f32.mrb[0].mxu0
        %2270 = vdwg.mxu0
        %v2271 = vadd.f32 %v2186, %v2258
        %v2272 = vadd.f32 %v2187, %v2263
        %v2273 = vadd.f32 %v2188, %v2268
        %s2274 = scalar_lea.vmem %s10, 32
        %v2275 = vld [vmem:[%s2274] sm:$0xff]
        %2276 = vmatprep.subr.mxu0 0.0
        %2277 = vmatpush1.msra.mxu0 %v2275
        %2278 = vmatprep.subr.mxu0 0.0
        %2279 = vmatpush1.msra.mxu0 0.0
        %2280 = vmatprep.subr.mxu0 0.0
        %2281 = vmatpush1.msra.mxu0 0.0
        %2282 = vmatprep.subr.mxu0 0.0
        %2283 = vmatpush1.msra.mxu0 0.0
        %2284 = vmatprep.subr.mxu0 0.0
        %2285 = vmatpush1.msra.mxu0 0.0
        %2286 = vmatprep.subr.mxu0 0.0
        %2287 = vmatpush1.msra.mxu0 0.0
        %2288 = vmatprep.subr.mxu0 0.0
        %2289 = vmatpush1.msra.mxu0 0.0
        %2290 = vmatprep.subr.mxu0 0.0
        %2291 = vmatpush1.msra.mxu0 0.0
        %2292 = vmatprep.subr.mxu0 0.0
        %2293 = vmatpush1.msra.mxu0 0.0
        %2294 = vmatprep.subr.mxu0 0.0
        %2295 = vmatpush1.msra.mxu0 0.0
        %2296 = vmatprep.subr.mxu0 0.0
        %2297 = vmatpush1.msra.mxu0 0.0
        %2298 = vmatprep.subr.mxu0 0.0
        %2299 = vmatpush1.msra.mxu0 0.0
        %2300 = vmatprep.subr.mxu0 0.0
        %2301 = vmatpush1.msra.mxu0 0.0
        %2302 = vmatprep.subr.mxu0 0.0
        %2303 = vmatpush1.msra.mxu0 0.0
        %2304 = vmatprep.subr.mxu0 0.0
        %2305 = vmatpush1.msra.mxu0 0.0
        %2306 = vmatprep.subr.mxu0 0.0
        %2307 = vmatpush1.msra.mxu0 0.0
        %2308 = vmatprep.subr.mxu0 0.0
        %2309 = vmatpush1.msra.mxu0 0.0
        %2310 = vmatprep.subr.mxu0 0.0
        %2311 = vmatpush1.msra.mxu0 0.0
        %2312 = vmatprep.subr.mxu0 0.0
        %2313 = vmatpush1.msra.mxu0 0.0
        %2314 = vmatprep.subr.mxu0 0.0
        %2315 = vmatpush1.msra.mxu0 0.0
        %2316 = vmatprep.subr.mxu0 0.0
        %2317 = vmatpush1.msra.mxu0 0.0
        %2318 = vmatprep.subr.mxu0 0.0
        %2319 = vmatpush1.msra.mxu0 0.0
        %2320 = vmatprep.subr.mxu0 0.0
        %2321 = vmatpush1.msra.mxu0 0.0
        %2322 = vmatprep.subr.mxu0 0.0
        %2323 = vmatpush1.msra.mxu0 0.0
        %2324 = vmatprep.subr.mxu0 0.0
        %2325 = vmatpush1.msra.mxu0 0.0
        %2326 = vmatprep.subr.mxu0 0.0
        %2327 = vmatpush1.msra.mxu0 0.0
        %2328 = vmatprep.subr.mxu0 0.0
        %2329 = vmatpush1.msra.mxu0 0.0
        %2330 = vmatprep.subr.mxu0 0.0
        %2331 = vmatpush1.msra.mxu0 0.0
        %2332 = vmatprep.subr.mxu0 0.0
        %2333 = vmatpush1.msra.mxu0 0.0
        %2334 = vmatprep.subr.mxu0 0.0
        %2335 = vmatpush1.msra.mxu0 0.0
        %2336 = vmatprep.subr.mxu0 0.0
        %2337 = vmatpush1.msra.mxu0 0.0
        %2338 = vmatprep.subr.mxu0 0.0
        %2339 = vmatpush1.msra.mxu0 0.0
        %2340 = vmatprep.mubr.f32.mxu0 0.0
        %2341 = vmatmul.mubr.f32.gmra.mrb[0].mxu0 %v954
        %v2342 = vpop.f32.mrb[0].mxu0
        %v2343 = vadd.f32 0.0, %v2342
        %v2344 = vpop.f32.mrb[0].mxu0
        %2345 = vmatprep.mubr.f32.mxu0 0.0
        %2346 = vmatmul.mubr.f32.gmra.mrb[0].mxu0 %v956
        %v2347 = vpop.f32.mrb[0].mxu0
        %v2348 = vadd.f32 0.0, %v2347
        %v2349 = vpop.f32.mrb[0].mxu0
        %2350 = vmatprep.mubr.f32.mxu0 0.0
        %2351 = vmatmul.mubr.f32.gmra.mrb[0].mxu0 %v958
        %v2352 = vpop.f32.mrb[0].mxu0
        %v2353 = vadd.f32 0.0, %v2352
        %v2354 = vpop.f32.mrb[0].mxu0
        %2355 = vdwg.mxu0
        %v2356 = vadd.f32 %v2271, %v2343
        %v2357 = vadd.f32 %v2272, %v2348
        %v2358 = vadd.f32 %v2273, %v2353
        %v2359 = vld [vmem:[%s11] sm:$0x1]
        %v2361 = vlaneseq
        %v2362 = vshrl.u32 %v2361, 7
        %v2363 = vsub.s32 0, %v2362
        %v2364 = vrot.slane %v2359, %v2363
        %v2366 = vadd.f32 %v2356, %v2364
        %v2367 = vadd.f32 %v2357, %v2364
        %v2368 = vadd.f32 %v2358, %v2364
        %vm2369 = vcmp.ge.f32.partialorder %v2366, 0.0
        %vm2370 = vcmp.ge.f32.partialorder %v2367, 0.0
        %vm2371 = vcmp.ge.f32.partialorder %v2368, 0.0
        %v2372 = vmul.f32 %v2366, 0.01
        %v2373 = vmul.f32 %v2367, 0.01
        %v2374 = vmul.f32 %v2368, 0.01
        %v2375 = vsel %vm2369, %v2366, %v2372
        %v2376 = vsel %vm2370, %v2367, %v2373
        %v2377 = vsel %vm2371, %v2368, %v2374
        %v2378 = vsub.s32 %v1068, 2
        %v2379 = vsub.s32 %v1069, 2
        %v2380 = vsub.s32 %v1070, 2
        %vm2381 = vcmp.ge.s32.totalorder %v2378, 0
        %vm2382 = vcmp.ge.s32.totalorder %v2379, 0
        %vm2383 = vcmp.ge.s32.totalorder %v2380, 0
        %vm2384 = vcmp.lt.s32.totalorder %v2378, 16
        %vm2385 = vcmp.lt.s32.totalorder %v2379, 16
        %vm2386 = vcmp.lt.s32.totalorder %v2380, 16
        %vm2387 = vmand %vm2381, %vm2384
        %vm2388 = vmand %vm2382, %vm2385
        %vm2389 = vmand %vm2383, %vm2386
        %v2390 = vsel %vm2387, 1, 0
        %v2391 = vsel %vm2388, 1, 0
        %v2392 = vsel %vm2389, 1, 0
        %vm2393 = vcmp.eq.s32.totalorder %v2390, 1
        %vm2394 = vcmp.eq.s32.totalorder %v2391, 1
        %vm2395 = vcmp.eq.s32.totalorder %v2392, 1
        %v2396 = vsel %vm2393, %v2375, 0.0
        %v2397 = vsel %vm2394, %v2376, 0.0
        %v2398 = vsel %vm2395, %v2377, 0.0
        %v2399 = vld [vmem:[%s12] sm:$0xff]
        %s2400 = scalar_lea.vmem %s12, 8
        %v2401 = vld [vmem:[%s2400] sm:$0xff]
        %v2405 = vrot.slane %v2396, 1
        %v2406 = vrot.slane %v2397, 1
        %v2407 = vsel %vm1098, %v2405, %v2406
        %v2408 = vrot.slane %v2398, 1
        %v2409 = vsel %vm1098, %v2406, %v2408
        %v2410 = vsel %vm773, %v2407, 0
        %v2412 = vsel %vm773, %v2409, 0
        %2414 = vmatprep.subr.mxu0 0.0
        %2415 = vmatpush1.msra.mxu0 %v2401
        %2416 = vmatprep.subr.mxu0 0.0
        %2417 = vmatpush1.msra.mxu0 0.0
        %2418 = vmatprep.subr.mxu0 0.0
        %2419 = vmatpush1.msra.mxu0 0.0
        %2420 = vmatprep.subr.mxu0 0.0
        %2421 = vmatpush1.msra.mxu0 0.0
        %2422 = vmatprep.subr.mxu0 0.0
        %2423 = vmatpush1.msra.mxu0 0.0
        %2424 = vmatprep.subr.mxu0 0.0
        %2425 = vmatpush1.msra.mxu0 0.0
        %2426 = vmatprep.subr.mxu0 0.0
        %2427 = vmatpush1.msra.mxu0 0.0
        %2428 = vmatprep.subr.mxu0 0.0
        %2429 = vmatpush1.msra.mxu0 0.0
        %2430 = vmatprep.subr.mxu0 0.0
        %2431 = vmatpush1.msra.mxu0 0.0
        %2432 = vmatprep.subr.mxu0 0.0
        %2433 = vmatpush1.msra.mxu0 0.0
        %2434 = vmatprep.subr.mxu0 0.0
        %2435 = vmatpush1.msra.mxu0 0.0
        %2436 = vmatprep.subr.mxu0 0.0
        %2437 = vmatpush1.msra.mxu0 0.0
        %2438 = vmatprep.subr.mxu0 0.0
        %2439 = vmatpush1.msra.mxu0 0.0
        %2440 = vmatprep.subr.mxu0 0.0
        %2441 = vmatpush1.msra.mxu0 0.0
        %2442 = vmatprep.subr.mxu0 0.0
        %2443 = vmatpush1.msra.mxu0 0.0
        %2444 = vmatprep.subr.mxu0 0.0
        %2445 = vmatpush1.msra.mxu0 0.0
        %2446 = vmatprep.subr.mxu0 0.0
        %2447 = vmatpush1.msra.mxu0 0.0
        %2448 = vmatprep.subr.mxu0 0.0
        %2449 = vmatpush1.msra.mxu0 0.0
        %2450 = vmatprep.subr.mxu0 0.0
        %2451 = vmatpush1.msra.mxu0 0.0
        %2452 = vmatprep.subr.mxu0 0.0
        %2453 = vmatpush1.msra.mxu0 0.0
        %2454 = vmatprep.subr.mxu0 0.0
        %2455 = vmatpush1.msra.mxu0 0.0
        %2456 = vmatprep.subr.mxu0 0.0
        %2457 = vmatpush1.msra.mxu0 0.0
        %2458 = vmatprep.subr.mxu0 0.0
        %2459 = vmatpush1.msra.mxu0 0.0
        %2460 = vmatprep.subr.mxu0 0.0
        %2461 = vmatpush1.msra.mxu0 0.0
        %2462 = vmatprep.subr.mxu0 0.0
        %2463 = vmatpush1.msra.mxu0 0.0
        %2464 = vmatprep.subr.mxu0 0.0
        %2465 = vmatpush1.msra.mxu0 0.0
        %2466 = vmatprep.subr.mxu0 0.0
        %2467 = vmatpush1.msra.mxu0 0.0
        %2468 = vmatprep.subr.mxu0 0.0
        %2469 = vmatpush1.msra.mxu0 0.0
        %2470 = vmatprep.subr.mxu0 0.0
        %2471 = vmatpush1.msra.mxu0 0.0
        %2472 = vmatprep.subr.mxu0 0.0
        %2473 = vmatpush1.msra.mxu0 0.0
        %2474 = vmatprep.subr.mxu0 0.0
        %2475 = vmatpush1.msra.mxu0 0.0
        %2476 = vmatprep.subr.mxu0 0.0
        %2477 = vmatpush1.msra.mxu0 0.0
        %2478 = vmatprep.mubr.f32.mxu0 0.0
        %2479 = vmatmul.mubr.f32.gmra.mrb[0].mxu0 %v2410
        %v2480 = vpop.f32.mrb[0].mxu0
        %v2481 = vadd.f32 0.0, %v2480
        %v2482 = vpop.f32.mrb[0].mxu0
        %2483 = vmatprep.mubr.f32.mxu0 0.0
        %2484 = vmatmul.mubr.f32.gmra.mrb[0].mxu0 %v2412
        %v2485 = vpop.f32.mrb[0].mxu0
        %v2486 = vadd.f32 0.0, %v2485
        %v2487 = vpop.f32.mrb[0].mxu0
        %2488 = vdwg.mxu0
        %v2489 = vsel %vm773, %v2396, 0
        %v2491 = vsel %vm773, %v2397, 0
        %2493 = vmatprep.subr.mxu0 0.0
        %2494 = vmatpush1.msra.mxu0 %v2399
        %2495 = vmatprep.subr.mxu0 0.0
        %2496 = vmatpush1.msra.mxu0 0.0
        %2497 = vmatprep.subr.mxu0 0.0
        %2498 = vmatpush1.msra.mxu0 0.0
        %2499 = vmatprep.subr.mxu0 0.0
        %2500 = vmatpush1.msra.mxu0 0.0
        %2501 = vmatprep.subr.mxu0 0.0
        %2502 = vmatpush1.msra.mxu0 0.0
        %2503 = vmatprep.subr.mxu0 0.0
        %2504 = vmatpush1.msra.mxu0 0.0
        %2505 = vmatprep.subr.mxu0 0.0
        %2506 = vmatpush1.msra.mxu0 0.0
        %2507 = vmatprep.subr.mxu0 0.0
        %2508 = vmatpush1.msra.mxu0 0.0
        %2509 = vmatprep.subr.mxu0 0.0
        %2510 = vmatpush1.msra.mxu0 0.0
        %2511 = vmatprep.subr.mxu0 0.0
        %2512 = vmatpush1.msra.mxu0 0.0
        %2513 = vmatprep.subr.mxu0 0.0
        %2514 = vmatpush1.msra.mxu0 0.0
        %2515 = vmatprep.subr.mxu0 0.0
        %2516 = vmatpush1.msra.mxu0 0.0
        %2517 = vmatprep.subr.mxu0 0.0
        %2518 = vmatpush1.msra.mxu0 0.0
        %2519 = vmatprep.subr.mxu0 0.0
        %2520 = vmatpush1.msra.mxu0 0.0
        %2521 = vmatprep.subr.mxu0 0.0
        %2522 = vmatpush1.msra.mxu0 0.0
        %2523 = vmatprep.subr.mxu0 0.0
        %2524 = vmatpush1.msra.mxu0 0.0
        %2525 = vmatprep.subr.mxu0 0.0
        %2526 = vmatpush1.msra.mxu0 0.0
        %2527 = vmatprep.subr.mxu0 0.0
        %2528 = vmatpush1.msra.mxu0 0.0
        %2529 = vmatprep.subr.mxu0 0.0
        %2530 = vmatpush1.msra.mxu0 0.0
        %2531 = vmatprep.subr.mxu0 0.0
        %2532 = vmatpush1.msra.mxu0 0.0
        %2533 = vmatprep.subr.mxu0 0.0
        %2534 = vmatpush1.msra.mxu0 0.0
        %2535 = vmatprep.subr.mxu0 0.0
        %2536 = vmatpush1.msra.mxu0 0.0
        %2537 = vmatprep.subr.mxu0 0.0
        %2538 = vmatpush1.msra.mxu0 0.0
        %2539 = vmatprep.subr.mxu0 0.0
        %2540 = vmatpush1.msra.mxu0 0.0
        %2541 = vmatprep.subr.mxu0 0.0
        %2542 = vmatpush1.msra.mxu0 0.0
        %2543 = vmatprep.subr.mxu0 0.0
        %2544 = vmatpush1.msra.mxu0 0.0
        %2545 = vmatprep.subr.mxu0 0.0
        %2546 = vmatpush1.msra.mxu0 0.0
        %2547 = vmatprep.subr.mxu0 0.0
        %2548 = vmatpush1.msra.mxu0 0.0
        %2549 = vmatprep.subr.mxu0 0.0
        %2550 = vmatpush1.msra.mxu0 0.0
        %2551 = vmatprep.subr.mxu0 0.0
        %2552 = vmatpush1.msra.mxu0 0.0
        %2553 = vmatprep.subr.mxu0 0.0
        %2554 = vmatpush1.msra.mxu0 0.0
        %2555 = vmatprep.subr.mxu0 0.0
        %2556 = vmatpush1.msra.mxu0 0.0
        %2557 = vmatprep.mubr.f32.mxu0 0.0
        %2558 = vmatmul.mubr.f32.gmra.mrb[0].mxu0 %v2489
        %v2559 = vpop.f32.mrb[0].mxu0
        %v2560 = vadd.f32 %v2481, %v2559
        %v2561 = vpop.f32.mrb[0].mxu0
        %2562 = vmatprep.mubr.f32.mxu0 0.0
        %2563 = vmatmul.mubr.f32.gmra.mrb[0].mxu0 %v2491
        %v2564 = vpop.f32.mrb[0].mxu0
        %v2565 = vadd.f32 %v2486, %v2564
        %v2566 = vpop.f32.mrb[0].mxu0
        %2567 = vdwg.mxu0
        %s2568 = scalar_lea.vmem %s12, 16
        %v2569 = vld [vmem:[%s2568] sm:$0xff]
        %v2570 = vrot.slane %v2396, 2
        %v2571 = vrot.slane %v2397, 2
        %v2572 = vsel %vm1264, %v2570, %v2571
        %v2573 = vrot.slane %v2398, 2
        %v2574 = vsel %vm1264, %v2571, %v2573
        %v2575 = vsel %vm773, %v2572, 0
        %v2577 = vsel %vm773, %v2574, 0
        %2579 = vmatprep.subr.mxu0 0.0
        %2580 = vmatpush1.msra.mxu0 %v2569
        %2581 = vmatprep.subr.mxu0 0.0
        %2582 = vmatpush1.msra.mxu0 0.0
        %2583 = vmatprep.subr.mxu0 0.0
        %2584 = vmatpush1.msra.mxu0 0.0
        %2585 = vmatprep.subr.mxu0 0.0
        %2586 = vmatpush1.msra.mxu0 0.0
        %2587 = vmatprep.subr.mxu0 0.0
        %2588 = vmatpush1.msra.mxu0 0.0
        %2589 = vmatprep.subr.mxu0 0.0
        %2590 = vmatpush1.msra.mxu0 0.0
        %2591 = vmatprep.subr.mxu0 0.0
        %2592 = vmatpush1.msra.mxu0 0.0
        %2593 = vmatprep.subr.mxu0 0.0
        %2594 = vmatpush1.msra.mxu0 0.0
        %2595 = vmatprep.subr.mxu0 0.0
        %2596 = vmatpush1.msra.mxu0 0.0
        %2597 = vmatprep.subr.mxu0 0.0
        %2598 = vmatpush1.msra.mxu0 0.0
        %2599 = vmatprep.subr.mxu0 0.0
        %2600 = vmatpush1.msra.mxu0 0.0
        %2601 = vmatprep.subr.mxu0 0.0
        %2602 = vmatpush1.msra.mxu0 0.0
        %2603 = vmatprep.subr.mxu0 0.0
        %2604 = vmatpush1.msra.mxu0 0.0
        %2605 = vmatprep.subr.mxu0 0.0
        %2606 = vmatpush1.msra.mxu0 0.0
        %2607 = vmatprep.subr.mxu0 0.0
        %2608 = vmatpush1.msra.mxu0 0.0
        %2609 = vmatprep.subr.mxu0 0.0
        %2610 = vmatpush1.msra.mxu0 0.0
        %2611 = vmatprep.subr.mxu0 0.0
        %2612 = vmatpush1.msra.mxu0 0.0
        %2613 = vmatprep.subr.mxu0 0.0
        %2614 = vmatpush1.msra.mxu0 0.0
        %2615 = vmatprep.subr.mxu0 0.0
        %2616 = vmatpush1.msra.mxu0 0.0
        %2617 = vmatprep.subr.mxu0 0.0
        %2618 = vmatpush1.msra.mxu0 0.0
        %2619 = vmatprep.subr.mxu0 0.0
        %2620 = vmatpush1.msra.mxu0 0.0
        %2621 = vmatprep.subr.mxu0 0.0
        %2622 = vmatpush1.msra.mxu0 0.0
        %2623 = vmatprep.subr.mxu0 0.0
        %2624 = vmatpush1.msra.mxu0 0.0
        %2625 = vmatprep.subr.mxu0 0.0
        %2626 = vmatpush1.msra.mxu0 0.0
        %2627 = vmatprep.subr.mxu0 0.0
        %2628 = vmatpush1.msra.mxu0 0.0
        %2629 = vmatprep.subr.mxu0 0.0
        %2630 = vmatpush1.msra.mxu0 0.0
        %2631 = vmatprep.subr.mxu0 0.0
        %2632 = vmatpush1.msra.mxu0 0.0
        %2633 = vmatprep.subr.mxu0 0.0
        %2634 = vmatpush1.msra.mxu0 0.0
        %2635 = vmatprep.subr.mxu0 0.0
        %2636 = vmatpush1.msra.mxu0 0.0
        %2637 = vmatprep.subr.mxu0 0.0
        %2638 = vmatpush1.msra.mxu0 0.0
        %2639 = vmatprep.subr.mxu0 0.0
        %2640 = vmatpush1.msra.mxu0 0.0
        %2641 = vmatprep.subr.mxu0 0.0
        %2642 = vmatpush1.msra.mxu0 0.0
        %2643 = vmatprep.mubr.f32.mxu0 0.0
        %2644 = vmatmul.mubr.f32.gmra.mrb[0].mxu0 %v2575
        %v2645 = vpop.f32.mrb[0].mxu0
        %v2646 = vadd.f32 0.0, %v2645
        %v2647 = vpop.f32.mrb[0].mxu0
        %2648 = vmatprep.mubr.f32.mxu0 0.0
        %2649 = vmatmul.mubr.f32.gmra.mrb[0].mxu0 %v2577
        %v2650 = vpop.f32.mrb[0].mxu0
        %v2651 = vadd.f32 0.0, %v2650
        %v2652 = vpop.f32.mrb[0].mxu0
        %2653 = vdwg.mxu0
        %v2654 = vadd.f32 %v2560, %v2646
        %v2655 = vadd.f32 %v2565, %v2651
        %s2656 = scalar_lea.vmem %s12, 24
        %v2657 = vld [vmem:[%s2656] sm:$0xff]
        %vm2658 = vcmask 1044480
        %v2659 = vrot.slane %v2396, 3
        %v2660 = vrot.slane %v2397, 3
        %v2661 = vsel %vm2658, %v2659, %v2660
        %v2662 = vrot.slane %v2398, 3
        %v2663 = vsel %vm2658, %v2660, %v2662
        %v2664 = vsel %vm773, %v2661, 0
        %v2666 = vsel %vm773, %v2663, 0
        %2668 = vmatprep.subr.mxu0 0.0
        %2669 = vmatpush1.msra.mxu0 %v2657
        %2670 = vmatprep.subr.mxu0 0.0
        %2671 = vmatpush1.msra.mxu0 0.0
        %2672 = vmatprep.subr.mxu0 0.0
        %2673 = vmatpush1.msra.mxu0 0.0
        %2674 = vmatprep.subr.mxu0 0.0
        %2675 = vmatpush1.msra.mxu0 0.0
        %2676 = vmatprep.subr.mxu0 0.0
        %2677 = vmatpush1.msra.mxu0 0.0
        %2678 = vmatprep.subr.mxu0 0.0
        %2679 = vmatpush1.msra.mxu0 0.0
        %2680 = vmatprep.subr.mxu0 0.0
        %2681 = vmatpush1.msra.mxu0 0.0
        %2682 = vmatprep.subr.mxu0 0.0
        %2683 = vmatpush1.msra.mxu0 0.0
        %2684 = vmatprep.subr.mxu0 0.0
        %2685 = vmatpush1.msra.mxu0 0.0
        %2686 = vmatprep.subr.mxu0 0.0
        %2687 = vmatpush1.msra.mxu0 0.0
        %2688 = vmatprep.subr.mxu0 0.0
        %2689 = vmatpush1.msra.mxu0 0.0
        %2690 = vmatprep.subr.mxu0 0.0
        %2691 = vmatpush1.msra.mxu0 0.0
        %2692 = vmatprep.subr.mxu0 0.0
        %2693 = vmatpush1.msra.mxu0 0.0
        %2694 = vmatprep.subr.mxu0 0.0
        %2695 = vmatpush1.msra.mxu0 0.0
        %2696 = vmatprep.subr.mxu0 0.0
        %2697 = vmatpush1.msra.mxu0 0.0
        %2698 = vmatprep.subr.mxu0 0.0
        %2699 = vmatpush1.msra.mxu0 0.0
        %2700 = vmatprep.subr.mxu0 0.0
        %2701 = vmatpush1.msra.mxu0 0.0
        %2702 = vmatprep.subr.mxu0 0.0
        %2703 = vmatpush1.msra.mxu0 0.0
        %2704 = vmatprep.subr.mxu0 0.0
        %2705 = vmatpush1.msra.mxu0 0.0
        %2706 = vmatprep.subr.mxu0 0.0
        %2707 = vmatpush1.msra.mxu0 0.0
        %2708 = vmatprep.subr.mxu0 0.0
        %2709 = vmatpush1.msra.mxu0 0.0
        %2710 = vmatprep.subr.mxu0 0.0
        %2711 = vmatpush1.msra.mxu0 0.0
        %2712 = vmatprep.subr.mxu0 0.0
        %2713 = vmatpush1.msra.mxu0 0.0
        %2714 = vmatprep.subr.mxu0 0.0
        %2715 = vmatpush1.msra.mxu0 0.0
        %2716 = vmatprep.subr.mxu0 0.0
        %2717 = vmatpush1.msra.mxu0 0.0
        %2718 = vmatprep.subr.mxu0 0.0
        %2719 = vmatpush1.msra.mxu0 0.0
        %2720 = vmatprep.subr.mxu0 0.0
        %2721 = vmatpush1.msra.mxu0 0.0
        %2722 = vmatprep.subr.mxu0 0.0
        %2723 = vmatpush1.msra.mxu0 0.0
        %2724 = vmatprep.subr.mxu0 0.0
        %2725 = vmatpush1.msra.mxu0 0.0
        %2726 = vmatprep.subr.mxu0 0.0
        %2727 = vmatpush1.msra.mxu0 0.0
        %2728 = vmatprep.subr.mxu0 0.0
        %2729 = vmatpush1.msra.mxu0 0.0
        %2730 = vmatprep.subr.mxu0 0.0
        %2731 = vmatpush1.msra.mxu0 0.0
        %2732 = vmatprep.mubr.f32.mxu0 0.0
        %2733 = vmatmul.mubr.f32.gmra.mrb[0].mxu0 %v2664
        %v2734 = vpop.f32.mrb[0].mxu0
        %v2735 = vadd.f32 0.0, %v2734
        %v2736 = vpop.f32.mrb[0].mxu0
        %2737 = vmatprep.mubr.f32.mxu0 0.0
        %2738 = vmatmul.mubr.f32.gmra.mrb[0].mxu0 %v2666
        %v2739 = vpop.f32.mrb[0].mxu0
        %v2740 = vadd.f32 0.0, %v2739
        %v2741 = vpop.f32.mrb[0].mxu0
        %2742 = vdwg.mxu0
        %v2743 = vadd.f32 %v2654, %v2735
        %v2744 = vadd.f32 %v2655, %v2740
        %s2745 = scalar_lea.vmem %s12, 32
        %v2746 = vld [vmem:[%s2745] sm:$0xff]
        %v2747 = vrot.slane %v2396, 4
        %v2748 = vrot.slane %v2397, 4
        %v2749 = vsel %vm2008, %v2747, %v2748
        %v2750 = vrot.slane %v2398, 4
        %v2751 = vsel %vm2008, %v2748, %v2750
        %v2752 = vsel %vm773, %v2749, 0
        %v2754 = vsel %vm773, %v2751, 0
        %2756 = vmatprep.subr.mxu0 0.0
        %2757 = vmatpush1.msra.mxu0 %v2746
        %2758 = vmatprep.subr.mxu0 0.0
        %2759 = vmatpush1.msra.mxu0 0.0
        %2760 = vmatprep.subr.mxu0 0.0
        %2761 = vmatpush1.msra.mxu0 0.0
        %2762 = vmatprep.subr.mxu0 0.0
        %2763 = vmatpush1.msra.mxu0 0.0
        %2764 = vmatprep.subr.mxu0 0.0
        %2765 = vmatpush1.msra.mxu0 0.0
        %2766 = vmatprep.subr.mxu0 0.0
        %2767 = vmatpush1.msra.mxu0 0.0
        %2768 = vmatprep.subr.mxu0 0.0
        %2769 = vmatpush1.msra.mxu0 0.0
        %2770 = vmatprep.subr.mxu0 0.0
        %2771 = vmatpush1.msra.mxu0 0.0
        %2772 = vmatprep.subr.mxu0 0.0
        %2773 = vmatpush1.msra.mxu0 0.0
        %2774 = vmatprep.subr.mxu0 0.0
        %2775 = vmatpush1.msra.mxu0 0.0
        %2776 = vmatprep.subr.mxu0 0.0
        %2777 = vmatpush1.msra.mxu0 0.0
        %2778 = vmatprep.subr.mxu0 0.0
        %2779 = vmatpush1.msra.mxu0 0.0
        %2780 = vmatprep.subr.mxu0 0.0
        %2781 = vmatpush1.msra.mxu0 0.0
        %2782 = vmatprep.subr.mxu0 0.0
        %2783 = vmatpush1.msra.mxu0 0.0
        %2784 = vmatprep.subr.mxu0 0.0
        %2785 = vmatpush1.msra.mxu0 0.0
        %2786 = vmatprep.subr.mxu0 0.0
        %2787 = vmatpush1.msra.mxu0 0.0
        %2788 = vmatprep.subr.mxu0 0.0
        %2789 = vmatpush1.msra.mxu0 0.0
        %2790 = vmatprep.subr.mxu0 0.0
        %2791 = vmatpush1.msra.mxu0 0.0
        %2792 = vmatprep.subr.mxu0 0.0
        %2793 = vmatpush1.msra.mxu0 0.0
        %2794 = vmatprep.subr.mxu0 0.0
        %2795 = vmatpush1.msra.mxu0 0.0
        %2796 = vmatprep.subr.mxu0 0.0
        %2797 = vmatpush1.msra.mxu0 0.0
        %2798 = vmatprep.subr.mxu0 0.0
        %2799 = vmatpush1.msra.mxu0 0.0
        %2800 = vmatprep.subr.mxu0 0.0
        %2801 = vmatpush1.msra.mxu0 0.0
        %2802 = vmatprep.subr.mxu0 0.0
        %2803 = vmatpush1.msra.mxu0 0.0
        %2804 = vmatprep.subr.mxu0 0.0
        %2805 = vmatpush1.msra.mxu0 0.0
        %2806 = vmatprep.subr.mxu0 0.0
        %2807 = vmatpush1.msra.mxu0 0.0
        %2808 = vmatprep.subr.mxu0 0.0
        %2809 = vmatpush1.msra.mxu0 0.0
        %2810 = vmatprep.subr.mxu0 0.0
        %2811 = vmatpush1.msra.mxu0 0.0
        %2812 = vmatprep.subr.mxu0 0.0
        %2813 = vmatpush1.msra.mxu0 0.0
        %2814 = vmatprep.subr.mxu0 0.0
        %2815 = vmatpush1.msra.mxu0 0.0
        %2816 = vmatprep.subr.mxu0 0.0
        %2817 = vmatpush1.msra.mxu0 0.0
        %2818 = vmatprep.subr.mxu0 0.0
        %2819 = vmatpush1.msra.mxu0 0.0
        %2820 = vmatprep.mubr.f32.mxu0 0.0
        %2821 = vmatmul.mubr.f32.gmra.mrb[0].mxu0 %v2752
        %v2822 = vpop.f32.mrb[0].mxu0
        %v2823 = vadd.f32 0.0, %v2822
        %v2824 = vpop.f32.mrb[0].mxu0
        %2825 = vmatprep.mubr.f32.mxu0 0.0
        %2826 = vmatmul.mubr.f32.gmra.mrb[0].mxu0 %v2754
        %v2827 = vpop.f32.mrb[0].mxu0
        %v2828 = vadd.f32 0.0, %v2827
        %v2829 = vpop.f32.mrb[0].mxu0
        %2830 = vdwg.mxu0
        %v2831 = vadd.f32 %v2743, %v2823
        %v2832 = vadd.f32 %v2744, %v2828
        %v2833 = vld [vmem:[%s13] sm:$0x1]
        %v2835 = vlaneseq
        %v2836 = vshrl.u32 %v2835, 7
        %v2837 = vsub.s32 0, %v2836
        %v2838 = vrot.slane %v2833, %v2837
        %v2840 = vadd.f32 %v2831, %v2838
        %v2841 = vadd.f32 %v2832, %v2838
        %v2842 = vadd.f32 %v1919, %v2840
        %v2843 = vadd.f32 %v1920, %v2841
        %v2844 = vld [vmem:[%s14] sm:$0xff]
        %s2845 = scalar_lea.vmem %s14, 8
        %v2846 = vld [vmem:[%s2845] sm:$0xff]
        %v2847 = vrot.slane %v754, 3
        %v2848 = vrot.slane %v755, 3
        %v2849 = vsel %vm2658, %v2847, %v2848
        %v2850 = vrot.slane %v756, 3
        %v2851 = vsel %vm2658, %v2848, %v2850
        %v2852 = vsel %vm773, %v2849, 0
        %v2854 = vsel %vm773, %v2851, 0
        %v2856 = vsel %vm773, %v2850, 0
        %2858 = vmatprep.subr.mxu0 0.0
        %2859 = vmatpush1.msra.mxu0 %v2846
        %2860 = vmatprep.subr.mxu0 0.0
        %2861 = vmatpush1.msra.mxu0 0.0
        %2862 = vmatprep.subr.mxu0 0.0
        %2863 = vmatpush1.msra.mxu0 0.0
        %2864 = vmatprep.subr.mxu0 0.0
        %2865 = vmatpush1.msra.mxu0 0.0
        %2866 = vmatprep.subr.mxu0 0.0
        %2867 = vmatpush1.msra.mxu0 0.0
        %2868 = vmatprep.subr.mxu0 0.0
        %2869 = vmatpush1.msra.mxu0 0.0
        %2870 = vmatprep.subr.mxu0 0.0
        %2871 = vmatpush1.msra.mxu0 0.0
        %2872 = vmatprep.subr.mxu0 0.0
        %2873 = vmatpush1.msra.mxu0 0.0
        %2874 = vmatprep.subr.mxu0 0.0
        %2875 = vmatpush1.msra.mxu0 0.0
        %2876 = vmatprep.subr.mxu0 0.0
        %2877 = vmatpush1.msra.mxu0 0.0
        %2878 = vmatprep.subr.mxu0 0.0
        %2879 = vmatpush1.msra.mxu0 0.0
        %2880 = vmatprep.subr.mxu0 0.0
        %2881 = vmatpush1.msra.mxu0 0.0
        %2882 = vmatprep.subr.mxu0 0.0
        %2883 = vmatpush1.msra.mxu0 0.0
        %2884 = vmatprep.subr.mxu0 0.0
        %2885 = vmatpush1.msra.mxu0 0.0
        %2886 = vmatprep.subr.mxu0 0.0
        %2887 = vmatpush1.msra.mxu0 0.0
        %2888 = vmatprep.subr.mxu0 0.0
        %2889 = vmatpush1.msra.mxu0 0.0
        %2890 = vmatprep.subr.mxu0 0.0
        %2891 = vmatpush1.msra.mxu0 0.0
        %2892 = vmatprep.subr.mxu0 0.0
        %2893 = vmatpush1.msra.mxu0 0.0
        %2894 = vmatprep.subr.mxu0 0.0
        %2895 = vmatpush1.msra.mxu0 0.0
        %2896 = vmatprep.subr.mxu0 0.0
        %2897 = vmatpush1.msra.mxu0 0.0
        %2898 = vmatprep.subr.mxu0 0.0
        %2899 = vmatpush1.msra.mxu0 0.0
        %2900 = vmatprep.subr.mxu0 0.0
        %2901 = vmatpush1.msra.mxu0 0.0
        %2902 = vmatprep.subr.mxu0 0.0
        %2903 = vmatpush1.msra.mxu0 0.0
        %2904 = vmatprep.subr.mxu0 0.0
        %2905 = vmatpush1.msra.mxu0 0.0
        %2906 = vmatprep.subr.mxu0 0.0
        %2907 = vmatpush1.msra.mxu0 0.0
        %2908 = vmatprep.subr.mxu0 0.0
        %2909 = vmatpush1.msra.mxu0 0.0
        %2910 = vmatprep.subr.mxu0 0.0
        %2911 = vmatpush1.msra.mxu0 0.0
        %2912 = vmatprep.subr.mxu0 0.0
        %2913 = vmatpush1.msra.mxu0 0.0
        %2914 = vmatprep.subr.mxu0 0.0
        %2915 = vmatpush1.msra.mxu0 0.0
        %2916 = vmatprep.subr.mxu0 0.0
        %2917 = vmatpush1.msra.mxu0 0.0
        %2918 = vmatprep.subr.mxu0 0.0
        %2919 = vmatpush1.msra.mxu0 0.0
        %2920 = vmatprep.subr.mxu0 0.0
        %2921 = vmatpush1.msra.mxu0 0.0
        %2922 = vmatprep.mubr.f32.mxu0 0.0
        %2923 = vmatmul.mubr.f32.gmra.mrb[0].mxu0 %v2852
        %v2924 = vpop.f32.mrb[0].mxu0
        %v2925 = vadd.f32 0.0, %v2924
        %v2926 = vpop.f32.mrb[0].mxu0
        %2927 = vmatprep.mubr.f32.mxu0 0.0
        %2928 = vmatmul.mubr.f32.gmra.mrb[0].mxu0 %v2854
        %v2929 = vpop.f32.mrb[0].mxu0
        %v2930 = vadd.f32 0.0, %v2929
        %v2931 = vpop.f32.mrb[0].mxu0
        %2932 = vmatprep.mubr.f32.mxu0 0.0
        %2933 = vmatmul.mubr.f32.gmra.mrb[0].mxu0 %v2856
        %v2934 = vpop.f32.mrb[0].mxu0
        %v2935 = vadd.f32 0.0, %v2934
        %v2936 = vpop.f32.mrb[0].mxu0
        %2937 = vdwg.mxu0
        %v2938 = vsel %vm773, %v754, 0
        %2940 = vmatprep.subr.mxu0 0.0
        %2941 = vmatpush1.msra.mxu0 %v2844
        %2942 = vmatprep.subr.mxu0 0.0
        %2943 = vmatpush1.msra.mxu0 0.0
        %2944 = vmatprep.subr.mxu0 0.0
        %2945 = vmatpush1.msra.mxu0 0.0
        %2946 = vmatprep.subr.mxu0 0.0
        %2947 = vmatpush1.msra.mxu0 0.0
        %2948 = vmatprep.subr.mxu0 0.0
        %2949 = vmatpush1.msra.mxu0 0.0
        %2950 = vmatprep.subr.mxu0 0.0
        %2951 = vmatpush1.msra.mxu0 0.0
        %2952 = vmatprep.subr.mxu0 0.0
        %2953 = vmatpush1.msra.mxu0 0.0
        %2954 = vmatprep.subr.mxu0 0.0
        %2955 = vmatpush1.msra.mxu0 0.0
        %2956 = vmatprep.subr.mxu0 0.0
        %2957 = vmatpush1.msra.mxu0 0.0
        %2958 = vmatprep.subr.mxu0 0.0
        %2959 = vmatpush1.msra.mxu0 0.0
        %2960 = vmatprep.subr.mxu0 0.0
        %2961 = vmatpush1.msra.mxu0 0.0
        %2962 = vmatprep.subr.mxu0 0.0
        %2963 = vmatpush1.msra.mxu0 0.0
        %2964 = vmatprep.subr.mxu0 0.0
        %2965 = vmatpush1.msra.mxu0 0.0
        %2966 = vmatprep.subr.mxu0 0.0
        %2967 = vmatpush1.msra.mxu0 0.0
        %2968 = vmatprep.subr.mxu0 0.0
        %2969 = vmatpush1.msra.mxu0 0.0
        %2970 = vmatprep.subr.mxu0 0.0
        %2971 = vmatpush1.msra.mxu0 0.0
        %2972 = vmatprep.subr.mxu0 0.0
        %2973 = vmatpush1.msra.mxu0 0.0
        %2974 = vmatprep.subr.mxu0 0.0
        %2975 = vmatpush1.msra.mxu0 0.0
        %2976 = vmatprep.subr.mxu0 0.0
        %2977 = vmatpush1.msra.mxu0 0.0
        %2978 = vmatprep.subr.mxu0 0.0
        %2979 = vmatpush1.msra.mxu0 0.0
        %2980 = vmatprep.subr.mxu0 0.0
        %2981 = vmatpush1.msra.mxu0 0.0
        %2982 = vmatprep.subr.mxu0 0.0
        %2983 = vmatpush1.msra.mxu0 0.0
        %2984 = vmatprep.subr.mxu0 0.0
        %2985 = vmatpush1.msra.mxu0 0.0
        %2986 = vmatprep.subr.mxu0 0.0
        %2987 = vmatpush1.msra.mxu0 0.0
        %2988 = vmatprep.subr.mxu0 0.0
        %2989 = vmatpush1.msra.mxu0 0.0
        %2990 = vmatprep.subr.mxu0 0.0
        %2991 = vmatpush1.msra.mxu0 0.0
        %2992 = vmatprep.subr.mxu0 0.0
        %2993 = vmatpush1.msra.mxu0 0.0
        %2994 = vmatprep.subr.mxu0 0.0
        %2995 = vmatpush1.msra.mxu0 0.0
        %2996 = vmatprep.subr.mxu0 0.0
        %2997 = vmatpush1.msra.mxu0 0.0
        %2998 = vmatprep.subr.mxu0 0.0
        %2999 = vmatpush1.msra.mxu0 0.0
        %3000 = vmatprep.subr.mxu0 0.0
        %3001 = vmatpush1.msra.mxu0 0.0
        %3002 = vmatprep.subr.mxu0 0.0
        %3003 = vmatpush1.msra.mxu0 0.0
        %3004 = vmatprep.mubr.f32.mxu0 0.0
        %3005 = vmatmul.mubr.f32.gmra.mrb[0].mxu0 %v2938
        %v3006 = vpop.f32.mrb[0].mxu0
        %v3007 = vadd.f32 %v2925, %v3006
        %v3008 = vpop.f32.mrb[0].mxu0
        %3009 = vmatprep.mubr.f32.mxu0 0.0
        %3010 = vmatmul.mubr.f32.gmra.mrb[0].mxu0 %v954
        %v3011 = vpop.f32.mrb[0].mxu0
        %v3012 = vadd.f32 %v2930, %v3011
        %v3013 = vpop.f32.mrb[0].mxu0
        %3014 = vmatprep.mubr.f32.mxu0 0.0
        %3015 = vmatmul.mubr.f32.gmra.mrb[0].mxu0 %v956
        %v3016 = vpop.f32.mrb[0].mxu0
        %v3017 = vadd.f32 %v2935, %v3016
        %v3018 = vpop.f32.mrb[0].mxu0
        %3019 = vdwg.mxu0
        %s3020 = scalar_lea.vmem %s14, 16
        %v3021 = vld [vmem:[%s3020] sm:$0xff]
        %3022 = vmatprep.subr.mxu0 0.0
        %3023 = vmatpush1.msra.mxu0 %v3021
        %3024 = vmatprep.subr.mxu0 0.0
        %3025 = vmatpush1.msra.mxu0 0.0
        %3026 = vmatprep.subr.mxu0 0.0
        %3027 = vmatpush1.msra.mxu0 0.0
        %3028 = vmatprep.subr.mxu0 0.0
        %3029 = vmatpush1.msra.mxu0 0.0
        %3030 = vmatprep.subr.mxu0 0.0
        %3031 = vmatpush1.msra.mxu0 0.0
        %3032 = vmatprep.subr.mxu0 0.0
        %3033 = vmatpush1.msra.mxu0 0.0
        %3034 = vmatprep.subr.mxu0 0.0
        %3035 = vmatpush1.msra.mxu0 0.0
        %3036 = vmatprep.subr.mxu0 0.0
        %3037 = vmatpush1.msra.mxu0 0.0
        %3038 = vmatprep.subr.mxu0 0.0
        %3039 = vmatpush1.msra.mxu0 0.0
        %3040 = vmatprep.subr.mxu0 0.0
        %3041 = vmatpush1.msra.mxu0 0.0
        %3042 = vmatprep.subr.mxu0 0.0
        %3043 = vmatpush1.msra.mxu0 0.0
        %3044 = vmatprep.subr.mxu0 0.0
        %3045 = vmatpush1.msra.mxu0 0.0
        %3046 = vmatprep.subr.mxu0 0.0
        %3047 = vmatpush1.msra.mxu0 0.0
        %3048 = vmatprep.subr.mxu0 0.0
        %3049 = vmatpush1.msra.mxu0 0.0
        %3050 = vmatprep.subr.mxu0 0.0
        %3051 = vmatpush1.msra.mxu0 0.0
        %3052 = vmatprep.subr.mxu0 0.0
        %3053 = vmatpush1.msra.mxu0 0.0
        %3054 = vmatprep.subr.mxu0 0.0
        %3055 = vmatpush1.msra.mxu0 0.0
        %3056 = vmatprep.subr.mxu0 0.0
        %3057 = vmatpush1.msra.mxu0 0.0
        %3058 = vmatprep.subr.mxu0 0.0
        %3059 = vmatpush1.msra.mxu0 0.0
        %3060 = vmatprep.subr.mxu0 0.0
        %3061 = vmatpush1.msra.mxu0 0.0
        %3062 = vmatprep.subr.mxu0 0.0
        %3063 = vmatpush1.msra.mxu0 0.0
        %3064 = vmatprep.subr.mxu0 0.0
        %3065 = vmatpush1.msra.mxu0 0.0
        %3066 = vmatprep.subr.mxu0 0.0
        %3067 = vmatpush1.msra.mxu0 0.0
        %3068 = vmatprep.subr.mxu0 0.0
        %3069 = vmatpush1.msra.mxu0 0.0
        %3070 = vmatprep.subr.mxu0 0.0
        %3071 = vmatpush1.msra.mxu0 0.0
        %3072 = vmatprep.subr.mxu0 0.0
        %3073 = vmatpush1.msra.mxu0 0.0
        %3074 = vmatprep.subr.mxu0 0.0
        %3075 = vmatpush1.msra.mxu0 0.0
        %3076 = vmatprep.subr.mxu0 0.0
        %3077 = vmatpush1.msra.mxu0 0.0
        %3078 = vmatprep.subr.mxu0 0.0
        %3079 = vmatpush1.msra.mxu0 0.0
        %3080 = vmatprep.subr.mxu0 0.0
        %3081 = vmatpush1.msra.mxu0 0.0
        %3082 = vmatprep.subr.mxu0 0.0
        %3083 = vmatpush1.msra.mxu0 0.0
        %3084 = vmatprep.subr.mxu0 0.0
        %3085 = vmatpush1.msra.mxu0 0.0
        %3086 = vmatprep.mubr.f32.mxu0 0.0
        %3087 = vmatmul.mubr.f32.gmra.mrb[0].mxu0 %v866
        %v3088 = vpop.f32.mrb[0].mxu0
        %v3089 = vadd.f32 0.0, %v3088
        %v3090 = vpop.f32.mrb[0].mxu0
        %3091 = vmatprep.mubr.f32.mxu0 0.0
        %3092 = vmatmul.mubr.f32.gmra.mrb[0].mxu0 %v868
        %v3093 = vpop.f32.mrb[0].mxu0
        %v3094 = vadd.f32 0.0, %v3093
        %v3095 = vpop.f32.mrb[0].mxu0
        %3096 = vmatprep.mubr.f32.mxu0 0.0
        %3097 = vmatmul.mubr.f32.gmra.mrb[0].mxu0 %v2104
        %v3098 = vpop.f32.mrb[0].mxu0
        %v3099 = vadd.f32 0.0, %v3098
        %v3100 = vpop.f32.mrb[0].mxu0
        %3101 = vdwg.mxu0
        %v3102 = vadd.f32 %v3007, %v3089
        %v3103 = vadd.f32 %v3012, %v3094
        %v3104 = vadd.f32 %v3017, %v3099
        %s3105 = scalar_lea.vmem %s14, 24
        %v3106 = vld [vmem:[%s3105] sm:$0xff]
        %3107 = vmatprep.subr.mxu0 0.0
        %3108 = vmatpush1.msra.mxu0 %v3106
        %3109 = vmatprep.subr.mxu0 0.0
        %3110 = vmatpush1.msra.mxu0 0.0
        %3111 = vmatprep.subr.mxu0 0.0
        %3112 = vmatpush1.msra.mxu0 0.0
        %3113 = vmatprep.subr.mxu0 0.0
        %3114 = vmatpush1.msra.mxu0 0.0
        %3115 = vmatprep.subr.mxu0 0.0
        %3116 = vmatpush1.msra.mxu0 0.0
        %3117 = vmatprep.subr.mxu0 0.0
        %3118 = vmatpush1.msra.mxu0 0.0
        %3119 = vmatprep.subr.mxu0 0.0
        %3120 = vmatpush1.msra.mxu0 0.0
        %3121 = vmatprep.subr.mxu0 0.0
        %3122 = vmatpush1.msra.mxu0 0.0
        %3123 = vmatprep.subr.mxu0 0.0
        %3124 = vmatpush1.msra.mxu0 0.0
        %3125 = vmatprep.subr.mxu0 0.0
        %3126 = vmatpush1.msra.mxu0 0.0
        %3127 = vmatprep.subr.mxu0 0.0
        %3128 = vmatpush1.msra.mxu0 0.0
        %3129 = vmatprep.subr.mxu0 0.0
        %3130 = vmatpush1.msra.mxu0 0.0
        %3131 = vmatprep.subr.mxu0 0.0
        %3132 = vmatpush1.msra.mxu0 0.0
        %3133 = vmatprep.subr.mxu0 0.0
        %3134 = vmatpush1.msra.mxu0 0.0
        %3135 = vmatprep.subr.mxu0 0.0
        %3136 = vmatpush1.msra.mxu0 0.0
        %3137 = vmatprep.subr.mxu0 0.0
        %3138 = vmatpush1.msra.mxu0 0.0
        %3139 = vmatprep.subr.mxu0 0.0
        %3140 = vmatpush1.msra.mxu0 0.0
        %3141 = vmatprep.subr.mxu0 0.0
        %3142 = vmatpush1.msra.mxu0 0.0
        %3143 = vmatprep.subr.mxu0 0.0
        %3144 = vmatpush1.msra.mxu0 0.0
        %3145 = vmatprep.subr.mxu0 0.0
        %3146 = vmatpush1.msra.mxu0 0.0
        %3147 = vmatprep.subr.mxu0 0.0
        %3148 = vmatpush1.msra.mxu0 0.0
        %3149 = vmatprep.subr.mxu0 0.0
        %3150 = vmatpush1.msra.mxu0 0.0
        %3151 = vmatprep.subr.mxu0 0.0
        %3152 = vmatpush1.msra.mxu0 0.0
        %3153 = vmatprep.subr.mxu0 0.0
        %3154 = vmatpush1.msra.mxu0 0.0
        %3155 = vmatprep.subr.mxu0 0.0
        %3156 = vmatpush1.msra.mxu0 0.0
        %3157 = vmatprep.subr.mxu0 0.0
        %3158 = vmatpush1.msra.mxu0 0.0
        %3159 = vmatprep.subr.mxu0 0.0
        %3160 = vmatpush1.msra.mxu0 0.0
        %3161 = vmatprep.subr.mxu0 0.0
        %3162 = vmatpush1.msra.mxu0 0.0
        %3163 = vmatprep.subr.mxu0 0.0
        %3164 = vmatpush1.msra.mxu0 0.0
        %3165 = vmatprep.subr.mxu0 0.0
        %3166 = vmatpush1.msra.mxu0 0.0
        %3167 = vmatprep.subr.mxu0 0.0
        %3168 = vmatpush1.msra.mxu0 0.0
        %3169 = vmatprep.subr.mxu0 0.0
        %3170 = vmatpush1.msra.mxu0 0.0
        %3171 = vmatprep.mubr.f32.mxu0 0.0
        %3172 = vmatmul.mubr.f32.gmra.mrb[0].mxu0 %v1542
        %v3173 = vpop.f32.mrb[0].mxu0
        %v3174 = vadd.f32 0.0, %v3173
        %v3175 = vpop.f32.mrb[0].mxu0
        %3176 = vmatprep.mubr.f32.mxu0 0.0
        %3177 = vmatmul.mubr.f32.gmra.mrb[0].mxu0 %v1544
        %v3178 = vpop.f32.mrb[0].mxu0
        %v3179 = vadd.f32 0.0, %v3178
        %v3180 = vpop.f32.mrb[0].mxu0
        %3181 = vmatprep.mubr.f32.mxu0 0.0
        %3182 = vmatmul.mubr.f32.gmra.mrb[0].mxu0 %v1546
        %v3183 = vpop.f32.mrb[0].mxu0
        %v3184 = vadd.f32 0.0, %v3183
        %v3185 = vpop.f32.mrb[0].mxu0
        %3186 = vdwg.mxu0
        %v3187 = vadd.f32 %v3102, %v3174
        %v3188 = vadd.f32 %v3103, %v3179
        %v3189 = vadd.f32 %v3104, %v3184
        %s3190 = scalar_lea.vmem %s14, 32
        %v3191 = vld [vmem:[%s3190] sm:$0xff]
        %v3192 = vrot.slane %v757, 4
        %v3193 = vsel %vm2008, %v2012, %v3192
        %v3194 = vsel %vm773, %v3193, 0
        %v3196 = vsel %vm773, %v3192, 0
        %3198 = vmatprep.subr.mxu0 0.0
        %3199 = vmatpush1.msra.mxu0 %v3191
        %3200 = vmatprep.subr.mxu0 0.0
        %3201 = vmatpush1.msra.mxu0 0.0
        %3202 = vmatprep.subr.mxu0 0.0
        %3203 = vmatpush1.msra.mxu0 0.0
        %3204 = vmatprep.subr.mxu0 0.0
        %3205 = vmatpush1.msra.mxu0 0.0
        %3206 = vmatprep.subr.mxu0 0.0
        %3207 = vmatpush1.msra.mxu0 0.0
        %3208 = vmatprep.subr.mxu0 0.0
        %3209 = vmatpush1.msra.mxu0 0.0
        %3210 = vmatprep.subr.mxu0 0.0
        %3211 = vmatpush1.msra.mxu0 0.0
        %3212 = vmatprep.subr.mxu0 0.0
        %3213 = vmatpush1.msra.mxu0 0.0
        %3214 = vmatprep.subr.mxu0 0.0
        %3215 = vmatpush1.msra.mxu0 0.0
        %3216 = vmatprep.subr.mxu0 0.0
        %3217 = vmatpush1.msra.mxu0 0.0
        %3218 = vmatprep.subr.mxu0 0.0
        %3219 = vmatpush1.msra.mxu0 0.0
        %3220 = vmatprep.subr.mxu0 0.0
        %3221 = vmatpush1.msra.mxu0 0.0
        %3222 = vmatprep.subr.mxu0 0.0
        %3223 = vmatpush1.msra.mxu0 0.0
        %3224 = vmatprep.subr.mxu0 0.0
        %3225 = vmatpush1.msra.mxu0 0.0
        %3226 = vmatprep.subr.mxu0 0.0
        %3227 = vmatpush1.msra.mxu0 0.0
        %3228 = vmatprep.subr.mxu0 0.0
        %3229 = vmatpush1.msra.mxu0 0.0
        %3230 = vmatprep.subr.mxu0 0.0
        %3231 = vmatpush1.msra.mxu0 0.0
        %3232 = vmatprep.subr.mxu0 0.0
        %3233 = vmatpush1.msra.mxu0 0.0
        %3234 = vmatprep.subr.mxu0 0.0
        %3235 = vmatpush1.msra.mxu0 0.0
        %3236 = vmatprep.subr.mxu0 0.0
        %3237 = vmatpush1.msra.mxu0 0.0
        %3238 = vmatprep.subr.mxu0 0.0
        %3239 = vmatpush1.msra.mxu0 0.0
        %3240 = vmatprep.subr.mxu0 0.0
        %3241 = vmatpush1.msra.mxu0 0.0
        %3242 = vmatprep.subr.mxu0 0.0
        %3243 = vmatpush1.msra.mxu0 0.0
        %3244 = vmatprep.subr.mxu0 0.0
        %3245 = vmatpush1.msra.mxu0 0.0
        %3246 = vmatprep.subr.mxu0 0.0
        %3247 = vmatpush1.msra.mxu0 0.0
        %3248 = vmatprep.subr.mxu0 0.0
        %3249 = vmatpush1.msra.mxu0 0.0
        %3250 = vmatprep.subr.mxu0 0.0
        %3251 = vmatpush1.msra.mxu0 0.0
        %3252 = vmatprep.subr.mxu0 0.0
        %3253 = vmatpush1.msra.mxu0 0.0
        %3254 = vmatprep.subr.mxu0 0.0
        %3255 = vmatpush1.msra.mxu0 0.0
        %3256 = vmatprep.subr.mxu0 0.0
        %3257 = vmatpush1.msra.mxu0 0.0
        %3258 = vmatprep.subr.mxu0 0.0
        %3259 = vmatpush1.msra.mxu0 0.0
        %3260 = vmatprep.subr.mxu0 0.0
        %3261 = vmatpush1.msra.mxu0 0.0
        %3262 = vmatprep.mubr.f32.mxu0 0.0
        %3263 = vmatmul.mubr.f32.gmra.mrb[0].mxu0 %v2016
        %v3264 = vpop.f32.mrb[0].mxu0
        %v3265 = vadd.f32 0.0, %v3264
        %v3266 = vpop.f32.mrb[0].mxu0
        %3267 = vmatprep.mubr.f32.mxu0 0.0
        %3268 = vmatmul.mubr.f32.gmra.mrb[0].mxu0 %v3194
        %v3269 = vpop.f32.mrb[0].mxu0
        %v3270 = vadd.f32 0.0, %v3269
        %v3271 = vpop.f32.mrb[0].mxu0
        %3272 = vmatprep.mubr.f32.mxu0 0.0
        %3273 = vmatmul.mubr.f32.gmra.mrb[0].mxu0 %v3196
        %v3274 = vpop.f32.mrb[0].mxu0
        %v3275 = vadd.f32 0.0, %v3274
        %v3276 = vpop.f32.mrb[0].mxu0
        %3277 = vdwg.mxu0
        %v3278 = vadd.f32 %v3187, %v3265
        %v3279 = vadd.f32 %v3188, %v3270
        %v3280 = vadd.f32 %v3189, %v3275
        %v3281 = vld [vmem:[%s15] sm:$0x1]
        %v3283 = vlaneseq
        %v3284 = vshrl.u32 %v3283, 7
        %v3285 = vsub.s32 0, %v3284
        %v3286 = vrot.slane %v3281, %v3285
        %v3288 = vadd.f32 %v3278, %v3286
        %v3289 = vadd.f32 %v3279, %v3286
        %v3290 = vadd.f32 %v3280, %v3286
        %vm3291 = vcmp.ge.f32.partialorder %v3288, 0.0
        %vm3292 = vcmp.ge.f32.partialorder %v3289, 0.0
        %vm3293 = vcmp.ge.f32.partialorder %v3290, 0.0
        %v3294 = vmul.f32 %v3288, 0.01
        %v3295 = vmul.f32 %v3289, 0.01
        %v3296 = vmul.f32 %v3290, 0.01
        %v3297 = vsel %vm3291, %v3288, %v3294
        %v3298 = vsel %vm3292, %v3289, %v3295
        %v3299 = vsel %vm3293, %v3290, %v3296
        %v3300 = vsel %vm2393, %v3297, 0.0
        %v3301 = vsel %vm2394, %v3298, 0.0
        %v3302 = vsel %vm2395, %v3299, 0.0
        %v3303 = vld [vmem:[%s16] sm:$0xff]
        %s3304 = scalar_lea.vmem %s16, 8
        %v3305 = vld [vmem:[%s3304] sm:$0xff]
        %v3309 = vrot.slane %v3300, 1
        %v3310 = vrot.slane %v3301, 1
        %v3311 = vsel %vm1098, %v3309, %v3310
        %v3312 = vrot.slane %v3302, 1
        %v3313 = vsel %vm1098, %v3310, %v3312
        %v3314 = vsel %vm773, %v3311, 0
        %v3316 = vsel %vm773, %v3313, 0
        %3318 = vmatprep.subr.mxu0 0.0
        %3319 = vmatpush1.msra.mxu0 %v3305
        %3320 = vmatprep.subr.mxu0 0.0
        %3321 = vmatpush1.msra.mxu0 0.0
        %3322 = vmatprep.subr.mxu0 0.0
        %3323 = vmatpush1.msra.mxu0 0.0
        %3324 = vmatprep.subr.mxu0 0.0
        %3325 = vmatpush1.msra.mxu0 0.0
        %3326 = vmatprep.subr.mxu0 0.0
        %3327 = vmatpush1.msra.mxu0 0.0
        %3328 = vmatprep.subr.mxu0 0.0
        %3329 = vmatpush1.msra.mxu0 0.0
        %3330 = vmatprep.subr.mxu0 0.0
        %3331 = vmatpush1.msra.mxu0 0.0
        %3332 = vmatprep.subr.mxu0 0.0
        %3333 = vmatpush1.msra.mxu0 0.0
        %3334 = vmatprep.subr.mxu0 0.0
        %3335 = vmatpush1.msra.mxu0 0.0
        %3336 = vmatprep.subr.mxu0 0.0
        %3337 = vmatpush1.msra.mxu0 0.0
        %3338 = vmatprep.subr.mxu0 0.0
        %3339 = vmatpush1.msra.mxu0 0.0
        %3340 = vmatprep.subr.mxu0 0.0
        %3341 = vmatpush1.msra.mxu0 0.0
        %3342 = vmatprep.subr.mxu0 0.0
        %3343 = vmatpush1.msra.mxu0 0.0
        %3344 = vmatprep.subr.mxu0 0.0
        %3345 = vmatpush1.msra.mxu0 0.0
        %3346 = vmatprep.subr.mxu0 0.0
        %3347 = vmatpush1.msra.mxu0 0.0
        %3348 = vmatprep.subr.mxu0 0.0
        %3349 = vmatpush1.msra.mxu0 0.0
        %3350 = vmatprep.subr.mxu0 0.0
        %3351 = vmatpush1.msra.mxu0 0.0
        %3352 = vmatprep.subr.mxu0 0.0
        %3353 = vmatpush1.msra.mxu0 0.0
        %3354 = vmatprep.subr.mxu0 0.0
        %3355 = vmatpush1.msra.mxu0 0.0
        %3356 = vmatprep.subr.mxu0 0.0
        %3357 = vmatpush1.msra.mxu0 0.0
        %3358 = vmatprep.subr.mxu0 0.0
        %3359 = vmatpush1.msra.mxu0 0.0
        %3360 = vmatprep.subr.mxu0 0.0
        %3361 = vmatpush1.msra.mxu0 0.0
        %3362 = vmatprep.subr.mxu0 0.0
        %3363 = vmatpush1.msra.mxu0 0.0
        %3364 = vmatprep.subr.mxu0 0.0
        %3365 = vmatpush1.msra.mxu0 0.0
        %3366 = vmatprep.subr.mxu0 0.0
        %3367 = vmatpush1.msra.mxu0 0.0
        %3368 = vmatprep.subr.mxu0 0.0
        %3369 = vmatpush1.msra.mxu0 0.0
        %3370 = vmatprep.subr.mxu0 0.0
        %3371 = vmatpush1.msra.mxu0 0.0
        %3372 = vmatprep.subr.mxu0 0.0
        %3373 = vmatpush1.msra.mxu0 0.0
        %3374 = vmatprep.subr.mxu0 0.0
        %3375 = vmatpush1.msra.mxu0 0.0
        %3376 = vmatprep.subr.mxu0 0.0
        %3377 = vmatpush1.msra.mxu0 0.0
        %3378 = vmatprep.subr.mxu0 0.0
        %3379 = vmatpush1.msra.mxu0 0.0
        %3380 = vmatprep.subr.mxu0 0.0
        %3381 = vmatpush1.msra.mxu0 0.0
        %3382 = vmatprep.mubr.f32.mxu0 0.0
        %3383 = vmatmul.mubr.f32.gmra.mrb[0].mxu0 %v3314
        %v3384 = vpop.f32.mrb[0].mxu0
        %v3385 = vadd.f32 0.0, %v3384
        %v3386 = vpop.f32.mrb[0].mxu0
        %3387 = vmatprep.mubr.f32.mxu0 0.0
        %3388 = vmatmul.mubr.f32.gmra.mrb[0].mxu0 %v3316
        %v3389 = vpop.f32.mrb[0].mxu0
        %v3390 = vadd.f32 0.0, %v3389
        %v3391 = vpop.f32.mrb[0].mxu0
        %3392 = vdwg.mxu0
        %v3393 = vsel %vm773, %v3300, 0
        %v3395 = vsel %vm773, %v3301, 0
        %3397 = vmatprep.subr.mxu0 0.0
        %3398 = vmatpush1.msra.mxu0 %v3303
        %3399 = vmatprep.subr.mxu0 0.0
        %3400 = vmatpush1.msra.mxu0 0.0
        %3401 = vmatprep.subr.mxu0 0.0
        %3402 = vmatpush1.msra.mxu0 0.0
        %3403 = vmatprep.subr.mxu0 0.0
        %3404 = vmatpush1.msra.mxu0 0.0
        %3405 = vmatprep.subr.mxu0 0.0
        %3406 = vmatpush1.msra.mxu0 0.0
        %3407 = vmatprep.subr.mxu0 0.0
        %3408 = vmatpush1.msra.mxu0 0.0
        %3409 = vmatprep.subr.mxu0 0.0
        %3410 = vmatpush1.msra.mxu0 0.0
        %3411 = vmatprep.subr.mxu0 0.0
        %3412 = vmatpush1.msra.mxu0 0.0
        %3413 = vmatprep.subr.mxu0 0.0
        %3414 = vmatpush1.msra.mxu0 0.0
        %3415 = vmatprep.subr.mxu0 0.0
        %3416 = vmatpush1.msra.mxu0 0.0
        %3417 = vmatprep.subr.mxu0 0.0
        %3418 = vmatpush1.msra.mxu0 0.0
        %3419 = vmatprep.subr.mxu0 0.0
        %3420 = vmatpush1.msra.mxu0 0.0
        %3421 = vmatprep.subr.mxu0 0.0
        %3422 = vmatpush1.msra.mxu0 0.0
        %3423 = vmatprep.subr.mxu0 0.0
        %3424 = vmatpush1.msra.mxu0 0.0
        %3425 = vmatprep.subr.mxu0 0.0
        %3426 = vmatpush1.msra.mxu0 0.0
        %3427 = vmatprep.subr.mxu0 0.0
        %3428 = vmatpush1.msra.mxu0 0.0
        %3429 = vmatprep.subr.mxu0 0.0
        %3430 = vmatpush1.msra.mxu0 0.0
        %3431 = vmatprep.subr.mxu0 0.0
        %3432 = vmatpush1.msra.mxu0 0.0
        %3433 = vmatprep.subr.mxu0 0.0
        %3434 = vmatpush1.msra.mxu0 0.0
        %3435 = vmatprep.subr.mxu0 0.0
        %3436 = vmatpush1.msra.mxu0 0.0
        %3437 = vmatprep.subr.mxu0 0.0
        %3438 = vmatpush1.msra.mxu0 0.0
        %3439 = vmatprep.subr.mxu0 0.0
        %3440 = vmatpush1.msra.mxu0 0.0
        %3441 = vmatprep.subr.mxu0 0.0
        %3442 = vmatpush1.msra.mxu0 0.0
        %3443 = vmatprep.subr.mxu0 0.0
        %3444 = vmatpush1.msra.mxu0 0.0
        %3445 = vmatprep.subr.mxu0 0.0
        %3446 = vmatpush1.msra.mxu0 0.0
        %3447 = vmatprep.subr.mxu0 0.0
        %3448 = vmatpush1.msra.mxu0 0.0
        %3449 = vmatprep.subr.mxu0 0.0
        %3450 = vmatpush1.msra.mxu0 0.0
        %3451 = vmatprep.subr.mxu0 0.0
        %3452 = vmatpush1.msra.mxu0 0.0
        %3453 = vmatprep.subr.mxu0 0.0
        %3454 = vmatpush1.msra.mxu0 0.0
        %3455 = vmatprep.subr.mxu0 0.0
        %3456 = vmatpush1.msra.mxu0 0.0
        %3457 = vmatprep.subr.mxu0 0.0
        %3458 = vmatpush1.msra.mxu0 0.0
        %3459 = vmatprep.subr.mxu0 0.0
        %3460 = vmatpush1.msra.mxu0 0.0
        %3461 = vmatprep.mubr.f32.mxu0 0.0
        %3462 = vmatmul.mubr.f32.gmra.mrb[0].mxu0 %v3393
        %v3463 = vpop.f32.mrb[0].mxu0
        %v3464 = vadd.f32 %v3385, %v3463
        %v3465 = vpop.f32.mrb[0].mxu0
        %3466 = vmatprep.mubr.f32.mxu0 0.0
        %3467 = vmatmul.mubr.f32.gmra.mrb[0].mxu0 %v3395
        %v3468 = vpop.f32.mrb[0].mxu0
        %v3469 = vadd.f32 %v3390, %v3468
        %v3470 = vpop.f32.mrb[0].mxu0
        %3471 = vdwg.mxu0
        %s3472 = scalar_lea.vmem %s16, 16
        %v3473 = vld [vmem:[%s3472] sm:$0xff]
        %v3474 = vrot.slane %v3300, 2
        %v3475 = vrot.slane %v3301, 2
        %v3476 = vsel %vm1264, %v3474, %v3475
        %v3477 = vrot.slane %v3302, 2
        %v3478 = vsel %vm1264, %v3475, %v3477
        %v3479 = vsel %vm773, %v3476, 0
        %v3481 = vsel %vm773, %v3478, 0
        %3483 = vmatprep.subr.mxu0 0.0
        %3484 = vmatpush1.msra.mxu0 %v3473
        %3485 = vmatprep.subr.mxu0 0.0
        %3486 = vmatpush1.msra.mxu0 0.0
        %3487 = vmatprep.subr.mxu0 0.0
        %3488 = vmatpush1.msra.mxu0 0.0
        %3489 = vmatprep.subr.mxu0 0.0
        %3490 = vmatpush1.msra.mxu0 0.0
        %3491 = vmatprep.subr.mxu0 0.0
        %3492 = vmatpush1.msra.mxu0 0.0
        %3493 = vmatprep.subr.mxu0 0.0
        %3494 = vmatpush1.msra.mxu0 0.0
        %3495 = vmatprep.subr.mxu0 0.0
        %3496 = vmatpush1.msra.mxu0 0.0
        %3497 = vmatprep.subr.mxu0 0.0
        %3498 = vmatpush1.msra.mxu0 0.0
        %3499 = vmatprep.subr.mxu0 0.0
        %3500 = vmatpush1.msra.mxu0 0.0
        %3501 = vmatprep.subr.mxu0 0.0
        %3502 = vmatpush1.msra.mxu0 0.0
        %3503 = vmatprep.subr.mxu0 0.0
        %3504 = vmatpush1.msra.mxu0 0.0
        %3505 = vmatprep.subr.mxu0 0.0
        %3506 = vmatpush1.msra.mxu0 0.0
        %3507 = vmatprep.subr.mxu0 0.0
        %3508 = vmatpush1.msra.mxu0 0.0
        %3509 = vmatprep.subr.mxu0 0.0
        %3510 = vmatpush1.msra.mxu0 0.0
        %3511 = vmatprep.subr.mxu0 0.0
        %3512 = vmatpush1.msra.mxu0 0.0
        %3513 = vmatprep.subr.mxu0 0.0
        %3514 = vmatpush1.msra.mxu0 0.0
        %3515 = vmatprep.subr.mxu0 0.0
        %3516 = vmatpush1.msra.mxu0 0.0
        %3517 = vmatprep.subr.mxu0 0.0
        %3518 = vmatpush1.msra.mxu0 0.0
        %3519 = vmatprep.subr.mxu0 0.0
        %3520 = vmatpush1.msra.mxu0 0.0
        %3521 = vmatprep.subr.mxu0 0.0
        %3522 = vmatpush1.msra.mxu0 0.0
        %3523 = vmatprep.subr.mxu0 0.0
        %3524 = vmatpush1.msra.mxu0 0.0
        %3525 = vmatprep.subr.mxu0 0.0
        %3526 = vmatpush1.msra.mxu0 0.0
        %3527 = vmatprep.subr.mxu0 0.0
        %3528 = vmatpush1.msra.mxu0 0.0
        %3529 = vmatprep.subr.mxu0 0.0
        %3530 = vmatpush1.msra.mxu0 0.0
        %3531 = vmatprep.subr.mxu0 0.0
        %3532 = vmatpush1.msra.mxu0 0.0
        %3533 = vmatprep.subr.mxu0 0.0
        %3534 = vmatpush1.msra.mxu0 0.0
        %3535 = vmatprep.subr.mxu0 0.0
        %3536 = vmatpush1.msra.mxu0 0.0
        %3537 = vmatprep.subr.mxu0 0.0
        %3538 = vmatpush1.msra.mxu0 0.0
        %3539 = vmatprep.subr.mxu0 0.0
        %3540 = vmatpush1.msra.mxu0 0.0
        %3541 = vmatprep.subr.mxu0 0.0
        %3542 = vmatpush1.msra.mxu0 0.0
        %3543 = vmatprep.subr.mxu0 0.0
        %3544 = vmatpush1.msra.mxu0 0.0
        %3545 = vmatprep.subr.mxu0 0.0
        %3546 = vmatpush1.msra.mxu0 0.0
        %3547 = vmatprep.mubr.f32.mxu0 0.0
        %3548 = vmatmul.mubr.f32.gmra.mrb[0].mxu0 %v3479
        %v3549 = vpop.f32.mrb[0].mxu0
        %v3550 = vadd.f32 0.0, %v3549
        %v3551 = vpop.f32.mrb[0].mxu0
        %3552 = vmatprep.mubr.f32.mxu0 0.0
        %3553 = vmatmul.mubr.f32.gmra.mrb[0].mxu0 %v3481
        %v3554 = vpop.f32.mrb[0].mxu0
        %v3555 = vadd.f32 0.0, %v3554
        %v3556 = vpop.f32.mrb[0].mxu0
        %3557 = vdwg.mxu0
        %v3558 = vadd.f32 %v3464, %v3550
        %v3559 = vadd.f32 %v3469, %v3555
        %s3560 = scalar_lea.vmem %s16, 24
        %v3561 = vld [vmem:[%s3560] sm:$0xff]
        %v3562 = vrot.slane %v3300, 3
        %v3563 = vrot.slane %v3301, 3
        %v3564 = vsel %vm2658, %v3562, %v3563
        %v3565 = vrot.slane %v3302, 3
        %v3566 = vsel %vm2658, %v3563, %v3565
        %v3567 = vsel %vm773, %v3564, 0
        %v3569 = vsel %vm773, %v3566, 0
        %3571 = vmatprep.subr.mxu0 0.0
        %3572 = vmatpush1.msra.mxu0 %v3561
        %3573 = vmatprep.subr.mxu0 0.0
        %3574 = vmatpush1.msra.mxu0 0.0
        %3575 = vmatprep.subr.mxu0 0.0
        %3576 = vmatpush1.msra.mxu0 0.0
        %3577 = vmatprep.subr.mxu0 0.0
        %3578 = vmatpush1.msra.mxu0 0.0
        %3579 = vmatprep.subr.mxu0 0.0
        %3580 = vmatpush1.msra.mxu0 0.0
        %3581 = vmatprep.subr.mxu0 0.0
        %3582 = vmatpush1.msra.mxu0 0.0
        %3583 = vmatprep.subr.mxu0 0.0
        %3584 = vmatpush1.msra.mxu0 0.0
        %3585 = vmatprep.subr.mxu0 0.0
        %3586 = vmatpush1.msra.mxu0 0.0
        %3587 = vmatprep.subr.mxu0 0.0
        %3588 = vmatpush1.msra.mxu0 0.0
        %3589 = vmatprep.subr.mxu0 0.0
        %3590 = vmatpush1.msra.mxu0 0.0
        %3591 = vmatprep.subr.mxu0 0.0
        %3592 = vmatpush1.msra.mxu0 0.0
        %3593 = vmatprep.subr.mxu0 0.0
        %3594 = vmatpush1.msra.mxu0 0.0
        %3595 = vmatprep.subr.mxu0 0.0
        %3596 = vmatpush1.msra.mxu0 0.0
        %3597 = vmatprep.subr.mxu0 0.0
        %3598 = vmatpush1.msra.mxu0 0.0
        %3599 = vmatprep.subr.mxu0 0.0
        %3600 = vmatpush1.msra.mxu0 0.0
        %3601 = vmatprep.subr.mxu0 0.0
        %3602 = vmatpush1.msra.mxu0 0.0
        %3603 = vmatprep.subr.mxu0 0.0
        %3604 = vmatpush1.msra.mxu0 0.0
        %3605 = vmatprep.subr.mxu0 0.0
        %3606 = vmatpush1.msra.mxu0 0.0
        %3607 = vmatprep.subr.mxu0 0.0
        %3608 = vmatpush1.msra.mxu0 0.0
        %3609 = vmatprep.subr.mxu0 0.0
        %3610 = vmatpush1.msra.mxu0 0.0
        %3611 = vmatprep.subr.mxu0 0.0
        %3612 = vmatpush1.msra.mxu0 0.0
        %3613 = vmatprep.subr.mxu0 0.0
        %3614 = vmatpush1.msra.mxu0 0.0
        %3615 = vmatprep.subr.mxu0 0.0
        %3616 = vmatpush1.msra.mxu0 0.0
        %3617 = vmatprep.subr.mxu0 0.0
        %3618 = vmatpush1.msra.mxu0 0.0
        %3619 = vmatprep.subr.mxu0 0.0
        %3620 = vmatpush1.msra.mxu0 0.0
        %3621 = vmatprep.subr.mxu0 0.0
        %3622 = vmatpush1.msra.mxu0 0.0
        %3623 = vmatprep.subr.mxu0 0.0
        %3624 = vmatpush1.msra.mxu0 0.0
        %3625 = vmatprep.subr.mxu0 0.0
        %3626 = vmatpush1.msra.mxu0 0.0
        %3627 = vmatprep.subr.mxu0 0.0
        %3628 = vmatpush1.msra.mxu0 0.0
        %3629 = vmatprep.subr.mxu0 0.0
        %3630 = vmatpush1.msra.mxu0 0.0
        %3631 = vmatprep.subr.mxu0 0.0
        %3632 = vmatpush1.msra.mxu0 0.0
        %3633 = vmatprep.subr.mxu0 0.0
        %3634 = vmatpush1.msra.mxu0 0.0
        %3635 = vmatprep.mubr.f32.mxu0 0.0
        %3636 = vmatmul.mubr.f32.gmra.mrb[0].mxu0 %v3567
        %v3637 = vpop.f32.mrb[0].mxu0
        %v3638 = vadd.f32 0.0, %v3637
        %v3639 = vpop.f32.mrb[0].mxu0
        %3640 = vmatprep.mubr.f32.mxu0 0.0
        %3641 = vmatmul.mubr.f32.gmra.mrb[0].mxu0 %v3569
        %v3642 = vpop.f32.mrb[0].mxu0
        %v3643 = vadd.f32 0.0, %v3642
        %v3644 = vpop.f32.mrb[0].mxu0
        %3645 = vdwg.mxu0
        %v3646 = vadd.f32 %v3558, %v3638
        %v3647 = vadd.f32 %v3559, %v3643
        %s3648 = scalar_lea.vmem %s16, 32
        %v3649 = vld [vmem:[%s3648] sm:$0xff]
        %v3650 = vrot.slane %v3300, 4
        %v3651 = vrot.slane %v3301, 4
        %v3652 = vsel %vm2008, %v3650, %v3651
        %v3653 = vrot.slane %v3302, 4
        %v3654 = vsel %vm2008, %v3651, %v3653
        %v3655 = vsel %vm773, %v3652, 0
        %v3657 = vsel %vm773, %v3654, 0
        %3659 = vmatprep.subr.mxu0 0.0
        %3660 = vmatpush1.msra.mxu0 %v3649
        %3661 = vmatprep.subr.mxu0 0.0
        %3662 = vmatpush1.msra.mxu0 0.0
        %3663 = vmatprep.subr.mxu0 0.0
        %3664 = vmatpush1.msra.mxu0 0.0
        %3665 = vmatprep.subr.mxu0 0.0
        %3666 = vmatpush1.msra.mxu0 0.0
        %3667 = vmatprep.subr.mxu0 0.0
        %3668 = vmatpush1.msra.mxu0 0.0
        %3669 = vmatprep.subr.mxu0 0.0
        %3670 = vmatpush1.msra.mxu0 0.0
        %3671 = vmatprep.subr.mxu0 0.0
        %3672 = vmatpush1.msra.mxu0 0.0
        %3673 = vmatprep.subr.mxu0 0.0
        %3674 = vmatpush1.msra.mxu0 0.0
        %3675 = vmatprep.subr.mxu0 0.0
        %3676 = vmatpush1.msra.mxu0 0.0
        %3677 = vmatprep.subr.mxu0 0.0
        %3678 = vmatpush1.msra.mxu0 0.0
        %3679 = vmatprep.subr.mxu0 0.0
        %3680 = vmatpush1.msra.mxu0 0.0
        %3681 = vmatprep.subr.mxu0 0.0
        %3682 = vmatpush1.msra.mxu0 0.0
        %3683 = vmatprep.subr.mxu0 0.0
        %3684 = vmatpush1.msra.mxu0 0.0
        %3685 = vmatprep.subr.mxu0 0.0
        %3686 = vmatpush1.msra.mxu0 0.0
        %3687 = vmatprep.subr.mxu0 0.0
        %3688 = vmatpush1.msra.mxu0 0.0
        %3689 = vmatprep.subr.mxu0 0.0
        %3690 = vmatpush1.msra.mxu0 0.0
        %3691 = vmatprep.subr.mxu0 0.0
        %3692 = vmatpush1.msra.mxu0 0.0
        %3693 = vmatprep.subr.mxu0 0.0
        %3694 = vmatpush1.msra.mxu0 0.0
        %3695 = vmatprep.subr.mxu0 0.0
        %3696 = vmatpush1.msra.mxu0 0.0
        %3697 = vmatprep.subr.mxu0 0.0
        %3698 = vmatpush1.msra.mxu0 0.0
        %3699 = vmatprep.subr.mxu0 0.0
        %3700 = vmatpush1.msra.mxu0 0.0
        %3701 = vmatprep.subr.mxu0 0.0
        %3702 = vmatpush1.msra.mxu0 0.0
        %3703 = vmatprep.subr.mxu0 0.0
        %3704 = vmatpush1.msra.mxu0 0.0
        %3705 = vmatprep.subr.mxu0 0.0
        %3706 = vmatpush1.msra.mxu0 0.0
        %3707 = vmatprep.subr.mxu0 0.0
        %3708 = vmatpush1.msra.mxu0 0.0
        %3709 = vmatprep.subr.mxu0 0.0
        %3710 = vmatpush1.msra.mxu0 0.0
        %3711 = vmatprep.subr.mxu0 0.0
        %3712 = vmatpush1.msra.mxu0 0.0
        %3713 = vmatprep.subr.mxu0 0.0
        %3714 = vmatpush1.msra.mxu0 0.0
        %3715 = vmatprep.subr.mxu0 0.0
        %3716 = vmatpush1.msra.mxu0 0.0
        %3717 = vmatprep.subr.mxu0 0.0
        %3718 = vmatpush1.msra.mxu0 0.0
        %3719 = vmatprep.subr.mxu0 0.0
        %3720 = vmatpush1.msra.mxu0 0.0
        %3721 = vmatprep.subr.mxu0 0.0
        %3722 = vmatpush1.msra.mxu0 0.0
        %3723 = vmatprep.mubr.f32.mxu0 0.0
        %3724 = vmatmul.mubr.f32.gmra.mrb[0].mxu0 %v3655
        %v3725 = vpop.f32.mrb[0].mxu0
        %v3726 = vadd.f32 0.0, %v3725
        %v3727 = vpop.f32.mrb[0].mxu0
        %3728 = vmatprep.mubr.f32.mxu0 0.0
        %3729 = vmatmul.mubr.f32.gmra.mrb[0].mxu0 %v3657
        %v3730 = vpop.f32.mrb[0].mxu0
        %v3731 = vadd.f32 0.0, %v3730
        %v3732 = vpop.f32.mrb[0].mxu0
        %3733 = vdwg.mxu0
        %v3734 = vadd.f32 %v3646, %v3726
        %v3735 = vadd.f32 %v3647, %v3731
        %v3736 = vld [vmem:[%s17] sm:$0x1]
        %v3738 = vlaneseq
        %v3739 = vshrl.u32 %v3738, 7
        %v3740 = vsub.s32 0, %v3739
        %v3741 = vrot.slane %v3736, %v3740
        %v3743 = vadd.f32 %v3734, %v3741
        %v3744 = vadd.f32 %v3735, %v3741
        %v3745 = vadd.f32 %v2842, %v3743
        %v3746 = vadd.f32 %v2843, %v3744
        %3747 = vst.msk [vmem:[%s740] sm:$0xff] %vm773, %v3745
        %3748 = vst.msk [vmem:[%s740 + $0x8] sm:$0xff] %vm773, %v3746
        %s3749 = smul.u32 2, %s38
        %p3750 = scmp.lt.s32.totalorder %s37, 1
        %s3751 = scalar_select %p3750, %s37, 1
        %p3752 = scmp.lt.s32.totalorder %s3749, 1
        %s3753 = scalar_select %p3752, %s3749, 1
        %s3754 = smul.addr %s3751, 2
        %s3755 = sadd.s32 %s3753, %s3754
        %s3756 = smul.addr %s3755, 8
        %s3757 = scalar_lea.vmem %s18, %s3756
        // Predicated region
        $region117: #{_lambda_.1} parent=91 // pred_check
          %p3758 = pneg %p459
        $region118: #{_lambda_.1} parent=91 // pred_check_branch
          %3760 = sbr.rel (%p3758) target = $region120
        $region119: #{_lambda_.1} parent=91 // pred_region
          %s3761 = smul.u32 2, %s38
        $region120: #{_lambda_.1} parent=91 // pred_fallthru
          _
      $region92: #{_lambda_.1} parent=5 // pred_fallthru
        _
      %p3762 = scmp.le.s32.totalorder 2, %s28
      // Predicated region
      $region121: #{_lambda_.1} parent=5 // pred_check
        %p3763 = pneg %p3762
      $region122: #{_lambda_.1} parent=5 // pred_check_branch
        %3765 = sbr.rel (%p3763) target = $region124
      $region123: #{_lambda_.1} parent=5 // pred_region
        %s3766 = ssub.s32 %s28, 2
        // Predicated region
        $region125: #{_lambda_.1} parent=123 // pred_check
          %p3767 = pneg %p465
        $region126: #{_lambda_.1} parent=123 // pred_check_branch
          %3769 = sbr.rel (%p3767) target = $region128
        $region127: #{_lambda_.1} parent=123 // pred_region
          %s3770 = smul.u32 2, %s40
          %p3771 = scmp.lt.s32.totalorder %s39, 1
          %s3772 = scalar_select %p3771, %s39, 1
          %p3773 = scmp.lt.s32.totalorder %s3770, 1
          %s3774 = scalar_select %p3773, %s3770, 1
          %s3775 = smul.addr %s3772, 2
          %s3776 = sadd.s32 %s3774, %s3775
          %s3777 = smul.addr %s3776, 8
          %s3778 = scalar_lea.vmem %s18, %s3777
        $region128: #{_lambda_.1} parent=123 // pred_fallthru
          _
      $region124: #{_lambda_.1} parent=5 // pred_fallthru
        _
    $region6: #{_lambda_.1} parent=1 // loop_footer
      %s32 = sadd.s32 1, %s28
    $region7: #{_lambda_.1} parent=1 // loop_footer_branch
      %27 = sbr.rel target = $region3
    $region8: #{_lambda_.1} parent=1 // loop_exit
      _
    %3779 = vsyncpa [#allocation3], 1
    %s3780 = scalar_lea.sflag [#allocation3], 1
    %3781 = vsyncpa %s3780, 1
    %3782 = vsyncpa [#allocation5], 1
    %3783 = vsyncpa [#allocation8], 1
    %3784 = vsyncpa [#allocation11], 1

</llo_original>
